<compile_context>
chip_gen: v7x
topology: tpu7x:2x2x1
jax: 0.10.0
libtpu: 0.0.40
codegen_flags: <defaults>
</compile_context>

<pallas_src>
import functools

import numpy as np
import jax
import jax.numpy as jnp
from jax.experimental import pallas as pl
from jax.experimental.pallas import tpu as pltpu


def _round_up(x, m):
    return ((x + m - 1) // m) * m


def _cdiv(a, b):
    return -(-a // b)


# -----------------------------------------------------------------------------
# Kernel: params -> flat(A|B) via residual MLP(s), contracted with [x | u].
# Everything for a TB-row batch tile stays in VMEM; A/B never touch HBM.
# -----------------------------------------------------------------------------
def _koopman_kernel(block_counts, *refs):
    # refs: xu (TB,K+U) f32, params (TB,P) f32, R (K+U,(K+U)*K) f32,
    #       S ((K+U)*K, K_out) f32,
    #       then per ResNet: w_in,b_in,[w1,b1,w2,b2]*n_blocks,w_out,b_out
    #       (weight matrices possibly bf16, biases f32), then out (TB,K_out) f32
    xu_ref, p_ref, r_ref, s_ref = refs[:4]
    idx = 4
    wref_lists = []
    for nb in block_counts:
        nw = 4 + 4 * nb
        wref_lists.append(refs[idx:idx + nw])
        idx += nw
    out_ref = refs[idx]

    def mm(x, w):
        # MXU matmul; bf16 operands when the weights were pre-cast in the
        # wrapper, always f32 accumulation.
        if w.dtype != jnp.float32:
            x = x.astype(w.dtype)
        return jnp.dot(x, w, preferred_element_type=jnp.float32)

    def resnet(p, wrefs, n_blocks):
        # TODO(synk): ResNet / BasicBlock2 source was not provided; a fully
        # connected residual MLP (in-proj -> ReLU residual blocks -> out-proj)
        # is assumed.
        h = jnp.maximum(mm(p, wrefs[0][...]) + wrefs[1][...], 0.0)
        for i in range(n_blocks):
            w1 = wrefs[2 + 4 * i][...]
            b1 = wrefs[3 + 4 * i][...]
            w2 = wrefs[4 + 4 * i][...]
            b2 = wrefs[5 + 4 * i][...]
            y = jnp.maximum(mm(h, w1) + b1, 0.0)
            y = mm(y, w2) + b2
            h = jnp.maximum(h + y, 0.0)               # residual connection
        return mm(h, wrefs[-2][...]) + wrefs[-1][...]

    p = p_ref[...]
    flats = [resnet(p, wrefs, nb) for wrefs, nb in zip(wref_lists, block_counts)]
    # Fused (block-diagonal) path emits [flat_A | flat_B] directly; the
    # unfused (v5e) path concatenates at a 128-aligned lane offset (K*K).
    flat = flats[0] if len(flats) == 1 else jnp.concatenate(flats, axis=-1)

    # out[n, j] = sum_a xu[n, a] * flat[n, a*K + j]
    # xu is replicated along lanes with R and reduced over `a` with S — both on
    # the MXU, everything 2-D and lane-dense; kept in f32 so the Koopman apply
    # itself stays full precision.
    xu_rep = jnp.dot(xu_ref[...], r_ref[...], preferred_element_type=jnp.float32)
    out_ref[...] = jnp.dot(xu_rep * flat, s_ref[...],
                           preferred_element_type=jnp.float32)


# -----------------------------------------------------------------------------
# Weight plumbing (wrapper side, outside the kernel)
# -----------------------------------------------------------------------------
def _flatten_resnet_weights(w):
    flat = [w["w_in"], w["b_in"]]
    for blk in w["blocks"]:
        flat += [blk["w1"], blk["b1"], blk["w2"], blk["b2"]]
    flat += [w["w_out"], w["b_out"]]
    return flat


def _pad_blocks(w, n_target):
    # Zero blocks are exact identity blocks here (h >= 0 after every ReLU).
    blocks = list(w["blocks"])
    hidden = w["w_in"].shape[1]
    while len(blocks) < n_target:
        z = jnp.zeros((hidden, hidden), jnp.float32)
        zb = jnp.zeros((1, hidden), jnp.float32)
        blocks.append({"w1": z, "b1": zb, "w2": z, "b2": zb})
    return dict(w, blocks=blocks)


def _fuse_resnet_weights(wa, wb):
    """Merge two ResNets into one wide block-diagonal ResNet.

    Fills the 2x256x256 MXU on v6e/v7x and makes the out-projection emit
    [flat_A | flat_B] directly (no in-kernel concat copy).
    """
    def cat(a, b):
        return jnp.concatenate([a, b], axis=1)

    def bdiag(a, b):
        za = jnp.zeros((a.shape[0], b.shape[1]), jnp.float32)
        zb = jnp.zeros((b.shape[0], a.shape[1]), jnp.float32)
        return jnp.concatenate([cat(a, za), cat(zb, b)], axis=0)

    fused = {"w_in": cat(wa["w_in"], wb["w_in"]),
             "b_in": cat(wa["b_in"], wb["b_in"]),
             "blocks": [],
             "w_out": bdiag(wa["w_out"], wb["w_out"]),
             "b_out": cat(wa["b_out"], wb["b_out"])}
    for ba, bb in zip(wa["blocks"], wb["blocks"]):
        fused["blocks"].append({"w1": bdiag(ba["w1"], bb["w1"]),
                                "b1": cat(ba["b1"], bb["b1"]),
                                "w2": bdiag(ba["w2"], bb["w2"]),
                                "b2": cat(ba["b2"], bb["b2"])})
    return fused


def fused_koopman_forward(x_dic, inputs_dic, params, a_weights, b_weights,
                          koopman_dim, u_dim, *, tb_max=256,
                          mxu_dtype=jnp.bfloat16, fuse_ab=True):
    n = x_dic.shape[0]
    k, u, p_dim = koopman_dim, u_dim, params.shape[1]
    ku = k + u
    k_out = _round_up(k, 128)            # lane-dense output -> unmasked stores

    # Tile selection: derive TB from the tile count (avoids near-full-tile
    # padding waste), keep TB a multiple of 8 sublanes, and give v7x's two
    # TensorCores at least two grid steps once there is enough work.
    n_tiles = _cdiv(n, tb_max)
    if n >= 16:
        n_tiles = max(n_tiles, 2)
    tb = _round_up(_cdiv(n, n_tiles), 8)
    n_pad = n_tiles * tb

    # Layout plumbing: one lane-dense (N, K+U) operand. Padded rows are zero so
    # they contribute nothing and are sliced off at the end.
    xu = jnp.concatenate([x_dic.astype(jnp.float32),
                          inputs_dic.astype(jnp.float32)], axis=1)
    params = params.astype(jnp.float32)
    if n_pad != n:
        xu = jnp.pad(xu, ((0, n_pad - n), (0, 0)))
        params = jnp.pad(params, ((0, n_pad - n), (0, 0)))

    # Constant 0/1 selector matrices (trace-time constants):
    #   R[a, a*K + j] = 1  -> (xu @ R)[n, a*K + j] = xu[n, a]
    #   S[a*K + j, j] = 1  -> MXU reduction over a; zero-padded to K_out lanes.
    r_const = jnp.asarray(np.kron(np.eye(ku), np.ones((1, k))), jnp.float32)
    s_np = np.kron(np.ones((ku, 1)), np.eye(k))
    s_const = jnp.asarray(np.pad(s_np, ((0, 0), (0, k_out - k))), jnp.float32)

    if fuse_ab:
        nb = max(len(a_weights["blocks"]), len(b_weights["blocks"]))
        fused = _fuse_resnet_weights(_pad_blocks(a_weights, nb),
                                     _pad_blocks(b_weights, nb))
        weight_lists = [_flatten_resnet_weights(fused)]
        block_counts = (nb,)
    else:
        # v5e path: 128-wide matmuls already fill its 4x128x128 MXU.
        weight_lists = [_flatten_resnet_weights(a_weights),
                        _flatten_resnet_weights(b_weights)]
        block_counts = (len(a_weights["blocks"]), len(b_weights["blocks"]))

    # Cast the matmul weights ONCE here (biases stay f32): no per-grid-step
    # VPU casts, half the resident weight VMEM and HBM DMA.
    if mxu_dtype != jnp.float32:
        weight_lists = [[w.astype(mxu_dtype) if i % 2 == 0 else w
                         for i, w in enumerate(wl)] for wl in weight_lists]
    all_weights = [w for wl in weight_lists for w in wl]

    def tile_spec(width):
        return pl.BlockSpec((tb, width), lambda i: (i, 0))

    def full_spec(arr):
        # Grid-invariant: whole array resident in VMEM across all batch tiles.
        return pl.BlockSpec(arr.shape, lambda i: (0, 0))

    in_specs = ([tile_spec(ku), tile_spec(p_dim),
                 full_spec(r_const), full_spec(s_const)]
                + [full_spec(w) for w in all_weights])

    out = pl.pallas_call(
        functools.partial(_koopman_kernel, block_counts),
        out_shape=jax.ShapeDtypeStruct((n_pad, k_out), jnp.float32),
        grid=(n_tiles,),
        in_specs=in_specs,
        out_specs=pl.BlockSpec((tb, k_out), lambda i: (i, 0)),
        compiler_params=pltpu.CompilerParams(
            dimension_semantics=("parallel",),        # batch tiles across TCs
            vmem_limit_bytes=48 * 1024 * 1024),       # explicit; safe v5e-v7x
    )(xu, params, r_const, s_const, *all_weights)
    return out[:n, :k]


# -----------------------------------------------------------------------------
# Deterministic parameter construction + module wrapper + references
# -----------------------------------------------------------------------------
def make_resnet_weights(key, in_dim, hidden, out_dim, n_blocks):
    ks = jax.random.split(key, 2 * (2 + 2 * n_blocks))
    it = iter(ks)

    def w_init(fan_in, shape):
        return (jax.random.normal(next(it), shape, jnp.float32)
                / np.sqrt(fan_in)).astype(jnp.float32)

    def b_init(shape):
        return (0.1 * jax.random.normal(next(it), shape, jnp.float32)).astype(jnp.float32)

    w = {"w_in": w_init(in_dim, (in_dim, hidden)),
         "b_in": b_init((1, hidden)),
         "blocks": []}
    for _ in range(n_blocks):
        w["blocks"].append({"w1": w_init(hidden, (hidden, hidden)),
                            "b1": b_init((1, hidden)),
                            "w2": w_init(hidden, (hidden, hidden)),
                            "b2": b_init((1, hidden))})
    w["w_out"] = w_init(hidden, (hidden, out_dim))
    w["b_out"] = b_init((1, out_dim))
    return w


def _resnet_reference(p, w, mxu_dtype=jnp.float32):
    def mm(x, ww):
        if mxu_dtype != jnp.float32:
            x, ww = x.astype(mxu_dtype), ww.astype(mxu_dtype)
        return jnp.dot(x, ww, preferred_element_type=jnp.float32)

    h = jnp.maximum(mm(p, w["w_in"]) + w["b_in"], 0.0)
    for blk in w["blocks"]:
        y = jnp.maximum(mm(h, blk["w1"]) + blk["b1"], 0.0)
        y = mm(y, blk["w2"]) + blk["b2"]
        h = jnp.maximum(h + y, 0.0)
    return mm(h, w["w_out"]) + w["b_out"]


def _resnet_reference_np(p, w):
    g = lambda a: np.asarray(a, np.float64)
    h = np.maximum(g(p) @ g(w["w_in"]) + g(w["b_in"]), 0.0)
    for blk in w["blocks"]:
        y = np.maximum(h @ g(blk["w1"]) + g(blk["b1"]), 0.0)
        y = y @ g(blk["w2"]) + g(blk["b2"])
        h = np.maximum(h + y, 0.0)
    return h @ g(w["w_out"]) + g(w["b_out"])


class ParamKoopmanWithInputsPallas:
    """Pallas port of ParamKoopmanWithInputs.forward(x_dic, inputs_dic, params)."""

    def __init__(self, state_dim, dictionary_dim, inputs_dim, u_dictionary_dim,
                 params_dim, dictionary_layers, u_layers, A_layers, B_layers,
                 dictionary_type="resnet", hidden=128, key=None):
        # TODO(synk): TrainableDictionary / u_dictionary (dictionary_layers,
        # u_layers, dictionary_type) are built in the torch __init__ but never
        # used in forward, so they are not materialized here.
        del dictionary_layers, u_layers, dictionary_type
        self.koopman_dim = dictionary_dim + state_dim + 1
        self.u_dim = u_dictionary_dim + inputs_dim + 1
        self.params_dim = params_dim
        key = key if key is not None else jax.random.PRNGKey(0)
        k_a, k_b = jax.random.split(key)
        self.A_weights = make_resnet_weights(
            k_a, params_dim, hidden, self.koopman_dim * self.koopman_dim, A_layers)
        self.B_weights = make_resnet_weights(
            k_b, params_dim, hidden, self.u_dim * self.koopman_dim, B_layers)

    def __call__(self, x_dic, inputs_dic, params, *,
                 mxu_dtype=jnp.bfloat16, fuse_ab=True, tb_max=256):
        return fused_koopman_forward(
            x_dic, inputs_dic, params, self.A_weights, self.B_weights,
            self.koopman_dim, self.u_dim,
            tb_max=tb_max, mxu_dtype=mxu_dtype, fuse_ab=fuse_ab)

    def reference(self, x_dic, inputs_dic, params, mxu_dtype=jnp.float32):
        a = _resnet_reference(params, self.A_weights, mxu_dtype).reshape(
            -1, self.koopman_dim, self.koopman_dim)
        b = _resnet_reference(params, self.B_weights, mxu_dtype).reshape(
            -1, self.u_dim, self.koopman_dim)
        return (jnp.einsum("nk,nkj->nj", x_dic, a)
                + jnp.einsum("nu,nuj->nj", inputs_dic, b))

    def reference_f64(self, x_dic, inputs_dic, params):
        p = np.asarray(params, np.float64)
        a = _resnet_reference_np(p, self.A_weights).reshape(
            -1, self.koopman_dim, self.koopman_dim)
        b = _resnet_reference_np(p, self.B_weights).reshape(
            -1, self.u_dim, self.koopman_dim)
        x = np.asarray(x_dic, np.float64)
        uu = np.asarray(inputs_dic, np.float64)
        return np.einsum("nk,nkj->nj", x, a) + np.einsum("nu,nuj->nj", uu, b)


if __name__ == "__main__":
    # Small, consistent configuration
    state_dim, dictionary_dim = 3, 28          # koopman_dim = 32
    inputs_dim, u_dictionary_dim = 2, 13       # u_dim       = 16
    params_dim = 4
    dictionary_layers = u_layers = 2           # unused in forward
    A_layers, B_layers = 2, 2
    N = 8

    key = jax.random.PRNGKey(0)
    k_mod, k_x, k_u, k_p = jax.random.split(key, 4)

    model = ParamKoopmanWithInputsPallas(
        state_dim, dictionary_dim, inputs_dim, u_dictionary_dim, params_dim,
        dictionary_layers, u_layers, A_layers, B_layers,
        hidden=128, key=k_mod)   # hidden kept MXU-aligned (128 / 256 fused)

    x_dic = jax.random.normal(k_x, (N, model.koopman_dim), jnp.float32)
    inputs_dic = jax.random.normal(k_u, (N, model.u_dim), jnp.float32)
    params = jax.random.normal(k_p, (N, params_dim), jnp.float32)

    # Default path: fused block-diagonal A|B ResNet, bf16 MXU operands.
    out = jax.block_until_ready(model(x_dic, inputs_dic, params))
    assert out.shape == (N, model.koopman_dim)

    # v5e-style fallback path: separate 128-wide ResNets, still bf16 operands.
    out_sep = jax.block_until_ready(
        model(x_dic, inputs_dic, params, fuse_ab=False))

    # Precision-matched reference (same bf16 operand rounding, f32 accumulation)
    ref_bf16 = jax.block_until_ready(
        model.reference(x_dic, inputs_dic, params, mxu_dtype=jnp.bfloat16))
    # Ground truth in float64 (numpy)
    ref_f64 = model.reference_f64(x_dic, inputs_dic, params)

    def frob_rel(a, b64):
        a64 = np.asarray(a, np.float64)
        return float(np.linalg.norm(a64 - b64) / (np.linalg.norm(b64) + 1e-12))

    # Tight check against the precision-matched reference (structure + layout).
    assert jnp.allclose(out, ref_bf16, atol=5e-2, rtol=5e-2), (
        "fused: max abs err vs matched ref = %g"
        % float(jnp.max(jnp.abs(out - ref_bf16))))
    assert jnp.allclose(out_sep, ref_bf16, atol=5e-2, rtol=5e-2), (
        "unfused: max abs err vs matched ref = %g"
        % float(jnp.max(jnp.abs(out_sep - ref_bf16))))
    # Norm-relative check against float64 ground truth (bounds bf16 error).
    assert frob_rel(out, ref_f64) < 5e-2, frob_rel(out, ref_f64)
    assert frob_rel(out_sep, ref_f64) < 5e-2, frob_rel(out_sep, ref_f64)

    print("KERNEL_OK")
</pallas_src>

<mosaic_0001>
module attributes {stable_mosaic.version = 11 : i64} {
  func.func @_koopman_kernel(%arg0: i32, %arg1: memref<8x48xf32, #tpu.memory_space<vmem>>, %arg2: memref<8x4xf32, #tpu.memory_space<vmem>>, %arg3: memref<48x1536xf32, #tpu.memory_space<vmem>>, %arg4: memref<1536x128xf32, #tpu.memory_space<vmem>>, %arg5: memref<4x256xbf16, #tpu.memory_space<vmem>>, %arg6: memref<1x256xf32, #tpu.memory_space<vmem>>, %arg7: memref<256x256xbf16, #tpu.memory_space<vmem>>, %arg8: memref<1x256xf32, #tpu.memory_space<vmem>>, %arg9: memref<256x256xbf16, #tpu.memory_space<vmem>>, %arg10: memref<1x256xf32, #tpu.memory_space<vmem>>, %arg11: memref<256x256xbf16, #tpu.memory_space<vmem>>, %arg12: memref<1x256xf32, #tpu.memory_space<vmem>>, %arg13: memref<256x256xbf16, #tpu.memory_space<vmem>>, %arg14: memref<1x256xf32, #tpu.memory_space<vmem>>, %arg15: memref<256x1536xbf16, #tpu.memory_space<vmem>>, %arg16: memref<1x1536xf32, #tpu.memory_space<vmem>>, %arg17: memref<8x128xf32, #tpu.memory_space<vmem>>) attributes {dimension_semantics = [#tpu.dimension_semantics<parallel>], iteration_bounds = array<i64: 1>, scalar_prefetch = 0 : i64, scratch_operands = 0 : i64, tpu.core_type = #tpu.core_type<tc>, window_params = [{transform_indices = @transform_0, window_bounds = array<i64: 8, 48>}, {transform_indices = @transform_1, window_bounds = array<i64: 8, 4>}, {pipeline_mode = #tpu.pipeline_mode<synchronous>, transform_indices = @transform_2, window_bounds = array<i64: 48, 1536>}, {pipeline_mode = #tpu.pipeline_mode<synchronous>, transform_indices = @transform_3, window_bounds = array<i64: 1536, 128>}, {pipeline_mode = #tpu.pipeline_mode<synchronous>, transform_indices = @transform_4, window_bounds = array<i64: 4, 256>}, {pipeline_mode = #tpu.pipeline_mode<synchronous>, transform_indices = @transform_5, window_bounds = array<i64: 1, 256>}, {pipeline_mode = #tpu.pipeline_mode<synchronous>, transform_indices = @transform_6, window_bounds = array<i64: 256, 256>}, {pipeline_mode = #tpu.pipeline_mode<synchronous>, transform_indices = @transform_7, window_bounds = array<i64: 1, 256>}, {pipeline_mode = #tpu.pipeline_mode<synchronous>, transform_indices = @transform_8, window_bounds = array<i64: 256, 256>}, {pipeline_mode = #tpu.pipeline_mode<synchronous>, transform_indices = @transform_9, window_bounds = array<i64: 1, 256>}, {pipeline_mode = #tpu.pipeline_mode<synchronous>, transform_indices = @transform_10, window_bounds = array<i64: 256, 256>}, {pipeline_mode = #tpu.pipeline_mode<synchronous>, transform_indices = @transform_11, window_bounds = array<i64: 1, 256>}, {pipeline_mode = #tpu.pipeline_mode<synchronous>, transform_indices = @transform_12, window_bounds = array<i64: 256, 256>}, {pipeline_mode = #tpu.pipeline_mode<synchronous>, transform_indices = @transform_13, window_bounds = array<i64: 1, 256>}, {pipeline_mode = #tpu.pipeline_mode<synchronous>, transform_indices = @transform_14, window_bounds = array<i64: 256, 1536>}, {pipeline_mode = #tpu.pipeline_mode<synchronous>, transform_indices = @transform_15, window_bounds = array<i64: 1, 1536>}, {transform_indices = @transform_16, window_bounds = array<i64: 8, 128>}]} {
    %c0 = arith.constant 0 : index
    %c0_0 = arith.constant 0 : index
    %0 = vector.load %arg2[%c0, %c0_0] : memref<8x4xf32, #tpu.memory_space<vmem>>, vector<8x4xf32>
    %c0_1 = arith.constant 0 : index
    %c0_2 = arith.constant 0 : index
    %1 = vector.load %arg5[%c0_1, %c0_2] : memref<4x256xbf16, #tpu.memory_space<vmem>>, vector<4x256xbf16>
    %2 = arith.truncf %0 : vector<8x4xf32> to vector<8x4xbf16>
    %cst = arith.constant dense<0.000000e+00> : vector<8x256xf32>
    %3 = tpu.matmul %2, %1, %cst {dimension_numbers = #tpu.dot_dimension_numbers<[1], [0], [0], [1], [0, 0, 1, 1], [], []>} : vector<8x4xbf16>, vector<4x256xbf16>, vector<8x256xf32> -> vector<8x256xf32>
    %c0_3 = arith.constant 0 : index
    %c0_4 = arith.constant 0 : index
    %4 = vector.load %arg6[%c0_3, %c0_4] : memref<1x256xf32, #tpu.memory_space<vmem>>, vector<1x256xf32>
    %5 = vector.broadcast %4 : vector<1x256xf32> to vector<8x256xf32>
    %6 = arith.addf %3, %5 : vector<8x256xf32>
    %cst_5 = arith.constant 0.000000e+00 : f32
    %7 = vector.broadcast %cst_5 : f32 to vector<8x256xf32>
    %8 = arith.maximumf %6, %7 : vector<8x256xf32>
    %c0_6 = arith.constant 0 : index
    %c0_7 = arith.constant 0 : index
    %9 = vector.load %arg7[%c0_6, %c0_7] : memref<256x256xbf16, #tpu.memory_space<vmem>>, vector<256x256xbf16>
    %c0_8 = arith.constant 0 : index
    %c0_9 = arith.constant 0 : index
    %10 = vector.load %arg8[%c0_8, %c0_9] : memref<1x256xf32, #tpu.memory_space<vmem>>, vector<1x256xf32>
    %c0_10 = arith.constant 0 : index
    %c0_11 = arith.constant 0 : index
    %11 = vector.load %arg9[%c0_10, %c0_11] : memref<256x256xbf16, #tpu.memory_space<vmem>>, vector<256x256xbf16>
    %c0_12 = arith.constant 0 : index
    %c0_13 = arith.constant 0 : index
    %12 = vector.load %arg10[%c0_12, %c0_13] : memref<1x256xf32, #tpu.memory_space<vmem>>, vector<1x256xf32>
    %13 = arith.truncf %8 : vector<8x256xf32> to vector<8x256xbf16>
    %cst_14 = arith.constant dense<0.000000e+00> : vector<8x256xf32>
    %14 = tpu.matmul %13, %9, %cst_14 {dimension_numbers = #tpu.dot_dimension_numbers<[1], [0], [0], [1], [0, 0, 1, 1], [], []>} : vector<8x256xbf16>, vector<256x256xbf16>, vector<8x256xf32> -> vector<8x256xf32>
    %15 = vector.broadcast %10 : vector<1x256xf32> to vector<8x256xf32>
    %16 = arith.addf %14, %15 : vector<8x256xf32>
    %cst_15 = arith.constant 0.000000e+00 : f32
    %17 = vector.broadcast %cst_15 : f32 to vector<8x256xf32>
    %18 = arith.maximumf %16, %17 : vector<8x256xf32>
    %19 = arith.truncf %18 : vector<8x256xf32> to vector<8x256xbf16>
    %cst_16 = arith.constant dense<0.000000e+00> : vector<8x256xf32>
    %20 = tpu.matmul %19, %11, %cst_16 {dimension_numbers = #tpu.dot_dimension_numbers<[1], [0], [0], [1], [0, 0, 1, 1], [], []>} : vector<8x256xbf16>, vector<256x256xbf16>, vector<8x256xf32> -> vector<8x256xf32>
    %21 = vector.broadcast %12 : vector<1x256xf32> to vector<8x256xf32>
    %22 = arith.addf %20, %21 : vector<8x256xf32>
    %23 = arith.addf %8, %22 : vector<8x256xf32>
    %cst_17 = arith.constant 0.000000e+00 : f32
    %24 = vector.broadcast %cst_17 : f32 to vector<8x256xf32>
    %25 = arith.maximumf %23, %24 : vector<8x256xf32>
    %c0_18 = arith.constant 0 : index
    %c0_19 = arith.constant 0 : index
    %26 = vector.load %arg11[%c0_18, %c0_19] : memref<256x256xbf16, #tpu.memory_space<vmem>>, vector<256x256xbf16>
    %c0_20 = arith.constant 0 : index
    %c0_21 = arith.constant 0 : index
    %27 = vector.load %arg12[%c0_20, %c0_21] : memref<1x256xf32, #tpu.memory_space<vmem>>, vector<1x256xf32>
    %c0_22 = arith.constant 0 : index
    %c0_23 = arith.constant 0 : index
    %28 = vector.load %arg13[%c0_22, %c0_23] : memref<256x256xbf16, #tpu.memory_space<vmem>>, vector<256x256xbf16>
    %c0_24 = arith.constant 0 : index
    %c0_25 = arith.constant 0 : index
    %29 = vector.load %arg14[%c0_24, %c0_25] : memref<1x256xf32, #tpu.memory_space<vmem>>, vector<1x256xf32>
    %30 = arith.truncf %25 : vector<8x256xf32> to vector<8x256xbf16>
    %cst_26 = arith.constant dense<0.000000e+00> : vector<8x256xf32>
    %31 = tpu.matmul %30, %26, %cst_26 {dimension_numbers = #tpu.dot_dimension_numbers<[1], [0], [0], [1], [0, 0, 1, 1], [], []>} : vector<8x256xbf16>, vector<256x256xbf16>, vector<8x256xf32> -> vector<8x256xf32>
    %32 = vector.broadcast %27 : vector<1x256xf32> to vector<8x256xf32>
    %33 = arith.addf %31, %32 : vector<8x256xf32>
    %cst_27 = arith.constant 0.000000e+00 : f32
    %34 = vector.broadcast %cst_27 : f32 to vector<8x256xf32>
    %35 = arith.maximumf %33, %34 : vector<8x256xf32>
    %36 = arith.truncf %35 : vector<8x256xf32> to vector<8x256xbf16>
    %cst_28 = arith.constant dense<0.000000e+00> : vector<8x256xf32>
    %37 = tpu.matmul %36, %28, %cst_28 {dimension_numbers = #tpu.dot_dimension_numbers<[1], [0], [0], [1], [0, 0, 1, 1], [], []>} : vector<8x256xbf16>, vector<256x256xbf16>, vector<8x256xf32> -> vector<8x256xf32>
    %38 = vector.broadcast %29 : vector<1x256xf32> to vector<8x256xf32>
    %39 = arith.addf %37, %38 : vector<8x256xf32>
    %40 = arith.addf %25, %39 : vector<8x256xf32>
    %cst_29 = arith.constant 0.000000e+00 : f32
    %41 = vector.broadcast %cst_29 : f32 to vector<8x256xf32>
    %42 = arith.maximumf %40, %41 : vector<8x256xf32>
    %c0_30 = arith.constant 0 : index
    %c0_31 = arith.constant 0 : index
    %43 = vector.load %arg15[%c0_30, %c0_31] : memref<256x1536xbf16, #tpu.memory_space<vmem>>, vector<256x1536xbf16>
    %44 = arith.truncf %42 : vector<8x256xf32> to vector<8x256xbf16>
    %cst_32 = arith.constant dense<0.000000e+00> : vector<8x1536xf32>
    %45 = tpu.matmul %44, %43, %cst_32 {dimension_numbers = #tpu.dot_dimension_numbers<[1], [0], [0], [1], [0, 0, 1, 1], [], []>} : vector<8x256xbf16>, vector<256x1536xbf16>, vector<8x1536xf32> -> vector<8x1536xf32>
    %c0_33 = arith.constant 0 : index
    %c0_34 = arith.constant 0 : index
    %46 = vector.load %arg16[%c0_33, %c0_34] : memref<1x1536xf32, #tpu.memory_space<vmem>>, vector<1x1536xf32>
    %47 = vector.broadcast %46 : vector<1x1536xf32> to vector<8x1536xf32>
    %48 = arith.addf %45, %47 : vector<8x1536xf32>
    %c0_35 = arith.constant 0 : index
    %c0_36 = arith.constant 0 : index
    %49 = vector.load %arg1[%c0_35, %c0_36] : memref<8x48xf32, #tpu.memory_space<vmem>>, vector<8x48xf32>
    %c0_37 = arith.constant 0 : index
    %c0_38 = arith.constant 0 : index
    %50 = vector.load %arg3[%c0_37, %c0_38] : memref<48x1536xf32, #tpu.memory_space<vmem>>, vector<48x1536xf32>
    %cst_39 = arith.constant dense<0.000000e+00> : vector<8x1536xf32>
    %51 = tpu.matmul %49, %50, %cst_39 {dimension_numbers = #tpu.dot_dimension_numbers<[1], [0], [0], [1], [0, 0, 1, 1], [], []>} : vector<8x48xf32>, vector<48x1536xf32>, vector<8x1536xf32> -> vector<8x1536xf32>
    %52 = arith.mulf %51, %48 : vector<8x1536xf32>
    %c0_40 = arith.constant 0 : index
    %c0_41 = arith.constant 0 : index
    %53 = vector.load %arg4[%c0_40, %c0_41] : memref<1536x128xf32, #tpu.memory_space<vmem>>, vector<1536x128xf32>
    %cst_42 = arith.constant dense<0.000000e+00> : vector<8x128xf32>
    %54 = tpu.matmul %52, %53, %cst_42 {dimension_numbers = #tpu.dot_dimension_numbers<[1], [0], [0], [1], [0, 0, 1, 1], [], []>} : vector<8x1536xf32>, vector<1536x128xf32>, vector<8x128xf32> -> vector<8x128xf32>
    %c0_43 = arith.constant 0 : index
    %c0_44 = arith.constant 0 : index
    %55 = vector.load %arg17[%c0_43, %c0_44] : memref<8x128xf32, #tpu.memory_space<vmem>>, vector<8x128xf32>
    tpu.vector_store %arg17[%c0_43, %c0_44], %54 {strides = array<i32>} : memref<8x128xf32, #tpu.memory_space<vmem>>, vector<8x128xf32>,
    return
  }
  func.func @transform_0(%arg0: i32) -> (i32, i32) {
    %c0_i32 = arith.constant 0 : i32
    %c0_i32_0 = arith.constant 0 : i32
    return %arg0, %c0_i32 : i32, i32
  }
  func.func @transform_1(%arg0: i32) -> (i32, i32) {
    %c0_i32 = arith.constant 0 : i32
    %c0_i32_0 = arith.constant 0 : i32
    return %arg0, %c0_i32 : i32, i32
  }
  func.func @transform_2(%arg0: i32) -> (i32, i32) {
    %c0_i32 = arith.constant 0 : i32
    %c0_i32_0 = arith.constant 0 : i32
    %c0_i32_1 = arith.constant 0 : i32
    return %c0_i32, %c0_i32_0 : i32, i32
  }
  func.func @transform_3(%arg0: i32) -> (i32, i32) {
    %c0_i32 = arith.constant 0 : i32
    %c0_i32_0 = arith.constant 0 : i32
    %c0_i32_1 = arith.constant 0 : i32
    return %c0_i32, %c0_i32_0 : i32, i32
  }
  func.func @transform_4(%arg0: i32) -> (i32, i32) {
    %c0_i32 = arith.constant 0 : i32
    %c0_i32_0 = arith.constant 0 : i32
    %c0_i32_1 = arith.constant 0 : i32
    return %c0_i32, %c0_i32_0 : i32, i32
  }
  func.func @transform_5(%arg0: i32) -> (i32, i32) {
    %c0_i32 = arith.constant 0 : i32
    %c0_i32_0 = arith.constant 0 : i32
    %c0_i32_1 = arith.constant 0 : i32
    return %c0_i32, %c0_i32_0 : i32, i32
  }
  func.func @transform_6(%arg0: i32) -> (i32, i32) {
    %c0_i32 = arith.constant 0 : i32
    %c0_i32_0 = arith.constant 0 : i32
    %c0_i32_1 = arith.constant 0 : i32
    return %c0_i32, %c0_i32_0 : i32, i32
  }
  func.func @transform_7(%arg0: i32) -> (i32, i32) {
    %c0_i32 = arith.constant 0 : i32
    %c0_i32_0 = arith.constant 0 : i32
    %c0_i32_1 = arith.constant 0 : i32
    return %c0_i32, %c0_i32_0 : i32, i32
  }
  func.func @transform_8(%arg0: i32) -> (i32, i32) {
    %c0_i32 = arith.constant 0 : i32
    %c0_i32_0 = arith.constant 0 : i32
    %c0_i32_1 = arith.constant 0 : i32
    return %c0_i32, %c0_i32_0 : i32, i32
  }
  func.func @transform_9(%arg0: i32) -> (i32, i32) {
    %c0_i32 = arith.constant 0 : i32
    %c0_i32_0 = arith.constant 0 : i32
    %c0_i32_1 = arith.constant 0 : i32
    return %c0_i32, %c0_i32_0 : i32, i32
  }
  func.func @transform_10(%arg0: i32) -> (i32, i32) {
    %c0_i32 = arith.constant 0 : i32
    %c0_i32_0 = arith.constant 0 : i32
    %c0_i32_1 = arith.constant 0 : i32
    return %c0_i32, %c0_i32_0 : i32, i32
  }
  func.func @transform_11(%arg0: i32) -> (i32, i32) {
    %c0_i32 = arith.constant 0 : i32
    %c0_i32_0 = arith.constant 0 : i32
    %c0_i32_1 = arith.constant 0 : i32
    return %c0_i32, %c0_i32_0 : i32, i32
  }
  func.func @transform_12(%arg0: i32) -> (i32, i32) {
    %c0_i32 = arith.constant 0 : i32
    %c0_i32_0 = arith.constant 0 : i32
    %c0_i32_1 = arith.constant 0 : i32
    return %c0_i32, %c0_i32_0 : i32, i32
  }
  func.func @transform_13(%arg0: i32) -> (i32, i32) {
    %c0_i32 = arith.constant 0 : i32
    %c0_i32_0 = arith.constant 0 : i32
    %c0_i32_1 = arith.constant 0 : i32
    return %c0_i32, %c0_i32_0 : i32, i32
  }
  func.func @transform_14(%arg0: i32) -> (i32, i32) {
    %c0_i32 = arith.constant 0 : i32
    %c0_i32_0 = arith.constant 0 : i32
    %c0_i32_1 = arith.constant 0 : i32
    return %c0_i32, %c0_i32_0 : i32, i32
  }
  func.func @transform_15(%arg0: i32) -> (i32, i32) {
    %c0_i32 = arith.constant 0 : i32
    %c0_i32_0 = arith.constant 0 : i32
    %c0_i32_1 = arith.constant 0 : i32
    return %c0_i32, %c0_i32_0 : i32, i32
  }
  func.func @transform_16(%arg0: i32) -> (i32, i32) {
    %c0_i32 = arith.constant 0 : i32
    %c0_i32_0 = arith.constant 0 : i32
    return %arg0, %c0_i32 : i32, i32
  }
}

</mosaic_0001>

<llo_original>
// kernel: tpu_custom_call.1
$region0: #{tpu_custom_call.1}
  #allocation0 [shape = 'u32[]', space=smem, size = 0x4, offset = 0x4, fixed_abs, tag = 'smem constant byte address 0x4 - core index']
  #allocation1 [shape = 'u32[144,128]{1,0:T(1,128)}', space=vmem, size = 0x12000, scoped, tag = 'internal scratch']
  %s0 = inlined_call_operand.vmem [shape: f32[8,48], index: 0, kind: input, shape index: {}]
  %s1 = inlined_call_operand.vmem [shape: f32[8,4], index: 1, kind: input, shape index: {}]
  %s2 = inlined_call_operand.hbm [shape: f32[48,1536], index: 2, kind: input, shape index: {}]
  %s3 = inlined_call_operand.hbm [shape: f32[1536,128], index: 3, kind: input, shape index: {}]
  %s4 = inlined_call_operand.vmem [shape: bf16[4,256], index: 4, kind: input, shape index: {}]
  %s5 = inlined_call_operand.vmem [shape: f32[1,256], index: 5, kind: input, shape index: {}]
  %s6 = inlined_call_operand.hbm [shape: bf16[256,256], index: 6, kind: input, shape index: {}]
  %s7 = inlined_call_operand.vmem [shape: f32[1,256], index: 7, kind: input, shape index: {}]
  %s8 = inlined_call_operand.hbm [shape: bf16[256,256], index: 8, kind: input, shape index: {}]
  %s9 = inlined_call_operand.vmem [shape: f32[1,256], index: 9, kind: input, shape index: {}]
  %s10 = inlined_call_operand.hbm [shape: bf16[256,256], index: 10, kind: input, shape index: {}]
  %s11 = inlined_call_operand.vmem [shape: f32[1,256], index: 11, kind: input, shape index: {}]
  %s12 = inlined_call_operand.hbm [shape: bf16[256,256], index: 12, kind: input, shape index: {}]
  %s13 = inlined_call_operand.vmem [shape: f32[1,256], index: 13, kind: input, shape index: {}]
  %s14 = inlined_call_operand.hbm [shape: bf16[256,1536], index: 14, kind: input, shape index: {}]
  %s15 = inlined_call_operand.vmem [shape: f32[1,1536], index: 15, kind: input, shape index: {}]
  %s16 = inlined_call_operand.hbm [shape: f32[8,128], index: 16, kind: output, shape index: {}]
  %s17 = sld [smem:[#allocation0]]
  $region102: #{tpu_custom_call.1} parent=0
    _
  %s19 = ssub.s32 1, %s17
  %s20 = scalar_select 0, %s19, %s17
  $region1: #{tpu_custom_call.1} parent=0
    #allocation2 [shape = 'u8[294912]{0}', space=vmem, size = 0x48000, scoped, tag = 'input window, operand 2, single buffered']
    #allocation3 [shape = 's32[1]{0}', space=sflag, size = 0x4, scoped, tag = 'scoped memory for tpu_custom_call.1']
    #allocation4 [shape = 's32[1]{0}', space=sflag, size = 0x4, scoped, tag = 'scoped memory for tpu_custom_call.1']
    #allocation5 [shape = 'u8[786432]{0}', space=vmem, size = 0xc0000, scoped, tag = 'input window, operand 3, single buffered']
    #allocation6 [shape = 's32[1]{0}', space=sflag, size = 0x4, scoped, tag = 'scoped memory for tpu_custom_call.1']
    #allocation7 [shape = 'u8[131072]{0}', space=vmem, size = 0x20000, scoped, tag = 'input window, operand 6, single buffered']
    #allocation8 [shape = 'u8[131072]{0}', space=vmem, size = 0x20000, scoped, tag = 'input window, operand 8, single buffered']
    #allocation9 [shape = 's32[1]{0}', space=sflag, size = 0x4, scoped, tag = 'scoped memory for tpu_custom_call.1']
    #allocation10 [shape = 'u8[131072]{0}', space=vmem, size = 0x20000, scoped, tag = 'input window, operand 10, single buffered']
    #allocation11 [shape = 'u8[131072]{0}', space=vmem, size = 0x20000, scoped, tag = 'input window, operand 12, single buffered']
    #allocation12 [shape = 's32[1]{0}', space=sflag, size = 0x4, scoped, tag = 'scoped memory for tpu_custom_call.1']
    #allocation13 [shape = 'u8[786432]{0}', space=vmem, size = 0xc0000, scoped, tag = 'input window, operand 14, single buffered']
    #allocation14 [shape = 'u8[4096]{0}', space=vmem, size = 0x1000, scoped, tag = 'output window, operand 0, single buffered']
    %21 = vsyncpa [#allocation3], 0
    %22 = vsyncpa [#allocation6], 0
    %23 = vsyncpa [#allocation9], 0
    %24 = vsyncpa [#allocation12], 0
    %25 = vsyncpa [#allocation4], 0
    // Predicated region
    $region2: #{tpu_custom_call.1} parent=1 // pred_check
      _
    $region3: #{tpu_custom_call.1} parent=1 // pred_check_branch
      %27 = sbr.rel (0) target = $region5
    $region4: #{tpu_custom_call.1} parent=1 // pred_region
      _
    $region5: #{tpu_custom_call.1} parent=1 // pred_fallthru
      _
    // Predicated region
    $region6: #{tpu_custom_call.1} parent=1 // pred_check
      _
    $region7: #{tpu_custom_call.1} parent=1 // pred_check_branch
      %29 = sbr.rel (0) target = $region9
    $region8: #{tpu_custom_call.1} parent=1 // pred_region
      _
    $region9: #{tpu_custom_call.1} parent=1 // pred_fallthru
      _
    // Predicated region
    $region10: #{tpu_custom_call.1} parent=1 // pred_check
      _
    $region11: #{tpu_custom_call.1} parent=1 // pred_check_branch
      %31 = sbr.rel (0) target = $region13
    $region12: #{tpu_custom_call.1} parent=1 // pred_region
      %s33 = ssub.s32 9216, 9216
      %34 = vsyncadd [#allocation3], %s33
      %s35 = sshll.u32 [#allocation2], 4
      %s36 = int_to_ptr.vmem [resolvable:$true] %s35
      %41 = dma.hbm_to_vmem [thread:$0]  %s2, 9216, %s36, [#allocation3], 1536, 1536, 96
    $region13: #{tpu_custom_call.1} parent=1 // pred_fallthru
      _
    // Predicated region
    $region14: #{tpu_custom_call.1} parent=1 // pred_check
      _
    $region15: #{tpu_custom_call.1} parent=1 // pred_check_branch
      %43 = sbr.rel (0) target = $region17
    $region16: #{tpu_custom_call.1} parent=1 // pred_region
      %s45 = ssub.s32 24576, 24576
      %46 = vsyncadd [#allocation6], %s45
      %s47 = sshll.u32 [#allocation5], 4
      %s48 = int_to_ptr.vmem [resolvable:$true] %s47
      %53 = dma.hbm_to_vmem [thread:$0]  %s3, 24576, %s48, [#allocation6], 128, 128, 8
    $region17: #{tpu_custom_call.1} parent=1 // pred_fallthru
      _
    // Predicated region
    $region18: #{tpu_custom_call.1} parent=1 // pred_check
      _
    $region19: #{tpu_custom_call.1} parent=1 // pred_check_branch
      %55 = sbr.rel (0) target = $region21
    $region20: #{tpu_custom_call.1} parent=1 // pred_region
      _
    $region21: #{tpu_custom_call.1} parent=1 // pred_fallthru
      _
    // Predicated region
    $region22: #{tpu_custom_call.1} parent=1 // pred_check
      _
    $region23: #{tpu_custom_call.1} parent=1 // pred_check_branch
      %57 = sbr.rel (0) target = $region25
    $region24: #{tpu_custom_call.1} parent=1 // pred_region
      _
    $region25: #{tpu_custom_call.1} parent=1 // pred_fallthru
      _
    // Predicated region
    $region26: #{tpu_custom_call.1} parent=1 // pred_check
      _
    $region27: #{tpu_custom_call.1} parent=1 // pred_check_branch
      %59 = sbr.rel (0) target = $region29
    $region28: #{tpu_custom_call.1} parent=1 // pred_region
      %s61 = ssub.s32 4096, 4096
      %62 = vsyncadd [#allocation6], %s61
      %s63 = sshll.u32 [#allocation7], 4
      %s64 = int_to_ptr.vmem [resolvable:$true] %s63
      %69 = dma.hbm_to_vmem [thread:$0]  %s6, 4096, %s64, [#allocation6], 128, 128, 8
    $region29: #{tpu_custom_call.1} parent=1 // pred_fallthru
      _
    // Predicated region
    $region30: #{tpu_custom_call.1} parent=1 // pred_check
      _
    $region31: #{tpu_custom_call.1} parent=1 // pred_check_branch
      %71 = sbr.rel (0) target = $region33
    $region32: #{tpu_custom_call.1} parent=1 // pred_region
      _
    $region33: #{tpu_custom_call.1} parent=1 // pred_fallthru
      _
    // Predicated region
    $region34: #{tpu_custom_call.1} parent=1 // pred_check
      _
    $region35: #{tpu_custom_call.1} parent=1 // pred_check_branch
      %73 = sbr.rel (0) target = $region37
    $region36: #{tpu_custom_call.1} parent=1 // pred_region
      %s75 = ssub.s32 4096, 4096
      %76 = vsyncadd [#allocation9], %s75
      %s77 = sshll.u32 [#allocation8], 4
      %s78 = int_to_ptr.vmem [resolvable:$true] %s77
      %83 = dma.hbm_to_vmem [thread:$0]  %s8, 4096, %s78, [#allocation9], 128, 128, 8
    $region37: #{tpu_custom_call.1} parent=1 // pred_fallthru
      _
    // Predicated region
    $region38: #{tpu_custom_call.1} parent=1 // pred_check
      _
    $region39: #{tpu_custom_call.1} parent=1 // pred_check_branch
      %85 = sbr.rel (0) target = $region41
    $region40: #{tpu_custom_call.1} parent=1 // pred_region
      _
    $region41: #{tpu_custom_call.1} parent=1 // pred_fallthru
      _
    // Predicated region
    $region42: #{tpu_custom_call.1} parent=1 // pred_check
      _
    $region43: #{tpu_custom_call.1} parent=1 // pred_check_branch
      %87 = sbr.rel (0) target = $region45
    $region44: #{tpu_custom_call.1} parent=1 // pred_region
      %s89 = ssub.s32 4096, 4096
      %90 = vsyncadd [#allocation9], %s89
      %s91 = sshll.u32 [#allocation10], 4
      %s92 = int_to_ptr.vmem [resolvable:$true] %s91
      %97 = dma.hbm_to_vmem [thread:$0]  %s10, 4096, %s92, [#allocation9], 128, 128, 8
    $region45: #{tpu_custom_call.1} parent=1 // pred_fallthru
      _
    // Predicated region
    $region46: #{tpu_custom_call.1} parent=1 // pred_check
      _
    $region47: #{tpu_custom_call.1} parent=1 // pred_check_branch
      %99 = sbr.rel (0) target = $region49
    $region48: #{tpu_custom_call.1} parent=1 // pred_region
      _
    $region49: #{tpu_custom_call.1} parent=1 // pred_fallthru
      _
    // Predicated region
    $region50: #{tpu_custom_call.1} parent=1 // pred_check
      _
    $region51: #{tpu_custom_call.1} parent=1 // pred_check_branch
      %101 = sbr.rel (0) target = $region53
    $region52: #{tpu_custom_call.1} parent=1 // pred_region
      %s103 = ssub.s32 4096, 4096
      %104 = vsyncadd [#allocation12], %s103
      %s105 = sshll.u32 [#allocation11], 4
      %s106 = int_to_ptr.vmem [resolvable:$true] %s105
      %111 = dma.hbm_to_vmem [thread:$0]  %s12, 4096, %s106, [#allocation12], 128, 128, 8
    $region53: #{tpu_custom_call.1} parent=1 // pred_fallthru
      _
    // Predicated region
    $region54: #{tpu_custom_call.1} parent=1 // pred_check
      _
    $region55: #{tpu_custom_call.1} parent=1 // pred_check_branch
      %113 = sbr.rel (0) target = $region57
    $region56: #{tpu_custom_call.1} parent=1 // pred_region
      _
    $region57: #{tpu_custom_call.1} parent=1 // pred_fallthru
      _
    // Predicated region
    $region58: #{tpu_custom_call.1} parent=1 // pred_check
      _
    $region59: #{tpu_custom_call.1} parent=1 // pred_check_branch
      %115 = sbr.rel (0) target = $region61
    $region60: #{tpu_custom_call.1} parent=1 // pred_region
      %s117 = ssub.s32 24576, 24576
      %118 = vsyncadd [#allocation12], %s117
      %s119 = sshll.u32 [#allocation13], 4
      %s120 = int_to_ptr.vmem [resolvable:$true] %s119
      %125 = dma.hbm_to_vmem [thread:$0]  %s14, 24576, %s120, [#allocation12], 768, 768, 48
    $region61: #{tpu_custom_call.1} parent=1 // pred_fallthru
      _
    // Predicated region
    $region62: #{tpu_custom_call.1} parent=1 // pred_check
      _
    $region63: #{tpu_custom_call.1} parent=1 // pred_check_branch
      %127 = sbr.rel (0) target = $region65
    $region64: #{tpu_custom_call.1} parent=1 // pred_region
      _
    $region65: #{tpu_custom_call.1} parent=1 // pred_fallthru
      _
    // Predicated region
    $region66: #{tpu_custom_call.1} parent=1 // pred_check
      _
    $region67: #{tpu_custom_call.1} parent=1 // pred_check_branch
      %129 = sbr.rel (0) target = $region69
    $region68: #{tpu_custom_call.1} parent=1 // pred_region
      %130 = dma.done [#allocation3], 9216
    $region69: #{tpu_custom_call.1} parent=1 // pred_fallthru
      _
    // Predicated region
    $region70: #{tpu_custom_call.1} parent=1 // pred_check
      _
    $region71: #{tpu_custom_call.1} parent=1 // pred_check_branch
      %132 = sbr.rel (0) target = $region73
    $region72: #{tpu_custom_call.1} parent=1 // pred_region
      %133 = dma.done [#allocation6], 24576
    $region73: #{tpu_custom_call.1} parent=1 // pred_fallthru
      _
    // Predicated region
    $region74: #{tpu_custom_call.1} parent=1 // pred_check
      _
    $region75: #{tpu_custom_call.1} parent=1 // pred_check_branch
      %135 = sbr.rel (0) target = $region77
    $region76: #{tpu_custom_call.1} parent=1 // pred_region
      %136 = dma.done [#allocation6], 4096
    $region77: #{tpu_custom_call.1} parent=1 // pred_fallthru
      _
    // Predicated region
    $region78: #{tpu_custom_call.1} parent=1 // pred_check
      _
    $region79: #{tpu_custom_call.1} parent=1 // pred_check_branch
      %138 = sbr.rel (0) target = $region81
    $region80: #{tpu_custom_call.1} parent=1 // pred_region
      %139 = dma.done [#allocation9], 4096
    $region81: #{tpu_custom_call.1} parent=1 // pred_fallthru
      _
    // Predicated region
    $region82: #{tpu_custom_call.1} parent=1 // pred_check
      _
    $region83: #{tpu_custom_call.1} parent=1 // pred_check_branch
      %141 = sbr.rel (0) target = $region85
    $region84: #{tpu_custom_call.1} parent=1 // pred_region
      %142 = dma.done [#allocation9], 4096
    $region85: #{tpu_custom_call.1} parent=1 // pred_fallthru
      _
    // Predicated region
    $region86: #{tpu_custom_call.1} parent=1 // pred_check
      _
    $region87: #{tpu_custom_call.1} parent=1 // pred_check_branch
      %144 = sbr.rel (0) target = $region89
    $region88: #{tpu_custom_call.1} parent=1 // pred_region
      %145 = dma.done [#allocation12], 4096
    $region89: #{tpu_custom_call.1} parent=1 // pred_fallthru
      _
    // Predicated region
    $region90: #{tpu_custom_call.1} parent=1 // pred_check
      _
    $region91: #{tpu_custom_call.1} parent=1 // pred_check_branch
      %147 = sbr.rel (0) target = $region93
    $region92: #{tpu_custom_call.1} parent=1 // pred_region
      %148 = dma.done [#allocation12], 24576
    $region93: #{tpu_custom_call.1} parent=1 // pred_fallthru
      _
    %v150 = vld [vmem:[%s1] sm:$0xff]
    %v151 = vld [vmem:[%s4] sm:$0xf]
    %v152 = vpack.c.bf16 %v150, %v150
    %v153 = vld [vmem:[%s5] sm:$0x3]
    %v155 = vlaneseq
    %v156 = vshrl.u32 %v155, 7
    %v157 = vsub.s32 0, %v156
    %v158 = vrot.slane %v153, %v157
    %v159 = vlaneseq
    %v160 = vshrl.u32 %v159, 7
    %v161 = vsub.s32 1, %v160
    %v162 = vrot.slane %v153, %v161
    %v167 = vunpack.c.l.s4 1983009808
    %v168 = vunpack.c.0.s8 %v167
    %v169 = vlaneseq
    %v170 = vshrl.u32 %v169, 7
    %v171 = vsub.s32 %v168, %v170
    %v172 = vrot.slane %v151, %v171
    %v173 = vcombine.high %v172, %v172
    %vm174 = vcmask 31744
    %v176 = vsel %vm174, %v152, 0
    %vm178 = vcmask 1041408
    %v180 = vsel %vm178, %v172, 0
    %v183 = vsel %vm178, %v173, 0
    %185 = vmatprep.subr.bf16.mxu0 %v183
    %186 = vmatpush1.bf16.msra.mxu0 %v180
    %187 = vmatprep.subr.bf16.mxu0 0
    %188 = vmatpush1.bf16.msra.mxu0 0
    %189 = vmatprep.subr.bf16.mxu0 0
    %190 = vmatpush1.bf16.msra.mxu0 0
    %191 = vmatprep.subr.bf16.mxu0 0
    %192 = vmatpush1.bf16.msra.mxu0 0
    %193 = vmatprep.subr.bf16.mxu0 0
    %194 = vmatpush1.bf16.msra.mxu0 0
    %195 = vmatprep.subr.bf16.mxu0 0
    %196 = vmatpush1.bf16.msra.mxu0 0
    %197 = vmatprep.subr.bf16.mxu0 0
    %198 = vmatpush1.bf16.msra.mxu0 0
    %199 = vmatprep.subr.bf16.mxu0 0
    %200 = vmatpush1.bf16.msra.mxu0 0
    %201 = vmatprep.subr.bf16.mxu0 0
    %202 = vmatpush1.bf16.msra.mxu0 0
    %203 = vmatprep.subr.bf16.mxu0 0
    %204 = vmatpush1.bf16.msra.mxu0 0
    %205 = vmatprep.subr.bf16.mxu0 0
    %206 = vmatpush1.bf16.msra.mxu0 0
    %207 = vmatprep.subr.bf16.mxu0 0
    %208 = vmatpush1.bf16.msra.mxu0 0
    %209 = vmatprep.subr.bf16.mxu0 0
    %210 = vmatpush1.bf16.msra.mxu0 0
    %211 = vmatprep.subr.bf16.mxu0 0
    %212 = vmatpush1.bf16.msra.mxu0 0
    %213 = vmatprep.subr.bf16.mxu0 0
    %214 = vmatpush1.bf16.msra.mxu0 0
    %215 = vmatprep.subr.bf16.mxu0 0
    %216 = vmatpush1.bf16.msra.mxu0 0
    %217 = vmatprep.mubr.bf16.mxu0 0
    %218 = vmatmul.mubr.bf16.gmra.mrb[0].mxu0 %v176
    %v219 = vpop.f32.mrb[0].mxu0
    %v220 = vadd.f32 %v158, %v219
    %v221 = vpop.f32.mrb[0].mxu0
    %v222 = vadd.f32 %v162, %v221
    %v223 = vpop.f32.mrb[0].mxu0
    %v224 = vpop.f32.mrb[0].mxu0
    %225 = vdwg.mxu0
    %v226 = vmax.f32 %v220, 0.0
    %v227 = vmax.f32 %v222, 0.0
    %v228 = vld [vmem:[#allocation7] sm:$0xff]
    %v229 = vld [vmem:[#allocation7 + $0x8] sm:$0xff]
    %v230 = vld [vmem:[#allocation7 + $0x10] sm:$0xff]
    %v231 = vld [vmem:[#allocation7 + $0x18] sm:$0xff]
    %v232 = vld [vmem:[#allocation7 + $0x20] sm:$0xff]
    %v233 = vld [vmem:[#allocation7 + $0x28] sm:$0xff]
    %v234 = vld [vmem:[#allocation7 + $0x30] sm:$0xff]
    %v235 = vld [vmem:[#allocation7 + $0x38] sm:$0xff]
    %v236 = vld [vmem:[#allocation7 + $0x40] sm:$0xff]
    %v237 = vld [vmem:[#allocation7 + $0x48] sm:$0xff]
    %v238 = vld [vmem:[#allocation7 + $0x50] sm:$0xff]
    %v239 = vld [vmem:[#allocation7 + $0x58] sm:$0xff]
    %v240 = vld [vmem:[#allocation7 + $0x60] sm:$0xff]
    %v241 = vld [vmem:[#allocation7 + $0x68] sm:$0xff]
    %v242 = vld [vmem:[#allocation7 + $0x70] sm:$0xff]
    %v243 = vld [vmem:[#allocation7 + $0x78] sm:$0xff]
    %v244 = vld [vmem:[#allocation7 + $0x80] sm:$0xff]
    %v245 = vld [vmem:[#allocation7 + $0x88] sm:$0xff]
    %v246 = vld [vmem:[#allocation7 + $0x90] sm:$0xff]
    %v247 = vld [vmem:[#allocation7 + $0x98] sm:$0xff]
    %v248 = vld [vmem:[#allocation7 + $0xa0] sm:$0xff]
    %v249 = vld [vmem:[#allocation7 + $0xa8] sm:$0xff]
    %v250 = vld [vmem:[#allocation7 + $0xb0] sm:$0xff]
    %v251 = vld [vmem:[#allocation7 + $0xb8] sm:$0xff]
    %v252 = vld [vmem:[#allocation7 + $0xc0] sm:$0xff]
    %v253 = vld [vmem:[#allocation7 + $0xc8] sm:$0xff]
    %v254 = vld [vmem:[#allocation7 + $0xd0] sm:$0xff]
    %v255 = vld [vmem:[#allocation7 + $0xd8] sm:$0xff]
    %v256 = vld [vmem:[#allocation7 + $0xe0] sm:$0xff]
    %v257 = vld [vmem:[#allocation7 + $0xe8] sm:$0xff]
    %v258 = vld [vmem:[#allocation7 + $0xf0] sm:$0xff]
    %v259 = vld [vmem:[#allocation7 + $0xf8] sm:$0xff]
    %v260 = vld [vmem:[%s7] sm:$0x3]
    %v261 = vld [vmem:[#allocation8] sm:$0xff]
    %v262 = vld [vmem:[#allocation8 + $0x8] sm:$0xff]
    %v263 = vld [vmem:[#allocation8 + $0x10] sm:$0xff]
    %v264 = vld [vmem:[#allocation8 + $0x18] sm:$0xff]
    %v265 = vld [vmem:[#allocation8 + $0x20] sm:$0xff]
    %v266 = vld [vmem:[#allocation8 + $0x28] sm:$0xff]
    %v267 = vld [vmem:[#allocation8 + $0x30] sm:$0xff]
    %v268 = vld [vmem:[#allocation8 + $0x38] sm:$0xff]
    %v269 = vld [vmem:[#allocation8 + $0x40] sm:$0xff]
    %v270 = vld [vmem:[#allocation8 + $0x48] sm:$0xff]
    %v271 = vld [vmem:[#allocation8 + $0x50] sm:$0xff]
    %v272 = vld [vmem:[#allocation8 + $0x58] sm:$0xff]
    %v273 = vld [vmem:[#allocation8 + $0x60] sm:$0xff]
    %v274 = vld [vmem:[#allocation8 + $0x68] sm:$0xff]
    %v275 = vld [vmem:[#allocation8 + $0x70] sm:$0xff]
    %v276 = vld [vmem:[#allocation8 + $0x78] sm:$0xff]
    %v277 = vld [vmem:[#allocation8 + $0x80] sm:$0xff]
    %v278 = vld [vmem:[#allocation8 + $0x88] sm:$0xff]
    %v279 = vld [vmem:[#allocation8 + $0x90] sm:$0xff]
    %v280 = vld [vmem:[#allocation8 + $0x98] sm:$0xff]
    %v281 = vld [vmem:[#allocation8 + $0xa0] sm:$0xff]
    %v282 = vld [vmem:[#allocation8 + $0xa8] sm:$0xff]
    %v283 = vld [vmem:[#allocation8 + $0xb0] sm:$0xff]
    %v284 = vld [vmem:[#allocation8 + $0xb8] sm:$0xff]
    %v285 = vld [vmem:[#allocation8 + $0xc0] sm:$0xff]
    %v286 = vld [vmem:[#allocation8 + $0xc8] sm:$0xff]
    %v287 = vld [vmem:[#allocation8 + $0xd0] sm:$0xff]
    %v288 = vld [vmem:[#allocation8 + $0xd8] sm:$0xff]
    %v289 = vld [vmem:[#allocation8 + $0xe0] sm:$0xff]
    %v290 = vld [vmem:[#allocation8 + $0xe8] sm:$0xff]
    %v291 = vld [vmem:[#allocation8 + $0xf0] sm:$0xff]
    %v292 = vld [vmem:[#allocation8 + $0xf8] sm:$0xff]
    %v293 = vld [vmem:[%s9] sm:$0x3]
    %v294 = vpack.c.bf16 %v226, %v226
    %v295 = vpack.c.bf16 %v227, %v227
    %v297 = vlaneseq
    %v298 = vshrl.u32 %v297, 7
    %v299 = vsub.s32 0, %v298
    %v300 = vrot.slane %v260, %v299
    %v301 = vlaneseq
    %v302 = vshrl.u32 %v301, 7
    %v303 = vsub.s32 1, %v302
    %v304 = vrot.slane %v260, %v303
    %v339 = vunpack.c.l.b16 %v228
    %v340 = vunpack.c.h.b16 %v228
    %v341 = vunpack.c.l.b16 %v229
    %v342 = vunpack.c.h.b16 %v229
    %v343 = vunpack.c.l.b16 %v230
    %v344 = vunpack.c.h.b16 %v230
    %v345 = vunpack.c.l.b16 %v231
    %v346 = vunpack.c.h.b16 %v231
    %v347 = vunpack.c.l.b16 %v232
    %v348 = vunpack.c.h.b16 %v232
    %v349 = vunpack.c.l.b16 %v233
    %v350 = vunpack.c.h.b16 %v233
    %v351 = vunpack.c.l.b16 %v234
    %v352 = vunpack.c.h.b16 %v234
    %v353 = vunpack.c.l.b16 %v235
    %v354 = vunpack.c.h.b16 %v235
    %v355 = vunpack.c.l.b16 %v236
    %v356 = vunpack.c.h.b16 %v236
    %v357 = vunpack.c.l.b16 %v237
    %v358 = vunpack.c.h.b16 %v237
    %v359 = vunpack.c.l.b16 %v238
    %v360 = vunpack.c.h.b16 %v238
    %v361 = vunpack.c.l.b16 %v239
    %v362 = vunpack.c.h.b16 %v239
    %v363 = vunpack.c.l.b16 %v240
    %v364 = vunpack.c.h.b16 %v240
    %v365 = vunpack.c.l.b16 %v241
    %v366 = vunpack.c.h.b16 %v241
    %v367 = vunpack.c.l.b16 %v242
    %v368 = vunpack.c.h.b16 %v242
    %v369 = vunpack.c.l.b16 %v243
    %v370 = vunpack.c.h.b16 %v243
    %v371 = vunpack.c.l.b16 %v244
    %v372 = vunpack.c.h.b16 %v244
    %v373 = vunpack.c.l.b16 %v245
    %v374 = vunpack.c.h.b16 %v245
    %v375 = vunpack.c.l.b16 %v246
    %v376 = vunpack.c.h.b16 %v246
    %v377 = vunpack.c.l.b16 %v247
    %v378 = vunpack.c.h.b16 %v247
    %v379 = vunpack.c.l.b16 %v248
    %v380 = vunpack.c.h.b16 %v248
    %v381 = vunpack.c.l.b16 %v249
    %v382 = vunpack.c.h.b16 %v249
    %v383 = vunpack.c.l.b16 %v250
    %v384 = vunpack.c.h.b16 %v250
    %v385 = vunpack.c.l.b16 %v251
    %v386 = vunpack.c.h.b16 %v251
    %v387 = vunpack.c.l.b16 %v252
    %v388 = vunpack.c.h.b16 %v252
    %v389 = vunpack.c.l.b16 %v253
    %v390 = vunpack.c.h.b16 %v253
    %v391 = vunpack.c.l.b16 %v254
    %v392 = vunpack.c.h.b16 %v254
    %v393 = vunpack.c.l.b16 %v255
    %v394 = vunpack.c.h.b16 %v255
    %v395 = vunpack.c.l.b16 %v256
    %v396 = vunpack.c.h.b16 %v256
    %v397 = vunpack.c.l.b16 %v257
    %v398 = vunpack.c.h.b16 %v257
    %v399 = vunpack.c.l.b16 %v258
    %v400 = vunpack.c.h.b16 %v258
    %v401 = vunpack.c.l.b16 %v259
    %v402 = vunpack.c.h.b16 %v259
    %v403 = vpack.c.b16 %v341, %v339
    %v404 = vpack.c.b16 %v342, %v340
    %v405 = vpack.c.b16 %v345, %v343
    %v406 = vpack.c.b16 %v346, %v344
    %v407 = vpack.c.b16 %v349, %v347
    %v408 = vpack.c.b16 %v350, %v348
    %v409 = vpack.c.b16 %v353, %v351
    %v410 = vpack.c.b16 %v354, %v352
    %v411 = vpack.c.b16 %v357, %v355
    %v412 = vpack.c.b16 %v358, %v356
    %v413 = vpack.c.b16 %v361, %v359
    %v414 = vpack.c.b16 %v362, %v360
    %v415 = vpack.c.b16 %v365, %v363
    %v416 = vpack.c.b16 %v366, %v364
    %v417 = vpack.c.b16 %v369, %v367
    %v418 = vpack.c.b16 %v370, %v368
    %v419 = vpack.c.b16 %v373, %v371
    %v420 = vpack.c.b16 %v374, %v372
    %v421 = vpack.c.b16 %v377, %v375
    %v422 = vpack.c.b16 %v378, %v376
    %v423 = vpack.c.b16 %v381, %v379
    %v424 = vpack.c.b16 %v382, %v380
    %v425 = vpack.c.b16 %v385, %v383
    %v426 = vpack.c.b16 %v386, %v384
    %v427 = vpack.c.b16 %v389, %v387
    %v428 = vpack.c.b16 %v390, %v388
    %v429 = vpack.c.b16 %v393, %v391
    %v430 = vpack.c.b16 %v394, %v392
    %v431 = vpack.c.b16 %v397, %v395
    %v432 = vpack.c.b16 %v398, %v396
    %v433 = vpack.c.b16 %v401, %v399
    %v434 = vpack.c.b16 %v402, %v400
    %467 = vmatprep.subr.bf16.mxu0 %v404
    %468 = vmatpush1.bf16.msra.mxu0 %v403
    %469 = vmatprep.subr.bf16.mxu0 %v406
    %470 = vmatpush1.bf16.msra.mxu0 %v405
    %471 = vmatprep.subr.bf16.mxu0 %v408
    %472 = vmatpush1.bf16.msra.mxu0 %v407
    %473 = vmatprep.subr.bf16.mxu0 %v410
    %474 = vmatpush1.bf16.msra.mxu0 %v409
    %475 = vmatprep.subr.bf16.mxu0 %v412
    %476 = vmatpush1.bf16.msra.mxu0 %v411
    %477 = vmatprep.subr.bf16.mxu0 %v414
    %478 = vmatpush1.bf16.msra.mxu0 %v413
    %479 = vmatprep.subr.bf16.mxu0 %v416
    %480 = vmatpush1.bf16.msra.mxu0 %v415
    %481 = vmatprep.subr.bf16.mxu0 %v418
    %482 = vmatpush1.bf16.msra.mxu0 %v417
    %483 = vmatprep.subr.bf16.mxu0 %v420
    %484 = vmatpush1.bf16.msra.mxu0 %v419
    %485 = vmatprep.subr.bf16.mxu0 %v422
    %486 = vmatpush1.bf16.msra.mxu0 %v421
    %487 = vmatprep.subr.bf16.mxu0 %v424
    %488 = vmatpush1.bf16.msra.mxu0 %v423
    %489 = vmatprep.subr.bf16.mxu0 %v426
    %490 = vmatpush1.bf16.msra.mxu0 %v425
    %491 = vmatprep.subr.bf16.mxu0 %v428
    %492 = vmatpush1.bf16.msra.mxu0 %v427
    %493 = vmatprep.subr.bf16.mxu0 %v430
    %494 = vmatpush1.bf16.msra.mxu0 %v429
    %495 = vmatprep.subr.bf16.mxu0 %v432
    %496 = vmatpush1.bf16.msra.mxu0 %v431
    %497 = vmatprep.subr.bf16.mxu0 %v434
    %498 = vmatpush1.bf16.msra.mxu0 %v433
    %499 = vmatprep.mubr.bf16.mxu0 %v295
    %500 = vmatmul.mubr.bf16.gmra.mrb[0].mxu0 %v294
    %v501 = vpop.f32.mrb[0].mxu0
    %v502 = vadd.f32 %v300, %v501
    %v503 = vpop.f32.mrb[0].mxu0
    %v504 = vadd.f32 %v304, %v503
    %v505 = vpop.f32.mrb[0].mxu0
    %v506 = vpop.f32.mrb[0].mxu0
    %507 = vdwg.mxu0
    %v508 = vmax.f32 %v502, 0.0
    %v509 = vmax.f32 %v504, 0.0
    %v510 = vpack.c.bf16 %v508, %v508
    %v511 = vpack.c.bf16 %v509, %v509
    %v513 = vlaneseq
    %v514 = vshrl.u32 %v513, 7
    %v515 = vsub.s32 0, %v514
    %v516 = vrot.slane %v293, %v515
    %v517 = vlaneseq
    %v518 = vshrl.u32 %v517, 7
    %v519 = vsub.s32 1, %v518
    %v520 = vrot.slane %v293, %v519
    %v555 = vunpack.c.l.b16 %v261
    %v556 = vunpack.c.h.b16 %v261
    %v557 = vunpack.c.l.b16 %v262
    %v558 = vunpack.c.h.b16 %v262
    %v559 = vunpack.c.l.b16 %v263
    %v560 = vunpack.c.h.b16 %v263
    %v561 = vunpack.c.l.b16 %v264
    %v562 = vunpack.c.h.b16 %v264
    %v563 = vunpack.c.l.b16 %v265
    %v564 = vunpack.c.h.b16 %v265
    %v565 = vunpack.c.l.b16 %v266
    %v566 = vunpack.c.h.b16 %v266
    %v567 = vunpack.c.l.b16 %v267
    %v568 = vunpack.c.h.b16 %v267
    %v569 = vunpack.c.l.b16 %v268
    %v570 = vunpack.c.h.b16 %v268
    %v571 = vunpack.c.l.b16 %v269
    %v572 = vunpack.c.h.b16 %v269
    %v573 = vunpack.c.l.b16 %v270
    %v574 = vunpack.c.h.b16 %v270
    %v575 = vunpack.c.l.b16 %v271
    %v576 = vunpack.c.h.b16 %v271
    %v577 = vunpack.c.l.b16 %v272
    %v578 = vunpack.c.h.b16 %v272
    %v579 = vunpack.c.l.b16 %v273
    %v580 = vunpack.c.h.b16 %v273
    %v581 = vunpack.c.l.b16 %v274
    %v582 = vunpack.c.h.b16 %v274
    %v583 = vunpack.c.l.b16 %v275
    %v584 = vunpack.c.h.b16 %v275
    %v585 = vunpack.c.l.b16 %v276
    %v586 = vunpack.c.h.b16 %v276
    %v587 = vunpack.c.l.b16 %v277
    %v588 = vunpack.c.h.b16 %v277
    %v589 = vunpack.c.l.b16 %v278
    %v590 = vunpack.c.h.b16 %v278
    %v591 = vunpack.c.l.b16 %v279
    %v592 = vunpack.c.h.b16 %v279
    %v593 = vunpack.c.l.b16 %v280
    %v594 = vunpack.c.h.b16 %v280
    %v595 = vunpack.c.l.b16 %v281
    %v596 = vunpack.c.h.b16 %v281
    %v597 = vunpack.c.l.b16 %v282
    %v598 = vunpack.c.h.b16 %v282
    %v599 = vunpack.c.l.b16 %v283
    %v600 = vunpack.c.h.b16 %v283
    %v601 = vunpack.c.l.b16 %v284
    %v602 = vunpack.c.h.b16 %v284
    %v603 = vunpack.c.l.b16 %v285
    %v604 = vunpack.c.h.b16 %v285
    %v605 = vunpack.c.l.b16 %v286
    %v606 = vunpack.c.h.b16 %v286
    %v607 = vunpack.c.l.b16 %v287
    %v608 = vunpack.c.h.b16 %v287
    %v609 = vunpack.c.l.b16 %v288
    %v610 = vunpack.c.h.b16 %v288
    %v611 = vunpack.c.l.b16 %v289
    %v612 = vunpack.c.h.b16 %v289
    %v613 = vunpack.c.l.b16 %v290
    %v614 = vunpack.c.h.b16 %v290
    %v615 = vunpack.c.l.b16 %v291
    %v616 = vunpack.c.h.b16 %v291
    %v617 = vunpack.c.l.b16 %v292
    %v618 = vunpack.c.h.b16 %v292
    %v619 = vpack.c.b16 %v557, %v555
    %v620 = vpack.c.b16 %v558, %v556
    %v621 = vpack.c.b16 %v561, %v559
    %v622 = vpack.c.b16 %v562, %v560
    %v623 = vpack.c.b16 %v565, %v563
    %v624 = vpack.c.b16 %v566, %v564
    %v625 = vpack.c.b16 %v569, %v567
    %v626 = vpack.c.b16 %v570, %v568
    %v627 = vpack.c.b16 %v573, %v571
    %v628 = vpack.c.b16 %v574, %v572
    %v629 = vpack.c.b16 %v577, %v575
    %v630 = vpack.c.b16 %v578, %v576
    %v631 = vpack.c.b16 %v581, %v579
    %v632 = vpack.c.b16 %v582, %v580
    %v633 = vpack.c.b16 %v585, %v583
    %v634 = vpack.c.b16 %v586, %v584
    %v635 = vpack.c.b16 %v589, %v587
    %v636 = vpack.c.b16 %v590, %v588
    %v637 = vpack.c.b16 %v593, %v591
    %v638 = vpack.c.b16 %v594, %v592
    %v639 = vpack.c.b16 %v597, %v595
    %v640 = vpack.c.b16 %v598, %v596
    %v641 = vpack.c.b16 %v601, %v599
    %v642 = vpack.c.b16 %v602, %v600
    %v643 = vpack.c.b16 %v605, %v603
    %v644 = vpack.c.b16 %v606, %v604
    %v645 = vpack.c.b16 %v609, %v607
    %v646 = vpack.c.b16 %v610, %v608
    %v647 = vpack.c.b16 %v613, %v611
    %v648 = vpack.c.b16 %v614, %v612
    %v649 = vpack.c.b16 %v617, %v615
    %v650 = vpack.c.b16 %v618, %v616
    %683 = vmatprep.subr.bf16.mxu0 %v620
    %684 = vmatpush1.bf16.msra.mxu0 %v619
    %685 = vmatprep.subr.bf16.mxu0 %v622
    %686 = vmatpush1.bf16.msra.mxu0 %v621
    %687 = vmatprep.subr.bf16.mxu0 %v624
    %688 = vmatpush1.bf16.msra.mxu0 %v623
    %689 = vmatprep.subr.bf16.mxu0 %v626
    %690 = vmatpush1.bf16.msra.mxu0 %v625
    %691 = vmatprep.subr.bf16.mxu0 %v628
    %692 = vmatpush1.bf16.msra.mxu0 %v627
    %693 = vmatprep.subr.bf16.mxu0 %v630
    %694 = vmatpush1.bf16.msra.mxu0 %v629
    %695 = vmatprep.subr.bf16.mxu0 %v632
    %696 = vmatpush1.bf16.msra.mxu0 %v631
    %697 = vmatprep.subr.bf16.mxu0 %v634
    %698 = vmatpush1.bf16.msra.mxu0 %v633
    %699 = vmatprep.subr.bf16.mxu0 %v636
    %700 = vmatpush1.bf16.msra.mxu0 %v635
    %701 = vmatprep.subr.bf16.mxu0 %v638
    %702 = vmatpush1.bf16.msra.mxu0 %v637
    %703 = vmatprep.subr.bf16.mxu0 %v640
    %704 = vmatpush1.bf16.msra.mxu0 %v639
    %705 = vmatprep.subr.bf16.mxu0 %v642
    %706 = vmatpush1.bf16.msra.mxu0 %v641
    %707 = vmatprep.subr.bf16.mxu0 %v644
    %708 = vmatpush1.bf16.msra.mxu0 %v643
    %709 = vmatprep.subr.bf16.mxu0 %v646
    %710 = vmatpush1.bf16.msra.mxu0 %v645
    %711 = vmatprep.subr.bf16.mxu0 %v648
    %712 = vmatpush1.bf16.msra.mxu0 %v647
    %713 = vmatprep.subr.bf16.mxu0 %v650
    %714 = vmatpush1.bf16.msra.mxu0 %v649
    %715 = vmatprep.mubr.bf16.mxu0 %v511
    %716 = vmatmul.mubr.bf16.gmra.mrb[0].mxu0 %v510
    %v717 = vpop.f32.mrb[0].mxu0
    %v718 = vadd.f32 %v516, %v717
    %v719 = vpop.f32.mrb[0].mxu0
    %v720 = vadd.f32 %v520, %v719
    %v721 = vpop.f32.mrb[0].mxu0
    %v722 = vpop.f32.mrb[0].mxu0
    %723 = vdwg.mxu0
    %v724 = vadd.f32 %v226, %v718
    %v725 = vadd.f32 %v227, %v720
    %v726 = vmax.f32 %v724, 0.0
    %v727 = vmax.f32 %v725, 0.0
    %v728 = vld [vmem:[#allocation10] sm:$0xff]
    %v729 = vld [vmem:[#allocation10 + $0x8] sm:$0xff]
    %v730 = vld [vmem:[#allocation10 + $0x10] sm:$0xff]
    %v731 = vld [vmem:[#allocation10 + $0x18] sm:$0xff]
    %v732 = vld [vmem:[#allocation10 + $0x20] sm:$0xff]
    %v733 = vld [vmem:[#allocation10 + $0x28] sm:$0xff]
    %v734 = vld [vmem:[#allocation10 + $0x30] sm:$0xff]
    %v735 = vld [vmem:[#allocation10 + $0x38] sm:$0xff]
    %v736 = vld [vmem:[#allocation10 + $0x40] sm:$0xff]
    %v737 = vld [vmem:[#allocation10 + $0x48] sm:$0xff]
    %v738 = vld [vmem:[#allocation10 + $0x50] sm:$0xff]
    %v739 = vld [vmem:[#allocation10 + $0x58] sm:$0xff]
    %v740 = vld [vmem:[#allocation10 + $0x60] sm:$0xff]
    %v741 = vld [vmem:[#allocation10 + $0x68] sm:$0xff]
    %v742 = vld [vmem:[#allocation10 + $0x70] sm:$0xff]
    %v743 = vld [vmem:[#allocation10 + $0x78] sm:$0xff]
    %v744 = vld [vmem:[#allocation10 + $0x80] sm:$0xff]
    %v745 = vld [vmem:[#allocation10 + $0x88] sm:$0xff]
    %v746 = vld [vmem:[#allocation10 + $0x90] sm:$0xff]
    %v747 = vld [vmem:[#allocation10 + $0x98] sm:$0xff]
    %v748 = vld [vmem:[#allocation10 + $0xa0] sm:$0xff]
    %v749 = vld [vmem:[#allocation10 + $0xa8] sm:$0xff]
    %v750 = vld [vmem:[#allocation10 + $0xb0] sm:$0xff]
    %v751 = vld [vmem:[#allocation10 + $0xb8] sm:$0xff]
    %v752 = vld [vmem:[#allocation10 + $0xc0] sm:$0xff]
    %v753 = vld [vmem:[#allocation10 + $0xc8] sm:$0xff]
    %v754 = vld [vmem:[#allocation10 + $0xd0] sm:$0xff]
    %v755 = vld [vmem:[#allocation10 + $0xd8] sm:$0xff]
    %v756 = vld [vmem:[#allocation10 + $0xe0] sm:$0xff]
    %v757 = vld [vmem:[#allocation10 + $0xe8] sm:$0xff]
    %v758 = vld [vmem:[#allocation10 + $0xf0] sm:$0xff]
    %v759 = vld [vmem:[#allocation10 + $0xf8] sm:$0xff]
    %v760 = vld [vmem:[%s11] sm:$0x3]
    %v761 = vld [vmem:[#allocation11] sm:$0xff]
    %v762 = vld [vmem:[#allocation11 + $0x8] sm:$0xff]
    %v763 = vld [vmem:[#allocation11 + $0x10] sm:$0xff]
    %v764 = vld [vmem:[#allocation11 + $0x18] sm:$0xff]
    %v765 = vld [vmem:[#allocation11 + $0x20] sm:$0xff]
    %v766 = vld [vmem:[#allocation11 + $0x28] sm:$0xff]
    %v767 = vld [vmem:[#allocation11 + $0x30] sm:$0xff]
    %v768 = vld [vmem:[#allocation11 + $0x38] sm:$0xff]
    %v769 = vld [vmem:[#allocation11 + $0x40] sm:$0xff]
    %v770 = vld [vmem:[#allocation11 + $0x48] sm:$0xff]
    %v771 = vld [vmem:[#allocation11 + $0x50] sm:$0xff]
    %v772 = vld [vmem:[#allocation11 + $0x58] sm:$0xff]
    %v773 = vld [vmem:[#allocation11 + $0x60] sm:$0xff]
    %v774 = vld [vmem:[#allocation11 + $0x68] sm:$0xff]
    %v775 = vld [vmem:[#allocation11 + $0x70] sm:$0xff]
    %v776 = vld [vmem:[#allocation11 + $0x78] sm:$0xff]
    %v777 = vld [vmem:[#allocation11 + $0x80] sm:$0xff]
    %v778 = vld [vmem:[#allocation11 + $0x88] sm:$0xff]
    %v779 = vld [vmem:[#allocation11 + $0x90] sm:$0xff]
    %v780 = vld [vmem:[#allocation11 + $0x98] sm:$0xff]
    %v781 = vld [vmem:[#allocation11 + $0xa0] sm:$0xff]
    %v782 = vld [vmem:[#allocation11 + $0xa8] sm:$0xff]
    %v783 = vld [vmem:[#allocation11 + $0xb0] sm:$0xff]
    %v784 = vld [vmem:[#allocation11 + $0xb8] sm:$0xff]
    %v785 = vld [vmem:[#allocation11 + $0xc0] sm:$0xff]
    %v786 = vld [vmem:[#allocation11 + $0xc8] sm:$0xff]
    %v787 = vld [vmem:[#allocation11 + $0xd0] sm:$0xff]
    %v788 = vld [vmem:[#allocation11 + $0xd8] sm:$0xff]
    %v789 = vld [vmem:[#allocation11 + $0xe0] sm:$0xff]
    %v790 = vld [vmem:[#allocation11 + $0xe8] sm:$0xff]
    %v791 = vld [vmem:[#allocation11 + $0xf0] sm:$0xff]
    %v792 = vld [vmem:[#allocation11 + $0xf8] sm:$0xff]
    %v793 = vld [vmem:[%s13] sm:$0x3]
    %v794 = vpack.c.bf16 %v726, %v726
    %v795 = vpack.c.bf16 %v727, %v727
    %v797 = vlaneseq
    %v798 = vshrl.u32 %v797, 7
    %v799 = vsub.s32 0, %v798
    %v800 = vrot.slane %v760, %v799
    %v801 = vlaneseq
    %v802 = vshrl.u32 %v801, 7
    %v803 = vsub.s32 1, %v802
    %v804 = vrot.slane %v760, %v803
    %v839 = vunpack.c.l.b16 %v728
    %v840 = vunpack.c.h.b16 %v728
    %v841 = vunpack.c.l.b16 %v729
    %v842 = vunpack.c.h.b16 %v729
    %v843 = vunpack.c.l.b16 %v730
    %v844 = vunpack.c.h.b16 %v730
    %v845 = vunpack.c.l.b16 %v731
    %v846 = vunpack.c.h.b16 %v731
    %v847 = vunpack.c.l.b16 %v732
    %v848 = vunpack.c.h.b16 %v732
    %v849 = vunpack.c.l.b16 %v733
    %v850 = vunpack.c.h.b16 %v733
    %v851 = vunpack.c.l.b16 %v734
    %v852 = vunpack.c.h.b16 %v734
    %v853 = vunpack.c.l.b16 %v735
    %v854 = vunpack.c.h.b16 %v735
    %v855 = vunpack.c.l.b16 %v736
    %v856 = vunpack.c.h.b16 %v736
    %v857 = vunpack.c.l.b16 %v737
    %v858 = vunpack.c.h.b16 %v737
    %v859 = vunpack.c.l.b16 %v738
    %v860 = vunpack.c.h.b16 %v738
    %v861 = vunpack.c.l.b16 %v739
    %v862 = vunpack.c.h.b16 %v739
    %v863 = vunpack.c.l.b16 %v740
    %v864 = vunpack.c.h.b16 %v740
    %v865 = vunpack.c.l.b16 %v741
    %v866 = vunpack.c.h.b16 %v741
    %v867 = vunpack.c.l.b16 %v742
    %v868 = vunpack.c.h.b16 %v742
    %v869 = vunpack.c.l.b16 %v743
    %v870 = vunpack.c.h.b16 %v743
    %v871 = vunpack.c.l.b16 %v744
    %v872 = vunpack.c.h.b16 %v744
    %v873 = vunpack.c.l.b16 %v745
    %v874 = vunpack.c.h.b16 %v745
    %v875 = vunpack.c.l.b16 %v746
    %v876 = vunpack.c.h.b16 %v746
    %v877 = vunpack.c.l.b16 %v747
    %v878 = vunpack.c.h.b16 %v747
    %v879 = vunpack.c.l.b16 %v748
    %v880 = vunpack.c.h.b16 %v748
    %v881 = vunpack.c.l.b16 %v749
    %v882 = vunpack.c.h.b16 %v749
    %v883 = vunpack.c.l.b16 %v750
    %v884 = vunpack.c.h.b16 %v750
    %v885 = vunpack.c.l.b16 %v751
    %v886 = vunpack.c.h.b16 %v751
    %v887 = vunpack.c.l.b16 %v752
    %v888 = vunpack.c.h.b16 %v752
    %v889 = vunpack.c.l.b16 %v753
    %v890 = vunpack.c.h.b16 %v753
    %v891 = vunpack.c.l.b16 %v754
    %v892 = vunpack.c.h.b16 %v754
    %v893 = vunpack.c.l.b16 %v755
    %v894 = vunpack.c.h.b16 %v755
    %v895 = vunpack.c.l.b16 %v756
    %v896 = vunpack.c.h.b16 %v756
    %v897 = vunpack.c.l.b16 %v757
    %v898 = vunpack.c.h.b16 %v757
    %v899 = vunpack.c.l.b16 %v758
    %v900 = vunpack.c.h.b16 %v758
    %v901 = vunpack.c.l.b16 %v759
    %v902 = vunpack.c.h.b16 %v759
    %v903 = vpack.c.b16 %v841, %v839
    %v904 = vpack.c.b16 %v842, %v840
    %v905 = vpack.c.b16 %v845, %v843
    %v906 = vpack.c.b16 %v846, %v844
    %v907 = vpack.c.b16 %v849, %v847
    %v908 = vpack.c.b16 %v850, %v848
    %v909 = vpack.c.b16 %v853, %v851
    %v910 = vpack.c.b16 %v854, %v852
    %v911 = vpack.c.b16 %v857, %v855
    %v912 = vpack.c.b16 %v858, %v856
    %v913 = vpack.c.b16 %v861, %v859
    %v914 = vpack.c.b16 %v862, %v860
    %v915 = vpack.c.b16 %v865, %v863
    %v916 = vpack.c.b16 %v866, %v864
    %v917 = vpack.c.b16 %v869, %v867
    %v918 = vpack.c.b16 %v870, %v868
    %v919 = vpack.c.b16 %v873, %v871
    %v920 = vpack.c.b16 %v874, %v872
    %v921 = vpack.c.b16 %v877, %v875
    %v922 = vpack.c.b16 %v878, %v876
    %v923 = vpack.c.b16 %v881, %v879
    %v924 = vpack.c.b16 %v882, %v880
    %v925 = vpack.c.b16 %v885, %v883
    %v926 = vpack.c.b16 %v886, %v884
    %v927 = vpack.c.b16 %v889, %v887
    %v928 = vpack.c.b16 %v890, %v888
    %v929 = vpack.c.b16 %v893, %v891
    %v930 = vpack.c.b16 %v894, %v892
    %v931 = vpack.c.b16 %v897, %v895
    %v932 = vpack.c.b16 %v898, %v896
    %v933 = vpack.c.b16 %v901, %v899
    %v934 = vpack.c.b16 %v902, %v900
    %967 = vmatprep.subr.bf16.mxu0 %v904
    %968 = vmatpush1.bf16.msra.mxu0 %v903
    %969 = vmatprep.subr.bf16.mxu0 %v906
    %970 = vmatpush1.bf16.msra.mxu0 %v905
    %971 = vmatprep.subr.bf16.mxu0 %v908
    %972 = vmatpush1.bf16.msra.mxu0 %v907
    %973 = vmatprep.subr.bf16.mxu0 %v910
    %974 = vmatpush1.bf16.msra.mxu0 %v909
    %975 = vmatprep.subr.bf16.mxu0 %v912
    %976 = vmatpush1.bf16.msra.mxu0 %v911
    %977 = vmatprep.subr.bf16.mxu0 %v914
    %978 = vmatpush1.bf16.msra.mxu0 %v913
    %979 = vmatprep.subr.bf16.mxu0 %v916
    %980 = vmatpush1.bf16.msra.mxu0 %v915
    %981 = vmatprep.subr.bf16.mxu0 %v918
    %982 = vmatpush1.bf16.msra.mxu0 %v917
    %983 = vmatprep.subr.bf16.mxu0 %v920
    %984 = vmatpush1.bf16.msra.mxu0 %v919
    %985 = vmatprep.subr.bf16.mxu0 %v922
    %986 = vmatpush1.bf16.msra.mxu0 %v921
    %987 = vmatprep.subr.bf16.mxu0 %v924
    %988 = vmatpush1.bf16.msra.mxu0 %v923
    %989 = vmatprep.subr.bf16.mxu0 %v926
    %990 = vmatpush1.bf16.msra.mxu0 %v925
    %991 = vmatprep.subr.bf16.mxu0 %v928
    %992 = vmatpush1.bf16.msra.mxu0 %v927
    %993 = vmatprep.subr.bf16.mxu0 %v930
    %994 = vmatpush1.bf16.msra.mxu0 %v929
    %995 = vmatprep.subr.bf16.mxu0 %v932
    %996 = vmatpush1.bf16.msra.mxu0 %v931
    %997 = vmatprep.subr.bf16.mxu0 %v934
    %998 = vmatpush1.bf16.msra.mxu0 %v933
    %999 = vmatprep.mubr.bf16.mxu0 %v795
    %1000 = vmatmul.mubr.bf16.gmra.mrb[0].mxu0 %v794
    %v1001 = vpop.f32.mrb[0].mxu0
    %v1002 = vadd.f32 %v800, %v1001
    %v1003 = vpop.f32.mrb[0].mxu0
    %v1004 = vadd.f32 %v804, %v1003
    %v1005 = vpop.f32.mrb[0].mxu0
    %v1006 = vpop.f32.mrb[0].mxu0
    %1007 = vdwg.mxu0
    %v1008 = vmax.f32 %v1002, 0.0
    %v1009 = vmax.f32 %v1004, 0.0
    %v1010 = vpack.c.bf16 %v1008, %v1008
    %v1011 = vpack.c.bf16 %v1009, %v1009
    %v1013 = vlaneseq
    %v1014 = vshrl.u32 %v1013, 7
    %v1015 = vsub.s32 0, %v1014
    %v1016 = vrot.slane %v793, %v1015
    %v1017 = vlaneseq
    %v1018 = vshrl.u32 %v1017, 7
    %v1019 = vsub.s32 1, %v1018
    %v1020 = vrot.slane %v793, %v1019
    %v1055 = vunpack.c.l.b16 %v761
    %v1056 = vunpack.c.h.b16 %v761
    %v1057 = vunpack.c.l.b16 %v762
    %v1058 = vunpack.c.h.b16 %v762
    %v1059 = vunpack.c.l.b16 %v763
    %v1060 = vunpack.c.h.b16 %v763
    %v1061 = vunpack.c.l.b16 %v764
    %v1062 = vunpack.c.h.b16 %v764
    %v1063 = vunpack.c.l.b16 %v765
    %v1064 = vunpack.c.h.b16 %v765
    %v1065 = vunpack.c.l.b16 %v766
    %v1066 = vunpack.c.h.b16 %v766
    %v1067 = vunpack.c.l.b16 %v767
    %v1068 = vunpack.c.h.b16 %v767
    %v1069 = vunpack.c.l.b16 %v768
    %v1070 = vunpack.c.h.b16 %v768
    %v1071 = vunpack.c.l.b16 %v769
    %v1072 = vunpack.c.h.b16 %v769
    %v1073 = vunpack.c.l.b16 %v770
    %v1074 = vunpack.c.h.b16 %v770
    %v1075 = vunpack.c.l.b16 %v771
    %v1076 = vunpack.c.h.b16 %v771
    %v1077 = vunpack.c.l.b16 %v772
    %v1078 = vunpack.c.h.b16 %v772
    %v1079 = vunpack.c.l.b16 %v773
    %v1080 = vunpack.c.h.b16 %v773
    %v1081 = vunpack.c.l.b16 %v774
    %v1082 = vunpack.c.h.b16 %v774
    %v1083 = vunpack.c.l.b16 %v775
    %v1084 = vunpack.c.h.b16 %v775
    %v1085 = vunpack.c.l.b16 %v776
    %v1086 = vunpack.c.h.b16 %v776
    %v1087 = vunpack.c.l.b16 %v777
    %v1088 = vunpack.c.h.b16 %v777
    %v1089 = vunpack.c.l.b16 %v778
    %v1090 = vunpack.c.h.b16 %v778
    %v1091 = vunpack.c.l.b16 %v779
    %v1092 = vunpack.c.h.b16 %v779
    %v1093 = vunpack.c.l.b16 %v780
    %v1094 = vunpack.c.h.b16 %v780
    %v1095 = vunpack.c.l.b16 %v781
    %v1096 = vunpack.c.h.b16 %v781
    %v1097 = vunpack.c.l.b16 %v782
    %v1098 = vunpack.c.h.b16 %v782
    %v1099 = vunpack.c.l.b16 %v783
    %v1100 = vunpack.c.h.b16 %v783
    %v1101 = vunpack.c.l.b16 %v784
    %v1102 = vunpack.c.h.b16 %v784
    %v1103 = vunpack.c.l.b16 %v785
    %v1104 = vunpack.c.h.b16 %v785
    %v1105 = vunpack.c.l.b16 %v786
    %v1106 = vunpack.c.h.b16 %v786
    %v1107 = vunpack.c.l.b16 %v787
    %v1108 = vunpack.c.h.b16 %v787
    %v1109 = vunpack.c.l.b16 %v788
    %v1110 = vunpack.c.h.b16 %v788
    %v1111 = vunpack.c.l.b16 %v789
    %v1112 = vunpack.c.h.b16 %v789
    %v1113 = vunpack.c.l.b16 %v790
    %v1114 = vunpack.c.h.b16 %v790
    %v1115 = vunpack.c.l.b16 %v791
    %v1116 = vunpack.c.h.b16 %v791
    %v1117 = vunpack.c.l.b16 %v792
    %v1118 = vunpack.c.h.b16 %v792
    %v1119 = vpack.c.b16 %v1057, %v1055
    %v1120 = vpack.c.b16 %v1058, %v1056
    %v1121 = vpack.c.b16 %v1061, %v1059
    %v1122 = vpack.c.b16 %v1062, %v1060
    %v1123 = vpack.c.b16 %v1065, %v1063
    %v1124 = vpack.c.b16 %v1066, %v1064
    %v1125 = vpack.c.b16 %v1069, %v1067
    %v1126 = vpack.c.b16 %v1070, %v1068
    %v1127 = vpack.c.b16 %v1073, %v1071
    %v1128 = vpack.c.b16 %v1074, %v1072
    %v1129 = vpack.c.b16 %v1077, %v1075
    %v1130 = vpack.c.b16 %v1078, %v1076
    %v1131 = vpack.c.b16 %v1081, %v1079
    %v1132 = vpack.c.b16 %v1082, %v1080
    %v1133 = vpack.c.b16 %v1085, %v1083
    %v1134 = vpack.c.b16 %v1086, %v1084
    %v1135 = vpack.c.b16 %v1089, %v1087
    %v1136 = vpack.c.b16 %v1090, %v1088
    %v1137 = vpack.c.b16 %v1093, %v1091
    %v1138 = vpack.c.b16 %v1094, %v1092
    %v1139 = vpack.c.b16 %v1097, %v1095
    %v1140 = vpack.c.b16 %v1098, %v1096
    %v1141 = vpack.c.b16 %v1101, %v1099
    %v1142 = vpack.c.b16 %v1102, %v1100
    %v1143 = vpack.c.b16 %v1105, %v1103
    %v1144 = vpack.c.b16 %v1106, %v1104
    %v1145 = vpack.c.b16 %v1109, %v1107
    %v1146 = vpack.c.b16 %v1110, %v1108
    %v1147 = vpack.c.b16 %v1113, %v1111
    %v1148 = vpack.c.b16 %v1114, %v1112
    %v1149 = vpack.c.b16 %v1117, %v1115
    %v1150 = vpack.c.b16 %v1118, %v1116
    %1183 = vmatprep.subr.bf16.mxu0 %v1120
    %1184 = vmatpush1.bf16.msra.mxu0 %v1119
    %1185 = vmatprep.subr.bf16.mxu0 %v1122
    %1186 = vmatpush1.bf16.msra.mxu0 %v1121
    %1187 = vmatprep.subr.bf16.mxu0 %v1124
    %1188 = vmatpush1.bf16.msra.mxu0 %v1123
    %1189 = vmatprep.subr.bf16.mxu0 %v1126
    %1190 = vmatpush1.bf16.msra.mxu0 %v1125
    %1191 = vmatprep.subr.bf16.mxu0 %v1128
    %1192 = vmatpush1.bf16.msra.mxu0 %v1127
    %1193 = vmatprep.subr.bf16.mxu0 %v1130
    %1194 = vmatpush1.bf16.msra.mxu0 %v1129
    %1195 = vmatprep.subr.bf16.mxu0 %v1132
    %1196 = vmatpush1.bf16.msra.mxu0 %v1131
    %1197 = vmatprep.subr.bf16.mxu0 %v1134
    %1198 = vmatpush1.bf16.msra.mxu0 %v1133
    %1199 = vmatprep.subr.bf16.mxu0 %v1136
    %1200 = vmatpush1.bf16.msra.mxu0 %v1135
    %1201 = vmatprep.subr.bf16.mxu0 %v1138
    %1202 = vmatpush1.bf16.msra.mxu0 %v1137
    %1203 = vmatprep.subr.bf16.mxu0 %v1140
    %1204 = vmatpush1.bf16.msra.mxu0 %v1139
    %1205 = vmatprep.subr.bf16.mxu0 %v1142
    %1206 = vmatpush1.bf16.msra.mxu0 %v1141
    %1207 = vmatprep.subr.bf16.mxu0 %v1144
    %1208 = vmatpush1.bf16.msra.mxu0 %v1143
    %1209 = vmatprep.subr.bf16.mxu0 %v1146
    %1210 = vmatpush1.bf16.msra.mxu0 %v1145
    %1211 = vmatprep.subr.bf16.mxu0 %v1148
    %1212 = vmatpush1.bf16.msra.mxu0 %v1147
    %1213 = vmatprep.subr.bf16.mxu0 %v1150
    %1214 = vmatpush1.bf16.msra.mxu0 %v1149
    %1215 = vmatprep.mubr.bf16.mxu0 %v1011
    %1216 = vmatmul.mubr.bf16.gmra.mrb[0].mxu0 %v1010
    %v1217 = vpop.f32.mrb[0].mxu0
    %v1218 = vadd.f32 %v1016, %v1217
    %v1219 = vpop.f32.mrb[0].mxu0
    %v1220 = vadd.f32 %v1020, %v1219
    %v1221 = vpop.f32.mrb[0].mxu0
    %v1222 = vpop.f32.mrb[0].mxu0
    %1223 = vdwg.mxu0
    %v1224 = vadd.f32 %v726, %v1218
    %v1225 = vadd.f32 %v727, %v1220
    %v1226 = vmax.f32 %v1224, 0.0
    %v1227 = vmax.f32 %v1225, 0.0
    %v1228 = vld [vmem:[#allocation13] sm:$0xff]
    %v1229 = vld [vmem:[#allocation13 + $0x8] sm:$0xff]
    %v1230 = vld [vmem:[#allocation13 + $0x10] sm:$0xff]
    %v1231 = vld [vmem:[#allocation13 + $0x18] sm:$0xff]
    %v1232 = vld [vmem:[#allocation13 + $0x20] sm:$0xff]
    %v1233 = vld [vmem:[#allocation13 + $0x28] sm:$0xff]
    %v1234 = vld [vmem:[#allocation13 + $0x30] sm:$0xff]
    %v1235 = vld [vmem:[#allocation13 + $0x38] sm:$0xff]
    %v1236 = vld [vmem:[#allocation13 + $0x40] sm:$0xff]
    %v1237 = vld [vmem:[#allocation13 + $0x48] sm:$0xff]
    %v1238 = vld [vmem:[#allocation13 + $0x50] sm:$0xff]
    %v1239 = vld [vmem:[#allocation13 + $0x58] sm:$0xff]
    %v1240 = vld [vmem:[#allocation13 + $0x60] sm:$0xff]
    %v1241 = vld [vmem:[#allocation13 + $0x68] sm:$0xff]
    %v1242 = vld [vmem:[#allocation13 + $0x70] sm:$0xff]
    %v1243 = vld [vmem:[#allocation13 + $0x78] sm:$0xff]
    %v1244 = vld [vmem:[#allocation13 + $0x80] sm:$0xff]
    %v1245 = vld [vmem:[#allocation13 + $0x88] sm:$0xff]
    %v1246 = vld [vmem:[#allocation13 + $0x90] sm:$0xff]
    %v1247 = vld [vmem:[#allocation13 + $0x98] sm:$0xff]
    %v1248 = vld [vmem:[#allocation13 + $0xa0] sm:$0xff]
    %v1249 = vld [vmem:[#allocation13 + $0xa8] sm:$0xff]
    %v1250 = vld [vmem:[#allocation13 + $0xb0] sm:$0xff]
    %v1251 = vld [vmem:[#allocation13 + $0xb8] sm:$0xff]
    %v1252 = vld [vmem:[#allocation13 + $0xc0] sm:$0xff]
    %v1253 = vld [vmem:[#allocation13 + $0xc8] sm:$0xff]
    %v1254 = vld [vmem:[#allocation13 + $0xd0] sm:$0xff]
    %v1255 = vld [vmem:[#allocation13 + $0xd8] sm:$0xff]
    %v1256 = vld [vmem:[#allocation13 + $0xe0] sm:$0xff]
    %v1257 = vld [vmem:[#allocation13 + $0xe8] sm:$0xff]
    %v1258 = vld [vmem:[#allocation13 + $0xf0] sm:$0xff]
    %v1259 = vld [vmem:[#allocation13 + $0xf8] sm:$0xff]
    %v1260 = vld [vmem:[#allocation13 + $0x100] sm:$0xff]
    %v1261 = vld [vmem:[#allocation13 + $0x108] sm:$0xff]
    %v1262 = vld [vmem:[#allocation13 + $0x110] sm:$0xff]
    %v1263 = vld [vmem:[#allocation13 + $0x118] sm:$0xff]
    %v1264 = vld [vmem:[#allocation13 + $0x120] sm:$0xff]
    %v1265 = vld [vmem:[#allocation13 + $0x128] sm:$0xff]
    %v1266 = vld [vmem:[#allocation13 + $0x130] sm:$0xff]
    %v1267 = vld [vmem:[#allocation13 + $0x138] sm:$0xff]
    %v1268 = vld [vmem:[#allocation13 + $0x140] sm:$0xff]
    %v1269 = vld [vmem:[#allocation13 + $0x148] sm:$0xff]
    %v1270 = vld [vmem:[#allocation13 + $0x150] sm:$0xff]
    %v1271 = vld [vmem:[#allocation13 + $0x158] sm:$0xff]
    %v1272 = vld [vmem:[#allocation13 + $0x160] sm:$0xff]
    %v1273 = vld [vmem:[#allocation13 + $0x168] sm:$0xff]
    %v1274 = vld [vmem:[#allocation13 + $0x170] sm:$0xff]
    %v1275 = vld [vmem:[#allocation13 + $0x178] sm:$0xff]
    %v1276 = vld [vmem:[#allocation13 + $0x180] sm:$0xff]
    %v1277 = vld [vmem:[#allocation13 + $0x188] sm:$0xff]
    %v1278 = vld [vmem:[#allocation13 + $0x190] sm:$0xff]
    %v1279 = vld [vmem:[#allocation13 + $0x198] sm:$0xff]
    %v1280 = vld [vmem:[#allocation13 + $0x1a0] sm:$0xff]
    %v1281 = vld [vmem:[#allocation13 + $0x1a8] sm:$0xff]
    %v1282 = vld [vmem:[#allocation13 + $0x1b0] sm:$0xff]
    %v1283 = vld [vmem:[#allocation13 + $0x1b8] sm:$0xff]
    %v1284 = vld [vmem:[#allocation13 + $0x1c0] sm:$0xff]
    %v1285 = vld [vmem:[#allocation13 + $0x1c8] sm:$0xff]
    %v1286 = vld [vmem:[#allocation13 + $0x1d0] sm:$0xff]
    %v1287 = vld [vmem:[#allocation13 + $0x1d8] sm:$0xff]
    %v1288 = vld [vmem:[#allocation13 + $0x1e0] sm:$0xff]
    %v1289 = vld [vmem:[#allocation13 + $0x1e8] sm:$0xff]
    %v1290 = vld [vmem:[#allocation13 + $0x1f0] sm:$0xff]
    %v1291 = vld [vmem:[#allocation13 + $0x1f8] sm:$0xff]
    %v1292 = vld [vmem:[#allocation13 + $0x200] sm:$0xff]
    %v1293 = vld [vmem:[#allocation13 + $0x208] sm:$0xff]
    %v1294 = vld [vmem:[#allocation13 + $0x210] sm:$0xff]
    %v1295 = vld [vmem:[#allocation13 + $0x218] sm:$0xff]
    %v1296 = vld [vmem:[#allocation13 + $0x220] sm:$0xff]
    %v1297 = vld [vmem:[#allocation13 + $0x228] sm:$0xff]
    %v1298 = vld [vmem:[#allocation13 + $0x230] sm:$0xff]
    %v1299 = vld [vmem:[#allocation13 + $0x238] sm:$0xff]
    %v1300 = vld [vmem:[#allocation13 + $0x240] sm:$0xff]
    %v1301 = vld [vmem:[#allocation13 + $0x248] sm:$0xff]
    %v1302 = vld [vmem:[#allocation13 + $0x250] sm:$0xff]
    %v1303 = vld [vmem:[#allocation13 + $0x258] sm:$0xff]
    %v1304 = vld [vmem:[#allocation13 + $0x260] sm:$0xff]
    %v1305 = vld [vmem:[#allocation13 + $0x268] sm:$0xff]
    %v1306 = vld [vmem:[#allocation13 + $0x270] sm:$0xff]
    %v1307 = vld [vmem:[#allocation13 + $0x278] sm:$0xff]
    %v1308 = vld [vmem:[#allocation13 + $0x280] sm:$0xff]
    %v1309 = vld [vmem:[#allocation13 + $0x288] sm:$0xff]
    %v1310 = vld [vmem:[#allocation13 + $0x290] sm:$0xff]
    %v1311 = vld [vmem:[#allocation13 + $0x298] sm:$0xff]
    %v1312 = vld [vmem:[#allocation13 + $0x2a0] sm:$0xff]
    %v1313 = vld [vmem:[#allocation13 + $0x2a8] sm:$0xff]
    %v1314 = vld [vmem:[#allocation13 + $0x2b0] sm:$0xff]
    %v1315 = vld [vmem:[#allocation13 + $0x2b8] sm:$0xff]
    %v1316 = vld [vmem:[#allocation13 + $0x2c0] sm:$0xff]
    %v1317 = vld [vmem:[#allocation13 + $0x2c8] sm:$0xff]
    %v1318 = vld [vmem:[#allocation13 + $0x2d0] sm:$0xff]
    %v1319 = vld [vmem:[#allocation13 + $0x2d8] sm:$0xff]
    %v1320 = vld [vmem:[#allocation13 + $0x2e0] sm:$0xff]
    %v1321 = vld [vmem:[#allocation13 + $0x2e8] sm:$0xff]
    %v1322 = vld [vmem:[#allocation13 + $0x2f0] sm:$0xff]
    %v1323 = vld [vmem:[#allocation13 + $0x2f8] sm:$0xff]
    %v1324 = vld [vmem:[#allocation13 + $0x300] sm:$0xff]
    %v1325 = vld [vmem:[#allocation13 + $0x308] sm:$0xff]
    %v1326 = vld [vmem:[#allocation13 + $0x310] sm:$0xff]
    %v1327 = vld [vmem:[#allocation13 + $0x318] sm:$0xff]
    %v1328 = vld [vmem:[#allocation13 + $0x320] sm:$0xff]
    %v1329 = vld [vmem:[#allocation13 + $0x328] sm:$0xff]
    %v1330 = vld [vmem:[#allocation13 + $0x330] sm:$0xff]
    %v1331 = vld [vmem:[#allocation13 + $0x338] sm:$0xff]
    %v1332 = vld [vmem:[#allocation13 + $0x340] sm:$0xff]
    %v1333 = vld [vmem:[#allocation13 + $0x348] sm:$0xff]
    %v1334 = vld [vmem:[#allocation13 + $0x350] sm:$0xff]
    %v1335 = vld [vmem:[#allocation13 + $0x358] sm:$0xff]
    %v1336 = vld [vmem:[#allocation13 + $0x360] sm:$0xff]
    %v1337 = vld [vmem:[#allocation13 + $0x368] sm:$0xff]
    %v1338 = vld [vmem:[#allocation13 + $0x370] sm:$0xff]
    %v1339 = vld [vmem:[#allocation13 + $0x378] sm:$0xff]
    %v1340 = vld [vmem:[#allocation13 + $0x380] sm:$0xff]
    %v1341 = vld [vmem:[#allocation13 + $0x388] sm:$0xff]
    %v1342 = vld [vmem:[#allocation13 + $0x390] sm:$0xff]
    %v1343 = vld [vmem:[#allocation13 + $0x398] sm:$0xff]
    %v1344 = vld [vmem:[#allocation13 + $0x3a0] sm:$0xff]
    %v1345 = vld [vmem:[#allocation13 + $0x3a8] sm:$0xff]
    %v1346 = vld [vmem:[#allocation13 + $0x3b0] sm:$0xff]
    %v1347 = vld [vmem:[#allocation13 + $0x3b8] sm:$0xff]
    %v1348 = vld [vmem:[#allocation13 + $0x3c0] sm:$0xff]
    %v1349 = vld [vmem:[#allocation13 + $0x3c8] sm:$0xff]
    %v1350 = vld [vmem:[#allocation13 + $0x3d0] sm:$0xff]
    %v1351 = vld [vmem:[#allocation13 + $0x3d8] sm:$0xff]
    %v1352 = vld [vmem:[#allocation13 + $0x3e0] sm:$0xff]
    %v1353 = vld [vmem:[#allocation13 + $0x3e8] sm:$0xff]
    %v1354 = vld [vmem:[#allocation13 + $0x3f0] sm:$0xff]
    %v1355 = vld [vmem:[#allocation13 + $0x3f8] sm:$0xff]
    %v1356 = vld [vmem:[#allocation13 + $0x400] sm:$0xff]
    %v1357 = vld [vmem:[#allocation13 + $0x408] sm:$0xff]
    %v1358 = vld [vmem:[#allocation13 + $0x410] sm:$0xff]
    %v1359 = vld [vmem:[#allocation13 + $0x418] sm:$0xff]
    %v1360 = vld [vmem:[#allocation13 + $0x420] sm:$0xff]
    %v1361 = vld [vmem:[#allocation13 + $0x428] sm:$0xff]
    %v1362 = vld [vmem:[#allocation13 + $0x430] sm:$0xff]
    %v1363 = vld [vmem:[#allocation13 + $0x438] sm:$0xff]
    %v1364 = vld [vmem:[#allocation13 + $0x440] sm:$0xff]
    %v1365 = vld [vmem:[#allocation13 + $0x448] sm:$0xff]
    %v1366 = vld [vmem:[#allocation13 + $0x450] sm:$0xff]
    %v1367 = vld [vmem:[#allocation13 + $0x458] sm:$0xff]
    %v1368 = vld [vmem:[#allocation13 + $0x460] sm:$0xff]
    %v1369 = vld [vmem:[#allocation13 + $0x468] sm:$0xff]
    %v1370 = vld [vmem:[#allocation13 + $0x470] sm:$0xff]
    %v1371 = vld [vmem:[#allocation13 + $0x478] sm:$0xff]
    %v1372 = vld [vmem:[#allocation13 + $0x480] sm:$0xff]
    %v1373 = vld [vmem:[#allocation13 + $0x488] sm:$0xff]
    %v1374 = vld [vmem:[#allocation13 + $0x490] sm:$0xff]
    %v1375 = vld [vmem:[#allocation13 + $0x498] sm:$0xff]
    %v1376 = vld [vmem:[#allocation13 + $0x4a0] sm:$0xff]
    %v1377 = vld [vmem:[#allocation13 + $0x4a8] sm:$0xff]
    %v1378 = vld [vmem:[#allocation13 + $0x4b0] sm:$0xff]
    %v1379 = vld [vmem:[#allocation13 + $0x4b8] sm:$0xff]
    %v1380 = vld [vmem:[#allocation13 + $0x4c0] sm:$0xff]
    %v1381 = vld [vmem:[#allocation13 + $0x4c8] sm:$0xff]
    %v1382 = vld [vmem:[#allocation13 + $0x4d0] sm:$0xff]
    %v1383 = vld [vmem:[#allocation13 + $0x4d8] sm:$0xff]
    %v1384 = vld [vmem:[#allocation13 + $0x4e0] sm:$0xff]
    %v1385 = vld [vmem:[#allocation13 + $0x4e8] sm:$0xff]
    %v1386 = vld [vmem:[#allocation13 + $0x4f0] sm:$0xff]
    %v1387 = vld [vmem:[#allocation13 + $0x4f8] sm:$0xff]
    %v1388 = vld [vmem:[#allocation13 + $0x500] sm:$0xff]
    %v1389 = vld [vmem:[#allocation13 + $0x508] sm:$0xff]
    %v1390 = vld [vmem:[#allocation13 + $0x510] sm:$0xff]
    %v1391 = vld [vmem:[#allocation13 + $0x518] sm:$0xff]
    %v1392 = vld [vmem:[#allocation13 + $0x520] sm:$0xff]
    %v1393 = vld [vmem:[#allocation13 + $0x528] sm:$0xff]
    %v1394 = vld [vmem:[#allocation13 + $0x530] sm:$0xff]
    %v1395 = vld [vmem:[#allocation13 + $0x538] sm:$0xff]
    %v1396 = vld [vmem:[#allocation13 + $0x540] sm:$0xff]
    %v1397 = vld [vmem:[#allocation13 + $0x548] sm:$0xff]
    %v1398 = vld [vmem:[#allocation13 + $0x550] sm:$0xff]
    %v1399 = vld [vmem:[#allocation13 + $0x558] sm:$0xff]
    %v1400 = vld [vmem:[#allocation13 + $0x560] sm:$0xff]
    %v1401 = vld [vmem:[#allocation13 + $0x568] sm:$0xff]
    %v1402 = vld [vmem:[#allocation13 + $0x570] sm:$0xff]
    %v1403 = vld [vmem:[#allocation13 + $0x578] sm:$0xff]
    %v1404 = vld [vmem:[#allocation13 + $0x580] sm:$0xff]
    %v1405 = vld [vmem:[#allocation13 + $0x588] sm:$0xff]
    %v1406 = vld [vmem:[#allocation13 + $0x590] sm:$0xff]
    %v1407 = vld [vmem:[#allocation13 + $0x598] sm:$0xff]
    %v1408 = vld [vmem:[#allocation13 + $0x5a0] sm:$0xff]
    %v1409 = vld [vmem:[#allocation13 + $0x5a8] sm:$0xff]
    %v1410 = vld [vmem:[#allocation13 + $0x5b0] sm:$0xff]
    %v1411 = vld [vmem:[#allocation13 + $0x5b8] sm:$0xff]
    %v1412 = vld [vmem:[#allocation13 + $0x5c0] sm:$0xff]
    %v1413 = vld [vmem:[#allocation13 + $0x5c8] sm:$0xff]
    %v1414 = vld [vmem:[#allocation13 + $0x5d0] sm:$0xff]
    %v1415 = vld [vmem:[#allocation13 + $0x5d8] sm:$0xff]
    %v1416 = vld [vmem:[#allocation13 + $0x5e0] sm:$0xff]
    %v1417 = vld [vmem:[#allocation13 + $0x5e8] sm:$0xff]
    %v1418 = vld [vmem:[#allocation13 + $0x5f0] sm:$0xff]
    %v1419 = vld [vmem:[#allocation13 + $0x5f8] sm:$0xff]
    %v1420 = vpack.c.bf16 %v1226, %v1226
    %v1421 = vpack.c.bf16 %v1227, %v1227
    %v1422 = vld [vmem:[%s15] sm:$0xff]
    %v1423 = vld [vmem:[%s15 + $0x8] sm:$0xf]
    %v1426 = vlaneseq
    %v1427 = vshrl.u32 %v1426, 7
    %v1428 = vsub.s32 0, %v1427
    %v1429 = vrot.slane %v1422, %v1428
    %v1430 = vlaneseq
    %v1431 = vshrl.u32 %v1430, 7
    %v1432 = vsub.s32 1, %v1431
    %v1433 = vrot.slane %v1422, %v1432
    %v1434 = vlaneseq
    %v1435 = vshrl.u32 %v1434, 7
    %v1436 = vsub.s32 2, %v1435
    %v1437 = vrot.slane %v1422, %v1436
    %v1438 = vlaneseq
    %v1439 = vshrl.u32 %v1438, 7
    %v1440 = vsub.s32 3, %v1439
    %v1441 = vrot.slane %v1422, %v1440
    %v1442 = vlaneseq
    %v1443 = vshrl.u32 %v1442, 7
    %v1444 = vsub.s32 4, %v1443
    %v1445 = vrot.slane %v1422, %v1444
    %v1446 = vlaneseq
    %v1447 = vshrl.u32 %v1446, 7
    %v1448 = vsub.s32 5, %v1447
    %v1449 = vrot.slane %v1422, %v1448
    %v1450 = vlaneseq
    %v1451 = vshrl.u32 %v1450, 7
    %v1452 = vsub.s32 6, %v1451
    %v1453 = vrot.slane %v1422, %v1452
    %v1454 = vlaneseq
    %v1455 = vshrl.u32 %v1454, 7
    %v1456 = vsub.s32 7, %v1455
    %v1457 = vrot.slane %v1422, %v1456
    %v1458 = vlaneseq
    %v1459 = vshrl.u32 %v1458, 7
    %v1460 = vsub.s32 0, %v1459
    %v1461 = vrot.slane %v1423, %v1460
    %v1462 = vlaneseq
    %v1463 = vshrl.u32 %v1462, 7
    %v1464 = vsub.s32 1, %v1463
    %v1465 = vrot.slane %v1423, %v1464
    %v1466 = vlaneseq
    %v1467 = vshrl.u32 %v1466, 7
    %v1468 = vsub.s32 2, %v1467
    %v1469 = vrot.slane %v1423, %v1468
    %v1470 = vlaneseq
    %v1471 = vshrl.u32 %v1470, 7
    %v1472 = vsub.s32 3, %v1471
    %v1473 = vrot.slane %v1423, %v1472
    %v1678 = vunpack.c.l.b16 %v1228
    %v1679 = vunpack.c.h.b16 %v1228
    %v1680 = vunpack.c.l.b16 %v1229
    %v1681 = vunpack.c.h.b16 %v1229
    %v1682 = vunpack.c.l.b16 %v1230
    %v1683 = vunpack.c.h.b16 %v1230
    %v1684 = vunpack.c.l.b16 %v1231
    %v1685 = vunpack.c.h.b16 %v1231
    %v1686 = vunpack.c.l.b16 %v1232
    %v1687 = vunpack.c.h.b16 %v1232
    %v1688 = vunpack.c.l.b16 %v1233
    %v1689 = vunpack.c.h.b16 %v1233
    %v1690 = vunpack.c.l.b16 %v1234
    %v1691 = vunpack.c.h.b16 %v1234
    %v1692 = vunpack.c.l.b16 %v1235
    %v1693 = vunpack.c.h.b16 %v1235
    %v1694 = vunpack.c.l.b16 %v1236
    %v1695 = vunpack.c.h.b16 %v1236
    %v1696 = vunpack.c.l.b16 %v1237
    %v1697 = vunpack.c.h.b16 %v1237
    %v1698 = vunpack.c.l.b16 %v1238
    %v1699 = vunpack.c.h.b16 %v1238
    %v1700 = vunpack.c.l.b16 %v1239
    %v1701 = vunpack.c.h.b16 %v1239
    %v1702 = vunpack.c.l.b16 %v1240
    %v1703 = vunpack.c.h.b16 %v1240
    %v1704 = vunpack.c.l.b16 %v1241
    %v1705 = vunpack.c.h.b16 %v1241
    %v1706 = vunpack.c.l.b16 %v1242
    %v1707 = vunpack.c.h.b16 %v1242
    %v1708 = vunpack.c.l.b16 %v1243
    %v1709 = vunpack.c.h.b16 %v1243
    %v1710 = vunpack.c.l.b16 %v1244
    %v1711 = vunpack.c.h.b16 %v1244
    %v1712 = vunpack.c.l.b16 %v1245
    %v1713 = vunpack.c.h.b16 %v1245
    %v1714 = vunpack.c.l.b16 %v1246
    %v1715 = vunpack.c.h.b16 %v1246
    %v1716 = vunpack.c.l.b16 %v1247
    %v1717 = vunpack.c.h.b16 %v1247
    %v1718 = vunpack.c.l.b16 %v1248
    %v1719 = vunpack.c.h.b16 %v1248
    %v1720 = vunpack.c.l.b16 %v1249
    %v1721 = vunpack.c.h.b16 %v1249
    %v1722 = vunpack.c.l.b16 %v1250
    %v1723 = vunpack.c.h.b16 %v1250
    %v1724 = vunpack.c.l.b16 %v1251
    %v1725 = vunpack.c.h.b16 %v1251
    %v1726 = vunpack.c.l.b16 %v1252
    %v1727 = vunpack.c.h.b16 %v1252
    %v1728 = vunpack.c.l.b16 %v1253
    %v1729 = vunpack.c.h.b16 %v1253
    %v1730 = vunpack.c.l.b16 %v1254
    %v1731 = vunpack.c.h.b16 %v1254
    %v1732 = vunpack.c.l.b16 %v1255
    %v1733 = vunpack.c.h.b16 %v1255
    %v1734 = vunpack.c.l.b16 %v1256
    %v1735 = vunpack.c.h.b16 %v1256
    %v1736 = vunpack.c.l.b16 %v1257
    %v1737 = vunpack.c.h.b16 %v1257
    %v1738 = vunpack.c.l.b16 %v1258
    %v1739 = vunpack.c.h.b16 %v1258
    %v1740 = vunpack.c.l.b16 %v1259
    %v1741 = vunpack.c.h.b16 %v1259
    %v1742 = vunpack.c.l.b16 %v1260
    %v1743 = vunpack.c.h.b16 %v1260
    %v1744 = vunpack.c.l.b16 %v1261
    %v1745 = vunpack.c.h.b16 %v1261
    %v1746 = vunpack.c.l.b16 %v1262
    %v1747 = vunpack.c.h.b16 %v1262
    %v1748 = vunpack.c.l.b16 %v1263
    %v1749 = vunpack.c.h.b16 %v1263
    %v1750 = vunpack.c.l.b16 %v1264
    %v1751 = vunpack.c.h.b16 %v1264
    %v1752 = vunpack.c.l.b16 %v1265
    %v1753 = vunpack.c.h.b16 %v1265
    %v1754 = vunpack.c.l.b16 %v1266
    %v1755 = vunpack.c.h.b16 %v1266
    %v1756 = vunpack.c.l.b16 %v1267
    %v1757 = vunpack.c.h.b16 %v1267
    %v1758 = vunpack.c.l.b16 %v1268
    %v1759 = vunpack.c.h.b16 %v1268
    %v1760 = vunpack.c.l.b16 %v1269
    %v1761 = vunpack.c.h.b16 %v1269
    %v1762 = vunpack.c.l.b16 %v1270
    %v1763 = vunpack.c.h.b16 %v1270
    %v1764 = vunpack.c.l.b16 %v1271
    %v1765 = vunpack.c.h.b16 %v1271
    %v1766 = vunpack.c.l.b16 %v1272
    %v1767 = vunpack.c.h.b16 %v1272
    %v1768 = vunpack.c.l.b16 %v1273
    %v1769 = vunpack.c.h.b16 %v1273
    %v1770 = vunpack.c.l.b16 %v1274
    %v1771 = vunpack.c.h.b16 %v1274
    %v1772 = vunpack.c.l.b16 %v1275
    %v1773 = vunpack.c.h.b16 %v1275
    %v1774 = vunpack.c.l.b16 %v1276
    %v1775 = vunpack.c.h.b16 %v1276
    %v1776 = vunpack.c.l.b16 %v1277
    %v1777 = vunpack.c.h.b16 %v1277
    %v1778 = vunpack.c.l.b16 %v1278
    %v1779 = vunpack.c.h.b16 %v1278
    %v1780 = vunpack.c.l.b16 %v1279
    %v1781 = vunpack.c.h.b16 %v1279
    %v1782 = vunpack.c.l.b16 %v1280
    %v1783 = vunpack.c.h.b16 %v1280
    %v1784 = vunpack.c.l.b16 %v1281
    %v1785 = vunpack.c.h.b16 %v1281
    %v1786 = vunpack.c.l.b16 %v1282
    %v1787 = vunpack.c.h.b16 %v1282
    %v1788 = vunpack.c.l.b16 %v1283
    %v1789 = vunpack.c.h.b16 %v1283
    %v1790 = vunpack.c.l.b16 %v1284
    %v1791 = vunpack.c.h.b16 %v1284
    %v1792 = vunpack.c.l.b16 %v1285
    %v1793 = vunpack.c.h.b16 %v1285
    %v1794 = vunpack.c.l.b16 %v1286
    %v1795 = vunpack.c.h.b16 %v1286
    %v1796 = vunpack.c.l.b16 %v1287
    %v1797 = vunpack.c.h.b16 %v1287
    %v1798 = vunpack.c.l.b16 %v1288
    %v1799 = vunpack.c.h.b16 %v1288
    %v1800 = vunpack.c.l.b16 %v1289
    %v1801 = vunpack.c.h.b16 %v1289
    %v1802 = vunpack.c.l.b16 %v1290
    %v1803 = vunpack.c.h.b16 %v1290
    %v1804 = vunpack.c.l.b16 %v1291
    %v1805 = vunpack.c.h.b16 %v1291
    %v1806 = vunpack.c.l.b16 %v1292
    %v1807 = vunpack.c.h.b16 %v1292
    %v1808 = vunpack.c.l.b16 %v1293
    %v1809 = vunpack.c.h.b16 %v1293
    %v1810 = vunpack.c.l.b16 %v1294
    %v1811 = vunpack.c.h.b16 %v1294
    %v1812 = vunpack.c.l.b16 %v1295
    %v1813 = vunpack.c.h.b16 %v1295
    %v1814 = vunpack.c.l.b16 %v1296
    %v1815 = vunpack.c.h.b16 %v1296
    %v1816 = vunpack.c.l.b16 %v1297
    %v1817 = vunpack.c.h.b16 %v1297
    %v1818 = vunpack.c.l.b16 %v1298
    %v1819 = vunpack.c.h.b16 %v1298
    %v1820 = vunpack.c.l.b16 %v1299
    %v1821 = vunpack.c.h.b16 %v1299
    %v1822 = vunpack.c.l.b16 %v1300
    %v1823 = vunpack.c.h.b16 %v1300
    %v1824 = vunpack.c.l.b16 %v1301
    %v1825 = vunpack.c.h.b16 %v1301
    %v1826 = vunpack.c.l.b16 %v1302
    %v1827 = vunpack.c.h.b16 %v1302
    %v1828 = vunpack.c.l.b16 %v1303
    %v1829 = vunpack.c.h.b16 %v1303
    %v1830 = vunpack.c.l.b16 %v1304
    %v1831 = vunpack.c.h.b16 %v1304
    %v1832 = vunpack.c.l.b16 %v1305
    %v1833 = vunpack.c.h.b16 %v1305
    %v1834 = vunpack.c.l.b16 %v1306
    %v1835 = vunpack.c.h.b16 %v1306
    %v1836 = vunpack.c.l.b16 %v1307
    %v1837 = vunpack.c.h.b16 %v1307
    %v1838 = vunpack.c.l.b16 %v1308
    %v1839 = vunpack.c.h.b16 %v1308
    %v1840 = vunpack.c.l.b16 %v1309
    %v1841 = vunpack.c.h.b16 %v1309
    %v1842 = vunpack.c.l.b16 %v1310
    %v1843 = vunpack.c.h.b16 %v1310
    %v1844 = vunpack.c.l.b16 %v1311
    %v1845 = vunpack.c.h.b16 %v1311
    %v1846 = vunpack.c.l.b16 %v1312
    %v1847 = vunpack.c.h.b16 %v1312
    %v1848 = vunpack.c.l.b16 %v1313
    %v1849 = vunpack.c.h.b16 %v1313
    %v1850 = vunpack.c.l.b16 %v1314
    %v1851 = vunpack.c.h.b16 %v1314
    %v1852 = vunpack.c.l.b16 %v1315
    %v1853 = vunpack.c.h.b16 %v1315
    %v1854 = vunpack.c.l.b16 %v1316
    %v1855 = vunpack.c.h.b16 %v1316
    %v1856 = vunpack.c.l.b16 %v1317
    %v1857 = vunpack.c.h.b16 %v1317
    %v1858 = vunpack.c.l.b16 %v1318
    %v1859 = vunpack.c.h.b16 %v1318
    %v1860 = vunpack.c.l.b16 %v1319
    %v1861 = vunpack.c.h.b16 %v1319
    %v1862 = vunpack.c.l.b16 %v1320
    %v1863 = vunpack.c.h.b16 %v1320
    %v1864 = vunpack.c.l.b16 %v1321
    %v1865 = vunpack.c.h.b16 %v1321
    %v1866 = vunpack.c.l.b16 %v1322
    %v1867 = vunpack.c.h.b16 %v1322
    %v1868 = vunpack.c.l.b16 %v1323
    %v1869 = vunpack.c.h.b16 %v1323
    %v1870 = vunpack.c.l.b16 %v1324
    %v1871 = vunpack.c.h.b16 %v1324
    %v1872 = vunpack.c.l.b16 %v1325
    %v1873 = vunpack.c.h.b16 %v1325
    %v1874 = vunpack.c.l.b16 %v1326
    %v1875 = vunpack.c.h.b16 %v1326
    %v1876 = vunpack.c.l.b16 %v1327
    %v1877 = vunpack.c.h.b16 %v1327
    %v1878 = vunpack.c.l.b16 %v1328
    %v1879 = vunpack.c.h.b16 %v1328
    %v1880 = vunpack.c.l.b16 %v1329
    %v1881 = vunpack.c.h.b16 %v1329
    %v1882 = vunpack.c.l.b16 %v1330
    %v1883 = vunpack.c.h.b16 %v1330
    %v1884 = vunpack.c.l.b16 %v1331
    %v1885 = vunpack.c.h.b16 %v1331
    %v1886 = vunpack.c.l.b16 %v1332
    %v1887 = vunpack.c.h.b16 %v1332
    %v1888 = vunpack.c.l.b16 %v1333
    %v1889 = vunpack.c.h.b16 %v1333
    %v1890 = vunpack.c.l.b16 %v1334
    %v1891 = vunpack.c.h.b16 %v1334
    %v1892 = vunpack.c.l.b16 %v1335
    %v1893 = vunpack.c.h.b16 %v1335
    %v1894 = vunpack.c.l.b16 %v1336
    %v1895 = vunpack.c.h.b16 %v1336
    %v1896 = vunpack.c.l.b16 %v1337
    %v1897 = vunpack.c.h.b16 %v1337
    %v1898 = vunpack.c.l.b16 %v1338
    %v1899 = vunpack.c.h.b16 %v1338
    %v1900 = vunpack.c.l.b16 %v1339
    %v1901 = vunpack.c.h.b16 %v1339
    %v1902 = vunpack.c.l.b16 %v1340
    %v1903 = vunpack.c.h.b16 %v1340
    %v1904 = vunpack.c.l.b16 %v1341
    %v1905 = vunpack.c.h.b16 %v1341
    %v1906 = vunpack.c.l.b16 %v1342
    %v1907 = vunpack.c.h.b16 %v1342
    %v1908 = vunpack.c.l.b16 %v1343
    %v1909 = vunpack.c.h.b16 %v1343
    %v1910 = vunpack.c.l.b16 %v1344
    %v1911 = vunpack.c.h.b16 %v1344
    %v1912 = vunpack.c.l.b16 %v1345
    %v1913 = vunpack.c.h.b16 %v1345
    %v1914 = vunpack.c.l.b16 %v1346
    %v1915 = vunpack.c.h.b16 %v1346
    %v1916 = vunpack.c.l.b16 %v1347
    %v1917 = vunpack.c.h.b16 %v1347
    %v1918 = vunpack.c.l.b16 %v1348
    %v1919 = vunpack.c.h.b16 %v1348
    %v1920 = vunpack.c.l.b16 %v1349
    %v1921 = vunpack.c.h.b16 %v1349
    %v1922 = vunpack.c.l.b16 %v1350
    %v1923 = vunpack.c.h.b16 %v1350
    %v1924 = vunpack.c.l.b16 %v1351
    %v1925 = vunpack.c.h.b16 %v1351
    %v1926 = vunpack.c.l.b16 %v1352
    %v1927 = vunpack.c.h.b16 %v1352
    %v1928 = vunpack.c.l.b16 %v1353
    %v1929 = vunpack.c.h.b16 %v1353
    %v1930 = vunpack.c.l.b16 %v1354
    %v1931 = vunpack.c.h.b16 %v1354
    %v1932 = vunpack.c.l.b16 %v1355
    %v1933 = vunpack.c.h.b16 %v1355
    %v1934 = vunpack.c.l.b16 %v1356
    %v1935 = vunpack.c.h.b16 %v1356
    %v1936 = vunpack.c.l.b16 %v1357
    %v1937 = vunpack.c.h.b16 %v1357
    %v1938 = vunpack.c.l.b16 %v1358
    %v1939 = vunpack.c.h.b16 %v1358
    %v1940 = vunpack.c.l.b16 %v1359
    %v1941 = vunpack.c.h.b16 %v1359
    %v1942 = vunpack.c.l.b16 %v1360
    %v1943 = vunpack.c.h.b16 %v1360
    %v1944 = vunpack.c.l.b16 %v1361
    %v1945 = vunpack.c.h.b16 %v1361
    %v1946 = vunpack.c.l.b16 %v1362
    %v1947 = vunpack.c.h.b16 %v1362
    %v1948 = vunpack.c.l.b16 %v1363
    %v1949 = vunpack.c.h.b16 %v1363
    %v1950 = vunpack.c.l.b16 %v1364
    %v1951 = vunpack.c.h.b16 %v1364
    %v1952 = vunpack.c.l.b16 %v1365
    %v1953 = vunpack.c.h.b16 %v1365
    %v1954 = vunpack.c.l.b16 %v1366
    %v1955 = vunpack.c.h.b16 %v1366
    %v1956 = vunpack.c.l.b16 %v1367
    %v1957 = vunpack.c.h.b16 %v1367
    %v1958 = vunpack.c.l.b16 %v1368
    %v1959 = vunpack.c.h.b16 %v1368
    %v1960 = vunpack.c.l.b16 %v1369
    %v1961 = vunpack.c.h.b16 %v1369
    %v1962 = vunpack.c.l.b16 %v1370
    %v1963 = vunpack.c.h.b16 %v1370
    %v1964 = vunpack.c.l.b16 %v1371
    %v1965 = vunpack.c.h.b16 %v1371
    %v1966 = vunpack.c.l.b16 %v1372
    %v1967 = vunpack.c.h.b16 %v1372
    %v1968 = vunpack.c.l.b16 %v1373
    %v1969 = vunpack.c.h.b16 %v1373
    %v1970 = vunpack.c.l.b16 %v1374
    %v1971 = vunpack.c.h.b16 %v1374
    %v1972 = vunpack.c.l.b16 %v1375
    %v1973 = vunpack.c.h.b16 %v1375
    %v1974 = vunpack.c.l.b16 %v1376
    %v1975 = vunpack.c.h.b16 %v1376
    %v1976 = vunpack.c.l.b16 %v1377
    %v1977 = vunpack.c.h.b16 %v1377
    %v1978 = vunpack.c.l.b16 %v1378
    %v1979 = vunpack.c.h.b16 %v1378
    %v1980 = vunpack.c.l.b16 %v1379
    %v1981 = vunpack.c.h.b16 %v1379
    %v1982 = vunpack.c.l.b16 %v1380
    %v1983 = vunpack.c.h.b16 %v1380
    %v1984 = vunpack.c.l.b16 %v1381
    %v1985 = vunpack.c.h.b16 %v1381
    %v1986 = vunpack.c.l.b16 %v1382
    %v1987 = vunpack.c.h.b16 %v1382
    %v1988 = vunpack.c.l.b16 %v1383
    %v1989 = vunpack.c.h.b16 %v1383
    %v1990 = vunpack.c.l.b16 %v1384
    %v1991 = vunpack.c.h.b16 %v1384
    %v1992 = vunpack.c.l.b16 %v1385
    %v1993 = vunpack.c.h.b16 %v1385
    %v1994 = vunpack.c.l.b16 %v1386
    %v1995 = vunpack.c.h.b16 %v1386
    %v1996 = vunpack.c.l.b16 %v1387
    %v1997 = vunpack.c.h.b16 %v1387
    %v1998 = vunpack.c.l.b16 %v1388
    %v1999 = vunpack.c.h.b16 %v1388
    %v2000 = vunpack.c.l.b16 %v1389
    %v2001 = vunpack.c.h.b16 %v1389
    %v2002 = vunpack.c.l.b16 %v1390
    %v2003 = vunpack.c.h.b16 %v1390
    %v2004 = vunpack.c.l.b16 %v1391
    %v2005 = vunpack.c.h.b16 %v1391
    %v2006 = vunpack.c.l.b16 %v1392
    %v2007 = vunpack.c.h.b16 %v1392
    %v2008 = vunpack.c.l.b16 %v1393
    %v2009 = vunpack.c.h.b16 %v1393
    %v2010 = vunpack.c.l.b16 %v1394
    %v2011 = vunpack.c.h.b16 %v1394
    %v2012 = vunpack.c.l.b16 %v1395
    %v2013 = vunpack.c.h.b16 %v1395
    %v2014 = vunpack.c.l.b16 %v1396
    %v2015 = vunpack.c.h.b16 %v1396
    %v2016 = vunpack.c.l.b16 %v1397
    %v2017 = vunpack.c.h.b16 %v1397
    %v2018 = vunpack.c.l.b16 %v1398
    %v2019 = vunpack.c.h.b16 %v1398
    %v2020 = vunpack.c.l.b16 %v1399
    %v2021 = vunpack.c.h.b16 %v1399
    %v2022 = vunpack.c.l.b16 %v1400
    %v2023 = vunpack.c.h.b16 %v1400
    %v2024 = vunpack.c.l.b16 %v1401
    %v2025 = vunpack.c.h.b16 %v1401
    %v2026 = vunpack.c.l.b16 %v1402
    %v2027 = vunpack.c.h.b16 %v1402
    %v2028 = vunpack.c.l.b16 %v1403
    %v2029 = vunpack.c.h.b16 %v1403
    %v2030 = vunpack.c.l.b16 %v1404
    %v2031 = vunpack.c.h.b16 %v1404
    %v2032 = vunpack.c.l.b16 %v1405
    %v2033 = vunpack.c.h.b16 %v1405
    %v2034 = vunpack.c.l.b16 %v1406
    %v2035 = vunpack.c.h.b16 %v1406
    %v2036 = vunpack.c.l.b16 %v1407
    %v2037 = vunpack.c.h.b16 %v1407
    %v2038 = vunpack.c.l.b16 %v1408
    %v2039 = vunpack.c.h.b16 %v1408
    %v2040 = vunpack.c.l.b16 %v1409
    %v2041 = vunpack.c.h.b16 %v1409
    %v2042 = vunpack.c.l.b16 %v1410
    %v2043 = vunpack.c.h.b16 %v1410
    %v2044 = vunpack.c.l.b16 %v1411
    %v2045 = vunpack.c.h.b16 %v1411
    %v2046 = vunpack.c.l.b16 %v1412
    %v2047 = vunpack.c.h.b16 %v1412
    %v2048 = vunpack.c.l.b16 %v1413
    %v2049 = vunpack.c.h.b16 %v1413
    %v2050 = vunpack.c.l.b16 %v1414
    %v2051 = vunpack.c.h.b16 %v1414
    %v2052 = vunpack.c.l.b16 %v1415
    %v2053 = vunpack.c.h.b16 %v1415
    %v2054 = vunpack.c.l.b16 %v1416
    %v2055 = vunpack.c.h.b16 %v1416
    %v2056 = vunpack.c.l.b16 %v1417
    %v2057 = vunpack.c.h.b16 %v1417
    %v2058 = vunpack.c.l.b16 %v1418
    %v2059 = vunpack.c.h.b16 %v1418
    %v2060 = vunpack.c.l.b16 %v1419
    %v2061 = vunpack.c.h.b16 %v1419
    %v2062 = vpack.c.b16 %v1690, %v1678
    %v2063 = vpack.c.b16 %v1691, %v1679
    %v2064 = vpack.c.b16 %v1692, %v1680
    %v2065 = vpack.c.b16 %v1693, %v1681
    %v2066 = vpack.c.b16 %v1694, %v1682
    %v2067 = vpack.c.b16 %v1695, %v1683
    %v2068 = vpack.c.b16 %v1696, %v1684
    %v2069 = vpack.c.b16 %v1697, %v1685
    %v2070 = vpack.c.b16 %v1698, %v1686
    %v2071 = vpack.c.b16 %v1699, %v1687
    %v2072 = vpack.c.b16 %v1700, %v1688
    %v2073 = vpack.c.b16 %v1701, %v1689
    %v2074 = vpack.c.b16 %v1714, %v1702
    %v2075 = vpack.c.b16 %v1715, %v1703
    %v2076 = vpack.c.b16 %v1716, %v1704
    %v2077 = vpack.c.b16 %v1717, %v1705
    %v2078 = vpack.c.b16 %v1718, %v1706
    %v2079 = vpack.c.b16 %v1719, %v1707
    %v2080 = vpack.c.b16 %v1720, %v1708
    %v2081 = vpack.c.b16 %v1721, %v1709
    %v2082 = vpack.c.b16 %v1722, %v1710
    %v2083 = vpack.c.b16 %v1723, %v1711
    %v2084 = vpack.c.b16 %v1724, %v1712
    %v2085 = vpack.c.b16 %v1725, %v1713
    %v2086 = vpack.c.b16 %v1738, %v1726
    %v2087 = vpack.c.b16 %v1739, %v1727
    %v2088 = vpack.c.b16 %v1740, %v1728
    %v2089 = vpack.c.b16 %v1741, %v1729
    %v2090 = vpack.c.b16 %v1742, %v1730
    %v2091 = vpack.c.b16 %v1743, %v1731
    %v2092 = vpack.c.b16 %v1744, %v1732
    %v2093 = vpack.c.b16 %v1745, %v1733
    %v2094 = vpack.c.b16 %v1746, %v1734
    %v2095 = vpack.c.b16 %v1747, %v1735
    %v2096 = vpack.c.b16 %v1748, %v1736
    %v2097 = vpack.c.b16 %v1749, %v1737
    %v2098 = vpack.c.b16 %v1762, %v1750
    %v2099 = vpack.c.b16 %v1763, %v1751
    %v2100 = vpack.c.b16 %v1764, %v1752
    %v2101 = vpack.c.b16 %v1765, %v1753
    %v2102 = vpack.c.b16 %v1766, %v1754
    %v2103 = vpack.c.b16 %v1767, %v1755
    %v2104 = vpack.c.b16 %v1768, %v1756
    %v2105 = vpack.c.b16 %v1769, %v1757
    %v2106 = vpack.c.b16 %v1770, %v1758
    %v2107 = vpack.c.b16 %v1771, %v1759
    %v2108 = vpack.c.b16 %v1772, %v1760
    %v2109 = vpack.c.b16 %v1773, %v1761
    %v2110 = vpack.c.b16 %v1786, %v1774
    %v2111 = vpack.c.b16 %v1787, %v1775
    %v2112 = vpack.c.b16 %v1788, %v1776
    %v2113 = vpack.c.b16 %v1789, %v1777
    %v2114 = vpack.c.b16 %v1790, %v1778
    %v2115 = vpack.c.b16 %v1791, %v1779
    %v2116 = vpack.c.b16 %v1792, %v1780
    %v2117 = vpack.c.b16 %v1793, %v1781
    %v2118 = vpack.c.b16 %v1794, %v1782
    %v2119 = vpack.c.b16 %v1795, %v1783
    %v2120 = vpack.c.b16 %v1796, %v1784
    %v2121 = vpack.c.b16 %v1797, %v1785
    %v2122 = vpack.c.b16 %v1810, %v1798
    %v2123 = vpack.c.b16 %v1811, %v1799
    %v2124 = vpack.c.b16 %v1812, %v1800
    %v2125 = vpack.c.b16 %v1813, %v1801
    %v2126 = vpack.c.b16 %v1814, %v1802
    %v2127 = vpack.c.b16 %v1815, %v1803
    %v2128 = vpack.c.b16 %v1816, %v1804
    %v2129 = vpack.c.b16 %v1817, %v1805
    %v2130 = vpack.c.b16 %v1818, %v1806
    %v2131 = vpack.c.b16 %v1819, %v1807
    %v2132 = vpack.c.b16 %v1820, %v1808
    %v2133 = vpack.c.b16 %v1821, %v1809
    %v2134 = vpack.c.b16 %v1834, %v1822
    %v2135 = vpack.c.b16 %v1835, %v1823
    %v2136 = vpack.c.b16 %v1836, %v1824
    %v2137 = vpack.c.b16 %v1837, %v1825
    %v2138 = vpack.c.b16 %v1838, %v1826
    %v2139 = vpack.c.b16 %v1839, %v1827
    %v2140 = vpack.c.b16 %v1840, %v1828
    %v2141 = vpack.c.b16 %v1841, %v1829
    %v2142 = vpack.c.b16 %v1842, %v1830
    %v2143 = vpack.c.b16 %v1843, %v1831
    %v2144 = vpack.c.b16 %v1844, %v1832
    %v2145 = vpack.c.b16 %v1845, %v1833
    %v2146 = vpack.c.b16 %v1858, %v1846
    %v2147 = vpack.c.b16 %v1859, %v1847
    %v2148 = vpack.c.b16 %v1860, %v1848
    %v2149 = vpack.c.b16 %v1861, %v1849
    %v2150 = vpack.c.b16 %v1862, %v1850
    %v2151 = vpack.c.b16 %v1863, %v1851
    %v2152 = vpack.c.b16 %v1864, %v1852
    %v2153 = vpack.c.b16 %v1865, %v1853
    %v2154 = vpack.c.b16 %v1866, %v1854
    %v2155 = vpack.c.b16 %v1867, %v1855
    %v2156 = vpack.c.b16 %v1868, %v1856
    %v2157 = vpack.c.b16 %v1869, %v1857
    %v2158 = vpack.c.b16 %v1882, %v1870
    %v2159 = vpack.c.b16 %v1883, %v1871
    %v2160 = vpack.c.b16 %v1884, %v1872
    %v2161 = vpack.c.b16 %v1885, %v1873
    %v2162 = vpack.c.b16 %v1886, %v1874
    %v2163 = vpack.c.b16 %v1887, %v1875
    %v2164 = vpack.c.b16 %v1888, %v1876
    %v2165 = vpack.c.b16 %v1889, %v1877
    %v2166 = vpack.c.b16 %v1890, %v1878
    %v2167 = vpack.c.b16 %v1891, %v1879
    %v2168 = vpack.c.b16 %v1892, %v1880
    %v2169 = vpack.c.b16 %v1893, %v1881
    %v2170 = vpack.c.b16 %v1906, %v1894
    %v2171 = vpack.c.b16 %v1907, %v1895
    %v2172 = vpack.c.b16 %v1908, %v1896
    %v2173 = vpack.c.b16 %v1909, %v1897
    %v2174 = vpack.c.b16 %v1910, %v1898
    %v2175 = vpack.c.b16 %v1911, %v1899
    %v2176 = vpack.c.b16 %v1912, %v1900
    %v2177 = vpack.c.b16 %v1913, %v1901
    %v2178 = vpack.c.b16 %v1914, %v1902
    %v2179 = vpack.c.b16 %v1915, %v1903
    %v2180 = vpack.c.b16 %v1916, %v1904
    %v2181 = vpack.c.b16 %v1917, %v1905
    %v2182 = vpack.c.b16 %v1930, %v1918
    %v2183 = vpack.c.b16 %v1931, %v1919
    %v2184 = vpack.c.b16 %v1932, %v1920
    %v2185 = vpack.c.b16 %v1933, %v1921
    %v2186 = vpack.c.b16 %v1934, %v1922
    %v2187 = vpack.c.b16 %v1935, %v1923
    %v2188 = vpack.c.b16 %v1936, %v1924
    %v2189 = vpack.c.b16 %v1937, %v1925
    %v2190 = vpack.c.b16 %v1938, %v1926
    %v2191 = vpack.c.b16 %v1939, %v1927
    %v2192 = vpack.c.b16 %v1940, %v1928
    %v2193 = vpack.c.b16 %v1941, %v1929
    %v2194 = vpack.c.b16 %v1954, %v1942
    %v2195 = vpack.c.b16 %v1955, %v1943
    %v2196 = vpack.c.b16 %v1956, %v1944
    %v2197 = vpack.c.b16 %v1957, %v1945
    %v2198 = vpack.c.b16 %v1958, %v1946
    %v2199 = vpack.c.b16 %v1959, %v1947
    %v2200 = vpack.c.b16 %v1960, %v1948
    %v2201 = vpack.c.b16 %v1961, %v1949
    %v2202 = vpack.c.b16 %v1962, %v1950
    %v2203 = vpack.c.b16 %v1963, %v1951
    %v2204 = vpack.c.b16 %v1964, %v1952
    %v2205 = vpack.c.b16 %v1965, %v1953
    %v2206 = vpack.c.b16 %v1978, %v1966
    %v2207 = vpack.c.b16 %v1979, %v1967
    %v2208 = vpack.c.b16 %v1980, %v1968
    %v2209 = vpack.c.b16 %v1981, %v1969
    %v2210 = vpack.c.b16 %v1982, %v1970
    %v2211 = vpack.c.b16 %v1983, %v1971
    %v2212 = vpack.c.b16 %v1984, %v1972
    %v2213 = vpack.c.b16 %v1985, %v1973
    %v2214 = vpack.c.b16 %v1986, %v1974
    %v2215 = vpack.c.b16 %v1987, %v1975
    %v2216 = vpack.c.b16 %v1988, %v1976
    %v2217 = vpack.c.b16 %v1989, %v1977
    %v2218 = vpack.c.b16 %v2002, %v1990
    %v2219 = vpack.c.b16 %v2003, %v1991
    %v2220 = vpack.c.b16 %v2004, %v1992
    %v2221 = vpack.c.b16 %v2005, %v1993
    %v2222 = vpack.c.b16 %v2006, %v1994
    %v2223 = vpack.c.b16 %v2007, %v1995
    %v2224 = vpack.c.b16 %v2008, %v1996
    %v2225 = vpack.c.b16 %v2009, %v1997
    %v2226 = vpack.c.b16 %v2010, %v1998
    %v2227 = vpack.c.b16 %v2011, %v1999
    %v2228 = vpack.c.b16 %v2012, %v2000
    %v2229 = vpack.c.b16 %v2013, %v2001
    %v2230 = vpack.c.b16 %v2026, %v2014
    %v2231 = vpack.c.b16 %v2027, %v2015
    %v2232 = vpack.c.b16 %v2028, %v2016
    %v2233 = vpack.c.b16 %v2029, %v2017
    %v2234 = vpack.c.b16 %v2030, %v2018
    %v2235 = vpack.c.b16 %v2031, %v2019
    %v2236 = vpack.c.b16 %v2032, %v2020
    %v2237 = vpack.c.b16 %v2033, %v2021
    %v2238 = vpack.c.b16 %v2034, %v2022
    %v2239 = vpack.c.b16 %v2035, %v2023
    %v2240 = vpack.c.b16 %v2036, %v2024
    %v2241 = vpack.c.b16 %v2037, %v2025
    %v2242 = vpack.c.b16 %v2050, %v2038
    %v2243 = vpack.c.b16 %v2051, %v2039
    %v2244 = vpack.c.b16 %v2052, %v2040
    %v2245 = vpack.c.b16 %v2053, %v2041
    %v2246 = vpack.c.b16 %v2054, %v2042
    %v2247 = vpack.c.b16 %v2055, %v2043
    %v2248 = vpack.c.b16 %v2056, %v2044
    %v2249 = vpack.c.b16 %v2057, %v2045
    %v2250 = vpack.c.b16 %v2058, %v2046
    %v2251 = vpack.c.b16 %v2059, %v2047
    %v2252 = vpack.c.b16 %v2060, %v2048
    %v2253 = vpack.c.b16 %v2061, %v2049
    %2446 = vmatprep.subr.bf16.mxu0 %v2063
    %2447 = vmatpush1.bf16.msra.mxu0 %v2062
    %2448 = vmatprep.subr.bf16.mxu0 %v2075
    %2449 = vmatpush1.bf16.msra.mxu0 %v2074
    %2450 = vmatprep.subr.bf16.mxu0 %v2087
    %2451 = vmatpush1.bf16.msra.mxu0 %v2086
    %2452 = vmatprep.subr.bf16.mxu0 %v2099
    %2453 = vmatpush1.bf16.msra.mxu0 %v2098
    %2454 = vmatprep.subr.bf16.mxu0 %v2111
    %2455 = vmatpush1.bf16.msra.mxu0 %v2110
    %2456 = vmatprep.subr.bf16.mxu0 %v2123
    %2457 = vmatpush1.bf16.msra.mxu0 %v2122
    %2458 = vmatprep.subr.bf16.mxu0 %v2135
    %2459 = vmatpush1.bf16.msra.mxu0 %v2134
    %2460 = vmatprep.subr.bf16.mxu0 %v2147
    %2461 = vmatpush1.bf16.msra.mxu0 %v2146
    %2462 = vmatprep.subr.bf16.mxu0 %v2159
    %2463 = vmatpush1.bf16.msra.mxu0 %v2158
    %2464 = vmatprep.subr.bf16.mxu0 %v2171
    %2465 = vmatpush1.bf16.msra.mxu0 %v2170
    %2466 = vmatprep.subr.bf16.mxu0 %v2183
    %2467 = vmatpush1.bf16.msra.mxu0 %v2182
    %2468 = vmatprep.subr.bf16.mxu0 %v2195
    %2469 = vmatpush1.bf16.msra.mxu0 %v2194
    %2470 = vmatprep.subr.bf16.mxu0 %v2207
    %2471 = vmatpush1.bf16.msra.mxu0 %v2206
    %2472 = vmatprep.subr.bf16.mxu0 %v2219
    %2473 = vmatpush1.bf16.msra.mxu0 %v2218
    %2474 = vmatprep.subr.bf16.mxu0 %v2231
    %2475 = vmatpush1.bf16.msra.mxu0 %v2230
    %2476 = vmatprep.subr.bf16.mxu0 %v2243
    %2477 = vmatpush1.bf16.msra.mxu0 %v2242
    %2478 = vmatprep.mubr.bf16.mxu0 %v1421
    %2479 = vmatmul.mubr.bf16.gmra.mrb[0].mxu0 %v1420
    %v2480 = vpop.f32.mrb[0].mxu0
    %v2481 = vadd.f32 %v1429, %v2480
    %v2482 = vpop.f32.mrb[0].mxu0
    %v2483 = vadd.f32 %v1433, %v2482
    %v2484 = vpop.f32.mrb[0].mxu0
    %v2485 = vpop.f32.mrb[0].mxu0
    %2486 = vdwg.mxu0
    %2487 = vmatprep.subr.bf16.mxu0 %v2065
    %2488 = vmatpush1.bf16.msra.mxu0 %v2064
    %2489 = vmatprep.subr.bf16.mxu0 %v2077
    %2490 = vmatpush1.bf16.msra.mxu0 %v2076
    %2491 = vmatprep.subr.bf16.mxu0 %v2089
    %2492 = vmatpush1.bf16.msra.mxu0 %v2088
    %2493 = vmatprep.subr.bf16.mxu0 %v2101
    %2494 = vmatpush1.bf16.msra.mxu0 %v2100
    %2495 = vmatprep.subr.bf16.mxu0 %v2113
    %2496 = vmatpush1.bf16.msra.mxu0 %v2112
    %2497 = vmatprep.subr.bf16.mxu0 %v2125
    %2498 = vmatpush1.bf16.msra.mxu0 %v2124
    %2499 = vmatprep.subr.bf16.mxu0 %v2137
    %2500 = vmatpush1.bf16.msra.mxu0 %v2136
    %2501 = vmatprep.subr.bf16.mxu0 %v2149
    %2502 = vmatpush1.bf16.msra.mxu0 %v2148
    %2503 = vmatprep.subr.bf16.mxu0 %v2161
    %2504 = vmatpush1.bf16.msra.mxu0 %v2160
    %2505 = vmatprep.subr.bf16.mxu0 %v2173
    %2506 = vmatpush1.bf16.msra.mxu0 %v2172
    %2507 = vmatprep.subr.bf16.mxu0 %v2185
    %2508 = vmatpush1.bf16.msra.mxu0 %v2184
    %2509 = vmatprep.subr.bf16.mxu0 %v2197
    %2510 = vmatpush1.bf16.msra.mxu0 %v2196
    %2511 = vmatprep.subr.bf16.mxu0 %v2209
    %2512 = vmatpush1.bf16.msra.mxu0 %v2208
    %2513 = vmatprep.subr.bf16.mxu0 %v2221
    %2514 = vmatpush1.bf16.msra.mxu0 %v2220
    %2515 = vmatprep.subr.bf16.mxu0 %v2233
    %2516 = vmatpush1.bf16.msra.mxu0 %v2232
    %2517 = vmatprep.subr.bf16.mxu0 %v2245
    %2518 = vmatpush1.bf16.msra.mxu0 %v2244
    %2519 = vmatprep.mubr.bf16.mxu0 %v1421
    %2520 = vmatmul.mubr.bf16.gmra.mrb[0].mxu0 %v1420
    %v2521 = vpop.f32.mrb[0].mxu0
    %v2522 = vadd.f32 %v1437, %v2521
    %v2523 = vpop.f32.mrb[0].mxu0
    %v2524 = vadd.f32 %v1441, %v2523
    %v2525 = vpop.f32.mrb[0].mxu0
    %v2526 = vpop.f32.mrb[0].mxu0
    %2527 = vdwg.mxu0
    %2528 = vmatprep.subr.bf16.mxu0 %v2067
    %2529 = vmatpush1.bf16.msra.mxu0 %v2066
    %2530 = vmatprep.subr.bf16.mxu0 %v2079
    %2531 = vmatpush1.bf16.msra.mxu0 %v2078
    %2532 = vmatprep.subr.bf16.mxu0 %v2091
    %2533 = vmatpush1.bf16.msra.mxu0 %v2090
    %2534 = vmatprep.subr.bf16.mxu0 %v2103
    %2535 = vmatpush1.bf16.msra.mxu0 %v2102
    %2536 = vmatprep.subr.bf16.mxu0 %v2115
    %2537 = vmatpush1.bf16.msra.mxu0 %v2114
    %2538 = vmatprep.subr.bf16.mxu0 %v2127
    %2539 = vmatpush1.bf16.msra.mxu0 %v2126
    %2540 = vmatprep.subr.bf16.mxu0 %v2139
    %2541 = vmatpush1.bf16.msra.mxu0 %v2138
    %2542 = vmatprep.subr.bf16.mxu0 %v2151
    %2543 = vmatpush1.bf16.msra.mxu0 %v2150
    %2544 = vmatprep.subr.bf16.mxu0 %v2163
    %2545 = vmatpush1.bf16.msra.mxu0 %v2162
    %2546 = vmatprep.subr.bf16.mxu0 %v2175
    %2547 = vmatpush1.bf16.msra.mxu0 %v2174
    %2548 = vmatprep.subr.bf16.mxu0 %v2187
    %2549 = vmatpush1.bf16.msra.mxu0 %v2186
    %2550 = vmatprep.subr.bf16.mxu0 %v2199
    %2551 = vmatpush1.bf16.msra.mxu0 %v2198
    %2552 = vmatprep.subr.bf16.mxu0 %v2211
    %2553 = vmatpush1.bf16.msra.mxu0 %v2210
    %2554 = vmatprep.subr.bf16.mxu0 %v2223
    %2555 = vmatpush1.bf16.msra.mxu0 %v2222
    %2556 = vmatprep.subr.bf16.mxu0 %v2235
    %2557 = vmatpush1.bf16.msra.mxu0 %v2234
    %2558 = vmatprep.subr.bf16.mxu0 %v2247
    %2559 = vmatpush1.bf16.msra.mxu0 %v2246
    %2560 = vmatprep.mubr.bf16.mxu0 %v1421
    %2561 = vmatmul.mubr.bf16.gmra.mrb[0].mxu0 %v1420
    %v2562 = vpop.f32.mrb[0].mxu0
    %v2563 = vadd.f32 %v1445, %v2562
    %v2564 = vpop.f32.mrb[0].mxu0
    %v2565 = vadd.f32 %v1449, %v2564
    %v2566 = vpop.f32.mrb[0].mxu0
    %v2567 = vpop.f32.mrb[0].mxu0
    %2568 = vdwg.mxu0
    %2569 = vmatprep.subr.bf16.mxu0 %v2069
    %2570 = vmatpush1.bf16.msra.mxu0 %v2068
    %2571 = vmatprep.subr.bf16.mxu0 %v2081
    %2572 = vmatpush1.bf16.msra.mxu0 %v2080
    %2573 = vmatprep.subr.bf16.mxu0 %v2093
    %2574 = vmatpush1.bf16.msra.mxu0 %v2092
    %2575 = vmatprep.subr.bf16.mxu0 %v2105
    %2576 = vmatpush1.bf16.msra.mxu0 %v2104
    %2577 = vmatprep.subr.bf16.mxu0 %v2117
    %2578 = vmatpush1.bf16.msra.mxu0 %v2116
    %2579 = vmatprep.subr.bf16.mxu0 %v2129
    %2580 = vmatpush1.bf16.msra.mxu0 %v2128
    %2581 = vmatprep.subr.bf16.mxu0 %v2141
    %2582 = vmatpush1.bf16.msra.mxu0 %v2140
    %2583 = vmatprep.subr.bf16.mxu0 %v2153
    %2584 = vmatpush1.bf16.msra.mxu0 %v2152
    %2585 = vmatprep.subr.bf16.mxu0 %v2165
    %2586 = vmatpush1.bf16.msra.mxu0 %v2164
    %2587 = vmatprep.subr.bf16.mxu0 %v2177
    %2588 = vmatpush1.bf16.msra.mxu0 %v2176
    %2589 = vmatprep.subr.bf16.mxu0 %v2189
    %2590 = vmatpush1.bf16.msra.mxu0 %v2188
    %2591 = vmatprep.subr.bf16.mxu0 %v2201
    %2592 = vmatpush1.bf16.msra.mxu0 %v2200
    %2593 = vmatprep.subr.bf16.mxu0 %v2213
    %2594 = vmatpush1.bf16.msra.mxu0 %v2212
    %2595 = vmatprep.subr.bf16.mxu0 %v2225
    %2596 = vmatpush1.bf16.msra.mxu0 %v2224
    %2597 = vmatprep.subr.bf16.mxu0 %v2237
    %2598 = vmatpush1.bf16.msra.mxu0 %v2236
    %2599 = vmatprep.subr.bf16.mxu0 %v2249
    %2600 = vmatpush1.bf16.msra.mxu0 %v2248
    %2601 = vmatprep.mubr.bf16.mxu0 %v1421
    %2602 = vmatmul.mubr.bf16.gmra.mrb[0].mxu0 %v1420
    %v2603 = vpop.f32.mrb[0].mxu0
    %v2604 = vadd.f32 %v1453, %v2603
    %v2605 = vpop.f32.mrb[0].mxu0
    %v2606 = vadd.f32 %v1457, %v2605
    %v2607 = vpop.f32.mrb[0].mxu0
    %v2608 = vpop.f32.mrb[0].mxu0
    %2609 = vdwg.mxu0
    %2610 = vmatprep.subr.bf16.mxu0 %v2071
    %2611 = vmatpush1.bf16.msra.mxu0 %v2070
    %2612 = vmatprep.subr.bf16.mxu0 %v2083
    %2613 = vmatpush1.bf16.msra.mxu0 %v2082
    %2614 = vmatprep.subr.bf16.mxu0 %v2095
    %2615 = vmatpush1.bf16.msra.mxu0 %v2094
    %2616 = vmatprep.subr.bf16.mxu0 %v2107
    %2617 = vmatpush1.bf16.msra.mxu0 %v2106
    %2618 = vmatprep.subr.bf16.mxu0 %v2119
    %2619 = vmatpush1.bf16.msra.mxu0 %v2118
    %2620 = vmatprep.subr.bf16.mxu0 %v2131
    %2621 = vmatpush1.bf16.msra.mxu0 %v2130
    %2622 = vmatprep.subr.bf16.mxu0 %v2143
    %2623 = vmatpush1.bf16.msra.mxu0 %v2142
    %2624 = vmatprep.subr.bf16.mxu0 %v2155
    %2625 = vmatpush1.bf16.msra.mxu0 %v2154
    %2626 = vmatprep.subr.bf16.mxu0 %v2167
    %2627 = vmatpush1.bf16.msra.mxu0 %v2166
    %2628 = vmatprep.subr.bf16.mxu0 %v2179
    %2629 = vmatpush1.bf16.msra.mxu0 %v2178
    %2630 = vmatprep.subr.bf16.mxu0 %v2191
    %2631 = vmatpush1.bf16.msra.mxu0 %v2190
    %2632 = vmatprep.subr.bf16.mxu0 %v2203
    %2633 = vmatpush1.bf16.msra.mxu0 %v2202
    %2634 = vmatprep.subr.bf16.mxu0 %v2215
    %2635 = vmatpush1.bf16.msra.mxu0 %v2214
    %2636 = vmatprep.subr.bf16.mxu0 %v2227
    %2637 = vmatpush1.bf16.msra.mxu0 %v2226
    %2638 = vmatprep.subr.bf16.mxu0 %v2239
    %2639 = vmatpush1.bf16.msra.mxu0 %v2238
    %2640 = vmatprep.subr.bf16.mxu0 %v2251
    %2641 = vmatpush1.bf16.msra.mxu0 %v2250
    %2642 = vmatprep.mubr.bf16.mxu0 %v1421
    %2643 = vmatmul.mubr.bf16.gmra.mrb[0].mxu0 %v1420
    %v2644 = vpop.f32.mrb[0].mxu0
    %v2645 = vadd.f32 %v1461, %v2644
    %v2646 = vpop.f32.mrb[0].mxu0
    %v2647 = vadd.f32 %v1465, %v2646
    %v2648 = vpop.f32.mrb[0].mxu0
    %v2649 = vpop.f32.mrb[0].mxu0
    %2650 = vdwg.mxu0
    %2651 = vmatprep.subr.bf16.mxu0 %v2073
    %2652 = vmatpush1.bf16.msra.mxu0 %v2072
    %2653 = vmatprep.subr.bf16.mxu0 %v2085
    %2654 = vmatpush1.bf16.msra.mxu0 %v2084
    %2655 = vmatprep.subr.bf16.mxu0 %v2097
    %2656 = vmatpush1.bf16.msra.mxu0 %v2096
    %2657 = vmatprep.subr.bf16.mxu0 %v2109
    %2658 = vmatpush1.bf16.msra.mxu0 %v2108
    %2659 = vmatprep.subr.bf16.mxu0 %v2121
    %2660 = vmatpush1.bf16.msra.mxu0 %v2120
    %2661 = vmatprep.subr.bf16.mxu0 %v2133
    %2662 = vmatpush1.bf16.msra.mxu0 %v2132
    %2663 = vmatprep.subr.bf16.mxu0 %v2145
    %2664 = vmatpush1.bf16.msra.mxu0 %v2144
    %2665 = vmatprep.subr.bf16.mxu0 %v2157
    %2666 = vmatpush1.bf16.msra.mxu0 %v2156
    %2667 = vmatprep.subr.bf16.mxu0 %v2169
    %2668 = vmatpush1.bf16.msra.mxu0 %v2168
    %2669 = vmatprep.subr.bf16.mxu0 %v2181
    %2670 = vmatpush1.bf16.msra.mxu0 %v2180
    %2671 = vmatprep.subr.bf16.mxu0 %v2193
    %2672 = vmatpush1.bf16.msra.mxu0 %v2192
    %2673 = vmatprep.subr.bf16.mxu0 %v2205
    %2674 = vmatpush1.bf16.msra.mxu0 %v2204
    %2675 = vmatprep.subr.bf16.mxu0 %v2217
    %2676 = vmatpush1.bf16.msra.mxu0 %v2216
    %2677 = vmatprep.subr.bf16.mxu0 %v2229
    %2678 = vmatpush1.bf16.msra.mxu0 %v2228
    %2679 = vmatprep.subr.bf16.mxu0 %v2241
    %2680 = vmatpush1.bf16.msra.mxu0 %v2240
    %2681 = vmatprep.subr.bf16.mxu0 %v2253
    %2682 = vmatpush1.bf16.msra.mxu0 %v2252
    %2683 = vmatprep.mubr.bf16.mxu0 %v1421
    %2684 = vmatmul.mubr.bf16.gmra.mrb[0].mxu0 %v1420
    %v2685 = vpop.f32.mrb[0].mxu0
    %v2686 = vadd.f32 %v1469, %v2685
    %v2687 = vpop.f32.mrb[0].mxu0
    %v2688 = vadd.f32 %v1473, %v2687
    %v2689 = vpop.f32.mrb[0].mxu0
    %v2690 = vpop.f32.mrb[0].mxu0
    %2691 = vdwg.mxu0
    %v2692 = vld [vmem:[%s0] sm:$0xff]
    %v2693 = vld [vmem:[#allocation2] sm:$0xff]
    %v2694 = vld [vmem:[#allocation2 + $0x8] sm:$0xff]
    %v2695 = vld [vmem:[#allocation2 + $0x10] sm:$0xff]
    %v2696 = vld [vmem:[#allocation2 + $0x18] sm:$0xff]
    %v2697 = vld [vmem:[#allocation2 + $0x20] sm:$0xff]
    %v2698 = vld [vmem:[#allocation2 + $0x28] sm:$0xff]
    %v2699 = vld [vmem:[#allocation2 + $0x30] sm:$0xff]
    %v2700 = vld [vmem:[#allocation2 + $0x38] sm:$0xff]
    %v2701 = vld [vmem:[#allocation2 + $0x40] sm:$0xff]
    %v2702 = vld [vmem:[#allocation2 + $0x48] sm:$0xff]
    %v2703 = vld [vmem:[#allocation2 + $0x50] sm:$0xff]
    %v2704 = vld [vmem:[#allocation2 + $0x58] sm:$0xff]
    %v2705 = vld [vmem:[#allocation2 + $0x60] sm:$0xff]
    %v2706 = vld [vmem:[#allocation2 + $0x68] sm:$0xff]
    %v2707 = vld [vmem:[#allocation2 + $0x70] sm:$0xff]
    %v2708 = vld [vmem:[#allocation2 + $0x78] sm:$0xff]
    %v2709 = vld [vmem:[#allocation2 + $0x80] sm:$0xff]
    %v2710 = vld [vmem:[#allocation2 + $0x88] sm:$0xff]
    %v2711 = vld [vmem:[#allocation2 + $0x90] sm:$0xff]
    %v2712 = vld [vmem:[#allocation2 + $0x98] sm:$0xff]
    %v2713 = vld [vmem:[#allocation2 + $0xa0] sm:$0xff]
    %v2714 = vld [vmem:[#allocation2 + $0xa8] sm:$0xff]
    %v2715 = vld [vmem:[#allocation2 + $0xb0] sm:$0xff]
    %v2716 = vld [vmem:[#allocation2 + $0xb8] sm:$0xff]
    %v2717 = vld [vmem:[#allocation2 + $0xc0] sm:$0xff]
    %v2718 = vld [vmem:[#allocation2 + $0xc8] sm:$0xff]
    %v2719 = vld [vmem:[#allocation2 + $0xd0] sm:$0xff]
    %v2720 = vld [vmem:[#allocation2 + $0xd8] sm:$0xff]
    %v2721 = vld [vmem:[#allocation2 + $0xe0] sm:$0xff]
    %v2722 = vld [vmem:[#allocation2 + $0xe8] sm:$0xff]
    %v2723 = vld [vmem:[#allocation2 + $0xf0] sm:$0xff]
    %v2724 = vld [vmem:[#allocation2 + $0xf8] sm:$0xff]
    %v2725 = vld [vmem:[#allocation2 + $0x100] sm:$0xff]
    %v2726 = vld [vmem:[#allocation2 + $0x108] sm:$0xff]
    %v2727 = vld [vmem:[#allocation2 + $0x110] sm:$0xff]
    %v2728 = vld [vmem:[#allocation2 + $0x118] sm:$0xff]
    %v2729 = vld [vmem:[#allocation2 + $0x120] sm:$0xff]
    %v2730 = vld [vmem:[#allocation2 + $0x128] sm:$0xff]
    %v2731 = vld [vmem:[#allocation2 + $0x130] sm:$0xff]
    %v2732 = vld [vmem:[#allocation2 + $0x138] sm:$0xff]
    %v2733 = vld [vmem:[#allocation2 + $0x140] sm:$0xff]
    %v2734 = vld [vmem:[#allocation2 + $0x148] sm:$0xff]
    %v2735 = vld [vmem:[#allocation2 + $0x150] sm:$0xff]
    %v2736 = vld [vmem:[#allocation2 + $0x158] sm:$0xff]
    %v2737 = vld [vmem:[#allocation2 + $0x160] sm:$0xff]
    %v2738 = vld [vmem:[#allocation2 + $0x168] sm:$0xff]
    %v2739 = vld [vmem:[#allocation2 + $0x170] sm:$0xff]
    %v2740 = vld [vmem:[#allocation2 + $0x178] sm:$0xff]
    %v2741 = vld [vmem:[#allocation2 + $0x180] sm:$0xff]
    %v2742 = vld [vmem:[#allocation2 + $0x188] sm:$0xff]
    %v2743 = vld [vmem:[#allocation2 + $0x190] sm:$0xff]
    %v2744 = vld [vmem:[#allocation2 + $0x198] sm:$0xff]
    %v2745 = vld [vmem:[#allocation2 + $0x1a0] sm:$0xff]
    %v2746 = vld [vmem:[#allocation2 + $0x1a8] sm:$0xff]
    %v2747 = vld [vmem:[#allocation2 + $0x1b0] sm:$0xff]
    %v2748 = vld [vmem:[#allocation2 + $0x1b8] sm:$0xff]
    %v2749 = vld [vmem:[#allocation2 + $0x1c0] sm:$0xff]
    %v2750 = vld [vmem:[#allocation2 + $0x1c8] sm:$0xff]
    %v2751 = vld [vmem:[#allocation2 + $0x1d0] sm:$0xff]
    %v2752 = vld [vmem:[#allocation2 + $0x1d8] sm:$0xff]
    %v2753 = vld [vmem:[#allocation2 + $0x1e0] sm:$0xff]
    %v2754 = vld [vmem:[#allocation2 + $0x1e8] sm:$0xff]
    %v2755 = vld [vmem:[#allocation2 + $0x1f0] sm:$0xff]
    %v2756 = vld [vmem:[#allocation2 + $0x1f8] sm:$0xff]
    %v2757 = vld [vmem:[#allocation2 + $0x200] sm:$0xff]
    %v2758 = vld [vmem:[#allocation2 + $0x208] sm:$0xff]
    %v2759 = vld [vmem:[#allocation2 + $0x210] sm:$0xff]
    %v2760 = vld [vmem:[#allocation2 + $0x218] sm:$0xff]
    %v2761 = vld [vmem:[#allocation2 + $0x220] sm:$0xff]
    %v2762 = vld [vmem:[#allocation2 + $0x228] sm:$0xff]
    %v2763 = vld [vmem:[#allocation2 + $0x230] sm:$0xff]
    %v2764 = vld [vmem:[#allocation2 + $0x238] sm:$0xff]
    %vm2765 = vcmask 392192
    %v2767 = vsel %vm2765, %v2692, 0
    %2769 = vmatprep.subr.mxu0 %v2694
    %2770 = vmatpush1.msra.mxu0 %v2693
    %2771 = vmatprep.subr.mxu0 %v2706
    %2772 = vmatpush1.msra.mxu0 %v2705
    %2773 = vmatprep.subr.mxu0 %v2718
    %2774 = vmatpush1.msra.mxu0 %v2717
    %2775 = vmatprep.subr.mxu0 %v2730
    %2776 = vmatpush1.msra.mxu0 %v2729
    %2777 = vmatprep.subr.mxu0 %v2742
    %2778 = vmatpush1.msra.mxu0 %v2741
    %2779 = vmatprep.subr.mxu0 %v2754
    %2780 = vmatpush1.msra.mxu0 %v2753
    %2781 = vmatprep.subr.mxu0 0.0
    %2782 = vmatpush1.msra.mxu0 0.0
    %2783 = vmatprep.subr.mxu0 0.0
    %2784 = vmatpush1.msra.mxu0 0.0
    %2785 = vmatprep.subr.mxu0 0.0
    %2786 = vmatpush1.msra.mxu0 0.0
    %2787 = vmatprep.subr.mxu0 0.0
    %2788 = vmatpush1.msra.mxu0 0.0
    %2789 = vmatprep.subr.mxu0 0.0
    %2790 = vmatpush1.msra.mxu0 0.0
    %2791 = vmatprep.subr.mxu0 0.0
    %2792 = vmatpush1.msra.mxu0 0.0
    %2793 = vmatprep.subr.mxu0 0.0
    %2794 = vmatpush1.msra.mxu0 0.0
    %2795 = vmatprep.subr.mxu0 0.0
    %2796 = vmatpush1.msra.mxu0 0.0
    %2797 = vmatprep.subr.mxu0 0.0
    %2798 = vmatpush1.msra.mxu0 0.0
    %2799 = vmatprep.subr.mxu0 0.0
    %2800 = vmatpush1.msra.mxu0 0.0
    %2801 = vmatprep.subr.mxu0 0.0
    %2802 = vmatpush1.msra.mxu0 0.0
    %2803 = vmatprep.subr.mxu0 0.0
    %2804 = vmatpush1.msra.mxu0 0.0
    %2805 = vmatprep.subr.mxu0 0.0
    %2806 = vmatpush1.msra.mxu0 0.0
    %2807 = vmatprep.subr.mxu0 0.0
    %2808 = vmatpush1.msra.mxu0 0.0
    %2809 = vmatprep.subr.mxu0 0.0
    %2810 = vmatpush1.msra.mxu0 0.0
    %2811 = vmatprep.subr.mxu0 0.0
    %2812 = vmatpush1.msra.mxu0 0.0
    %2813 = vmatprep.subr.mxu0 0.0
    %2814 = vmatpush1.msra.mxu0 0.0
    %2815 = vmatprep.subr.mxu0 0.0
    %2816 = vmatpush1.msra.mxu0 0.0
    %2817 = vmatprep.subr.mxu0 0.0
    %2818 = vmatpush1.msra.mxu0 0.0
    %2819 = vmatprep.subr.mxu0 0.0
    %2820 = vmatpush1.msra.mxu0 0.0
    %2821 = vmatprep.subr.mxu0 0.0
    %2822 = vmatpush1.msra.mxu0 0.0
    %2823 = vmatprep.subr.mxu0 0.0
    %2824 = vmatpush1.msra.mxu0 0.0
    %2825 = vmatprep.subr.mxu0 0.0
    %2826 = vmatpush1.msra.mxu0 0.0
    %2827 = vmatprep.subr.mxu0 0.0
    %2828 = vmatpush1.msra.mxu0 0.0
    %2829 = vmatprep.subr.mxu0 0.0
    %2830 = vmatpush1.msra.mxu0 0.0
    %2831 = vmatprep.subr.mxu0 0.0
    %2832 = vmatpush1.msra.mxu0 0.0
    %2833 = vmatprep.mubr.f32.mxu0 0.0
    %2834 = vmatmul.mubr.f32.gmra.mrb[0].mxu0 %v2767
    %v2835 = vpop.f32.mrb[0].mxu0
    %v2836 = vadd.f32 0.0, %v2835
    %v2837 = vpop.f32.mrb[0].mxu0
    %v2838 = vadd.f32 0.0, %v2837
    %2839 = vdwg.mxu0
    %2840 = vmatprep.subr.mxu0 %v2696
    %2841 = vmatpush1.msra.mxu0 %v2695
    %2842 = vmatprep.subr.mxu0 %v2708
    %2843 = vmatpush1.msra.mxu0 %v2707
    %2844 = vmatprep.subr.mxu0 %v2720
    %2845 = vmatpush1.msra.mxu0 %v2719
    %2846 = vmatprep.subr.mxu0 %v2732
    %2847 = vmatpush1.msra.mxu0 %v2731
    %2848 = vmatprep.subr.mxu0 %v2744
    %2849 = vmatpush1.msra.mxu0 %v2743
    %2850 = vmatprep.subr.mxu0 %v2756
    %2851 = vmatpush1.msra.mxu0 %v2755
    %2852 = vmatprep.subr.mxu0 0.0
    %2853 = vmatpush1.msra.mxu0 0.0
    %2854 = vmatprep.subr.mxu0 0.0
    %2855 = vmatpush1.msra.mxu0 0.0
    %2856 = vmatprep.subr.mxu0 0.0
    %2857 = vmatpush1.msra.mxu0 0.0
    %2858 = vmatprep.subr.mxu0 0.0
    %2859 = vmatpush1.msra.mxu0 0.0
    %2860 = vmatprep.subr.mxu0 0.0
    %2861 = vmatpush1.msra.mxu0 0.0
    %2862 = vmatprep.subr.mxu0 0.0
    %2863 = vmatpush1.msra.mxu0 0.0
    %2864 = vmatprep.subr.mxu0 0.0
    %2865 = vmatpush1.msra.mxu0 0.0
    %2866 = vmatprep.subr.mxu0 0.0
    %2867 = vmatpush1.msra.mxu0 0.0
    %2868 = vmatprep.subr.mxu0 0.0
    %2869 = vmatpush1.msra.mxu0 0.0
    %2870 = vmatprep.subr.mxu0 0.0
    %2871 = vmatpush1.msra.mxu0 0.0
    %2872 = vmatprep.subr.mxu0 0.0
    %2873 = vmatpush1.msra.mxu0 0.0
    %2874 = vmatprep.subr.mxu0 0.0
    %2875 = vmatpush1.msra.mxu0 0.0
    %2876 = vmatprep.subr.mxu0 0.0
    %2877 = vmatpush1.msra.mxu0 0.0
    %2878 = vmatprep.subr.mxu0 0.0
    %2879 = vmatpush1.msra.mxu0 0.0
    %2880 = vmatprep.subr.mxu0 0.0
    %2881 = vmatpush1.msra.mxu0 0.0
    %2882 = vmatprep.subr.mxu0 0.0
    %2883 = vmatpush1.msra.mxu0 0.0
    %2884 = vmatprep.subr.mxu0 0.0
    %2885 = vmatpush1.msra.mxu0 0.0
    %2886 = vmatprep.subr.mxu0 0.0
    %2887 = vmatpush1.msra.mxu0 0.0
    %2888 = vmatprep.subr.mxu0 0.0
    %2889 = vmatpush1.msra.mxu0 0.0
    %2890 = vmatprep.subr.mxu0 0.0
    %2891 = vmatpush1.msra.mxu0 0.0
    %2892 = vmatprep.subr.mxu0 0.0
    %2893 = vmatpush1.msra.mxu0 0.0
    %2894 = vmatprep.subr.mxu0 0.0
    %2895 = vmatpush1.msra.mxu0 0.0
    %2896 = vmatprep.subr.mxu0 0.0
    %2897 = vmatpush1.msra.mxu0 0.0
    %2898 = vmatprep.subr.mxu0 0.0
    %2899 = vmatpush1.msra.mxu0 0.0
    %2900 = vmatprep.subr.mxu0 0.0
    %2901 = vmatpush1.msra.mxu0 0.0
    %2902 = vmatprep.subr.mxu0 0.0
    %2903 = vmatpush1.msra.mxu0 0.0
    %2904 = vmatprep.mubr.f32.mxu0 0.0
    %2905 = vmatmul.mubr.f32.gmra.mrb[0].mxu0 %v2767
    %v2906 = vpop.f32.mrb[0].mxu0
    %v2907 = vadd.f32 0.0, %v2906
    %v2908 = vpop.f32.mrb[0].mxu0
    %v2909 = vadd.f32 0.0, %v2908
    %2910 = vdwg.mxu0
    %2911 = vmatprep.subr.mxu0 %v2698
    %2912 = vmatpush1.msra.mxu0 %v2697
    %2913 = vmatprep.subr.mxu0 %v2710
    %2914 = vmatpush1.msra.mxu0 %v2709
    %2915 = vmatprep.subr.mxu0 %v2722
    %2916 = vmatpush1.msra.mxu0 %v2721
    %2917 = vmatprep.subr.mxu0 %v2734
    %2918 = vmatpush1.msra.mxu0 %v2733
    %2919 = vmatprep.subr.mxu0 %v2746
    %2920 = vmatpush1.msra.mxu0 %v2745
    %2921 = vmatprep.subr.mxu0 %v2758
    %2922 = vmatpush1.msra.mxu0 %v2757
    %2923 = vmatprep.subr.mxu0 0.0
    %2924 = vmatpush1.msra.mxu0 0.0
    %2925 = vmatprep.subr.mxu0 0.0
    %2926 = vmatpush1.msra.mxu0 0.0
    %2927 = vmatprep.subr.mxu0 0.0
    %2928 = vmatpush1.msra.mxu0 0.0
    %2929 = vmatprep.subr.mxu0 0.0
    %2930 = vmatpush1.msra.mxu0 0.0
    %2931 = vmatprep.subr.mxu0 0.0
    %2932 = vmatpush1.msra.mxu0 0.0
    %2933 = vmatprep.subr.mxu0 0.0
    %2934 = vmatpush1.msra.mxu0 0.0
    %2935 = vmatprep.subr.mxu0 0.0
    %2936 = vmatpush1.msra.mxu0 0.0
    %2937 = vmatprep.subr.mxu0 0.0
    %2938 = vmatpush1.msra.mxu0 0.0
    %2939 = vmatprep.subr.mxu0 0.0
    %2940 = vmatpush1.msra.mxu0 0.0
    %2941 = vmatprep.subr.mxu0 0.0
    %2942 = vmatpush1.msra.mxu0 0.0
    %2943 = vmatprep.subr.mxu0 0.0
    %2944 = vmatpush1.msra.mxu0 0.0
    %2945 = vmatprep.subr.mxu0 0.0
    %2946 = vmatpush1.msra.mxu0 0.0
    %2947 = vmatprep.subr.mxu0 0.0
    %2948 = vmatpush1.msra.mxu0 0.0
    %2949 = vmatprep.subr.mxu0 0.0
    %2950 = vmatpush1.msra.mxu0 0.0
    %2951 = vmatprep.subr.mxu0 0.0
    %2952 = vmatpush1.msra.mxu0 0.0
    %2953 = vmatprep.subr.mxu0 0.0
    %2954 = vmatpush1.msra.mxu0 0.0
    %2955 = vmatprep.subr.mxu0 0.0
    %2956 = vmatpush1.msra.mxu0 0.0
    %2957 = vmatprep.subr.mxu0 0.0
    %2958 = vmatpush1.msra.mxu0 0.0
    %2959 = vmatprep.subr.mxu0 0.0
    %2960 = vmatpush1.msra.mxu0 0.0
    %2961 = vmatprep.subr.mxu0 0.0
    %2962 = vmatpush1.msra.mxu0 0.0
    %2963 = vmatprep.subr.mxu0 0.0
    %2964 = vmatpush1.msra.mxu0 0.0
    %2965 = vmatprep.subr.mxu0 0.0
    %2966 = vmatpush1.msra.mxu0 0.0
    %2967 = vmatprep.subr.mxu0 0.0
    %2968 = vmatpush1.msra.mxu0 0.0
    %2969 = vmatprep.subr.mxu0 0.0
    %2970 = vmatpush1.msra.mxu0 0.0
    %2971 = vmatprep.subr.mxu0 0.0
    %2972 = vmatpush1.msra.mxu0 0.0
    %2973 = vmatprep.subr.mxu0 0.0
    %2974 = vmatpush1.msra.mxu0 0.0
    %2975 = vmatprep.mubr.f32.mxu0 0.0
    %2976 = vmatmul.mubr.f32.gmra.mrb[0].mxu0 %v2767
    %v2977 = vpop.f32.mrb[0].mxu0
    %v2978 = vadd.f32 0.0, %v2977
    %v2979 = vpop.f32.mrb[0].mxu0
    %v2980 = vadd.f32 0.0, %v2979
    %2981 = vdwg.mxu0
    %2982 = vmatprep.subr.mxu0 %v2700
    %2983 = vmatpush1.msra.mxu0 %v2699
    %2984 = vmatprep.subr.mxu0 %v2712
    %2985 = vmatpush1.msra.mxu0 %v2711
    %2986 = vmatprep.subr.mxu0 %v2724
    %2987 = vmatpush1.msra.mxu0 %v2723
    %2988 = vmatprep.subr.mxu0 %v2736
    %2989 = vmatpush1.msra.mxu0 %v2735
    %2990 = vmatprep.subr.mxu0 %v2748
    %2991 = vmatpush1.msra.mxu0 %v2747
    %2992 = vmatprep.subr.mxu0 %v2760
    %2993 = vmatpush1.msra.mxu0 %v2759
    %2994 = vmatprep.subr.mxu0 0.0
    %2995 = vmatpush1.msra.mxu0 0.0
    %2996 = vmatprep.subr.mxu0 0.0
    %2997 = vmatpush1.msra.mxu0 0.0
    %2998 = vmatprep.subr.mxu0 0.0
    %2999 = vmatpush1.msra.mxu0 0.0
    %3000 = vmatprep.subr.mxu0 0.0
    %3001 = vmatpush1.msra.mxu0 0.0
    %3002 = vmatprep.subr.mxu0 0.0
    %3003 = vmatpush1.msra.mxu0 0.0
    %3004 = vmatprep.subr.mxu0 0.0
    %3005 = vmatpush1.msra.mxu0 0.0
    %3006 = vmatprep.subr.mxu0 0.0
    %3007 = vmatpush1.msra.mxu0 0.0
    %3008 = vmatprep.subr.mxu0 0.0
    %3009 = vmatpush1.msra.mxu0 0.0
    %3010 = vmatprep.subr.mxu0 0.0
    %3011 = vmatpush1.msra.mxu0 0.0
    %3012 = vmatprep.subr.mxu0 0.0
    %3013 = vmatpush1.msra.mxu0 0.0
    %3014 = vmatprep.subr.mxu0 0.0
    %3015 = vmatpush1.msra.mxu0 0.0
    %3016 = vmatprep.subr.mxu0 0.0
    %3017 = vmatpush1.msra.mxu0 0.0
    %3018 = vmatprep.subr.mxu0 0.0
    %3019 = vmatpush1.msra.mxu0 0.0
    %3020 = vmatprep.subr.mxu0 0.0
    %3021 = vmatpush1.msra.mxu0 0.0
    %3022 = vmatprep.subr.mxu0 0.0
    %3023 = vmatpush1.msra.mxu0 0.0
    %3024 = vmatprep.subr.mxu0 0.0
    %3025 = vmatpush1.msra.mxu0 0.0
    %3026 = vmatprep.subr.mxu0 0.0
    %3027 = vmatpush1.msra.mxu0 0.0
    %3028 = vmatprep.subr.mxu0 0.0
    %3029 = vmatpush1.msra.mxu0 0.0
    %3030 = vmatprep.subr.mxu0 0.0
    %3031 = vmatpush1.msra.mxu0 0.0
    %3032 = vmatprep.subr.mxu0 0.0
    %3033 = vmatpush1.msra.mxu0 0.0
    %3034 = vmatprep.subr.mxu0 0.0
    %3035 = vmatpush1.msra.mxu0 0.0
    %3036 = vmatprep.subr.mxu0 0.0
    %3037 = vmatpush1.msra.mxu0 0.0
    %3038 = vmatprep.subr.mxu0 0.0
    %3039 = vmatpush1.msra.mxu0 0.0
    %3040 = vmatprep.subr.mxu0 0.0
    %3041 = vmatpush1.msra.mxu0 0.0
    %3042 = vmatprep.subr.mxu0 0.0
    %3043 = vmatpush1.msra.mxu0 0.0
    %3044 = vmatprep.subr.mxu0 0.0
    %3045 = vmatpush1.msra.mxu0 0.0
    %3046 = vmatprep.mubr.f32.mxu0 0.0
    %3047 = vmatmul.mubr.f32.gmra.mrb[0].mxu0 %v2767
    %v3048 = vpop.f32.mrb[0].mxu0
    %v3049 = vadd.f32 0.0, %v3048
    %v3050 = vpop.f32.mrb[0].mxu0
    %v3051 = vadd.f32 0.0, %v3050
    %3052 = vdwg.mxu0
    %3053 = vmatprep.subr.mxu0 %v2702
    %3054 = vmatpush1.msra.mxu0 %v2701
    %3055 = vmatprep.subr.mxu0 %v2714
    %3056 = vmatpush1.msra.mxu0 %v2713
    %3057 = vmatprep.subr.mxu0 %v2726
    %3058 = vmatpush1.msra.mxu0 %v2725
    %3059 = vmatprep.subr.mxu0 %v2738
    %3060 = vmatpush1.msra.mxu0 %v2737
    %3061 = vmatprep.subr.mxu0 %v2750
    %3062 = vmatpush1.msra.mxu0 %v2749
    %3063 = vmatprep.subr.mxu0 %v2762
    %3064 = vmatpush1.msra.mxu0 %v2761
    %3065 = vmatprep.subr.mxu0 0.0
    %3066 = vmatpush1.msra.mxu0 0.0
    %3067 = vmatprep.subr.mxu0 0.0
    %3068 = vmatpush1.msra.mxu0 0.0
    %3069 = vmatprep.subr.mxu0 0.0
    %3070 = vmatpush1.msra.mxu0 0.0
    %3071 = vmatprep.subr.mxu0 0.0
    %3072 = vmatpush1.msra.mxu0 0.0
    %3073 = vmatprep.subr.mxu0 0.0
    %3074 = vmatpush1.msra.mxu0 0.0
    %3075 = vmatprep.subr.mxu0 0.0
    %3076 = vmatpush1.msra.mxu0 0.0
    %3077 = vmatprep.subr.mxu0 0.0
    %3078 = vmatpush1.msra.mxu0 0.0
    %3079 = vmatprep.subr.mxu0 0.0
    %3080 = vmatpush1.msra.mxu0 0.0
    %3081 = vmatprep.subr.mxu0 0.0
    %3082 = vmatpush1.msra.mxu0 0.0
    %3083 = vmatprep.subr.mxu0 0.0
    %3084 = vmatpush1.msra.mxu0 0.0
    %3085 = vmatprep.subr.mxu0 0.0
    %3086 = vmatpush1.msra.mxu0 0.0
    %3087 = vmatprep.subr.mxu0 0.0
    %3088 = vmatpush1.msra.mxu0 0.0
    %3089 = vmatprep.subr.mxu0 0.0
    %3090 = vmatpush1.msra.mxu0 0.0
    %3091 = vmatprep.subr.mxu0 0.0
    %3092 = vmatpush1.msra.mxu0 0.0
    %3093 = vmatprep.subr.mxu0 0.0
    %3094 = vmatpush1.msra.mxu0 0.0
    %3095 = vmatprep.subr.mxu0 0.0
    %3096 = vmatpush1.msra.mxu0 0.0
    %3097 = vmatprep.subr.mxu0 0.0
    %3098 = vmatpush1.msra.mxu0 0.0
    %3099 = vmatprep.subr.mxu0 0.0
    %3100 = vmatpush1.msra.mxu0 0.0
    %3101 = vmatprep.subr.mxu0 0.0
    %3102 = vmatpush1.msra.mxu0 0.0
    %3103 = vmatprep.subr.mxu0 0.0
    %3104 = vmatpush1.msra.mxu0 0.0
    %3105 = vmatprep.subr.mxu0 0.0
    %3106 = vmatpush1.msra.mxu0 0.0
    %3107 = vmatprep.subr.mxu0 0.0
    %3108 = vmatpush1.msra.mxu0 0.0
    %3109 = vmatprep.subr.mxu0 0.0
    %3110 = vmatpush1.msra.mxu0 0.0
    %3111 = vmatprep.subr.mxu0 0.0
    %3112 = vmatpush1.msra.mxu0 0.0
    %3113 = vmatprep.subr.mxu0 0.0
    %3114 = vmatpush1.msra.mxu0 0.0
    %3115 = vmatprep.subr.mxu0 0.0
    %3116 = vmatpush1.msra.mxu0 0.0
    %3117 = vmatprep.mubr.f32.mxu0 0.0
    %3118 = vmatmul.mubr.f32.gmra.mrb[0].mxu0 %v2767
    %v3119 = vpop.f32.mrb[0].mxu0
    %v3120 = vadd.f32 0.0, %v3119
    %v3121 = vpop.f32.mrb[0].mxu0
    %v3122 = vadd.f32 0.0, %v3121
    %3123 = vdwg.mxu0
    %3124 = vmatprep.subr.mxu0 %v2704
    %3125 = vmatpush1.msra.mxu0 %v2703
    %3126 = vmatprep.subr.mxu0 %v2716
    %3127 = vmatpush1.msra.mxu0 %v2715
    %3128 = vmatprep.subr.mxu0 %v2728
    %3129 = vmatpush1.msra.mxu0 %v2727
    %3130 = vmatprep.subr.mxu0 %v2740
    %3131 = vmatpush1.msra.mxu0 %v2739
    %3132 = vmatprep.subr.mxu0 %v2752
    %3133 = vmatpush1.msra.mxu0 %v2751
    %3134 = vmatprep.subr.mxu0 %v2764
    %3135 = vmatpush1.msra.mxu0 %v2763
    %3136 = vmatprep.subr.mxu0 0.0
    %3137 = vmatpush1.msra.mxu0 0.0
    %3138 = vmatprep.subr.mxu0 0.0
    %3139 = vmatpush1.msra.mxu0 0.0
    %3140 = vmatprep.subr.mxu0 0.0
    %3141 = vmatpush1.msra.mxu0 0.0
    %3142 = vmatprep.subr.mxu0 0.0
    %3143 = vmatpush1.msra.mxu0 0.0
    %3144 = vmatprep.subr.mxu0 0.0
    %3145 = vmatpush1.msra.mxu0 0.0
    %3146 = vmatprep.subr.mxu0 0.0
    %3147 = vmatpush1.msra.mxu0 0.0
    %3148 = vmatprep.subr.mxu0 0.0
    %3149 = vmatpush1.msra.mxu0 0.0
    %3150 = vmatprep.subr.mxu0 0.0
    %3151 = vmatpush1.msra.mxu0 0.0
    %3152 = vmatprep.subr.mxu0 0.0
    %3153 = vmatpush1.msra.mxu0 0.0
    %3154 = vmatprep.subr.mxu0 0.0
    %3155 = vmatpush1.msra.mxu0 0.0
    %3156 = vmatprep.subr.mxu0 0.0
    %3157 = vmatpush1.msra.mxu0 0.0
    %3158 = vmatprep.subr.mxu0 0.0
    %3159 = vmatpush1.msra.mxu0 0.0
    %3160 = vmatprep.subr.mxu0 0.0
    %3161 = vmatpush1.msra.mxu0 0.0
    %3162 = vmatprep.subr.mxu0 0.0
    %3163 = vmatpush1.msra.mxu0 0.0
    %3164 = vmatprep.subr.mxu0 0.0
    %3165 = vmatpush1.msra.mxu0 0.0
    %3166 = vmatprep.subr.mxu0 0.0
    %3167 = vmatpush1.msra.mxu0 0.0
    %3168 = vmatprep.subr.mxu0 0.0
    %3169 = vmatpush1.msra.mxu0 0.0
    %3170 = vmatprep.subr.mxu0 0.0
    %3171 = vmatpush1.msra.mxu0 0.0
    %3172 = vmatprep.subr.mxu0 0.0
    %3173 = vmatpush1.msra.mxu0 0.0
    %3174 = vmatprep.subr.mxu0 0.0
    %3175 = vmatpush1.msra.mxu0 0.0
    %3176 = vmatprep.subr.mxu0 0.0
    %3177 = vmatpush1.msra.mxu0 0.0
    %3178 = vmatprep.subr.mxu0 0.0
    %3179 = vmatpush1.msra.mxu0 0.0
    %3180 = vmatprep.subr.mxu0 0.0
    %3181 = vmatpush1.msra.mxu0 0.0
    %3182 = vmatprep.subr.mxu0 0.0
    %3183 = vmatpush1.msra.mxu0 0.0
    %3184 = vmatprep.subr.mxu0 0.0
    %3185 = vmatpush1.msra.mxu0 0.0
    %3186 = vmatprep.subr.mxu0 0.0
    %3187 = vmatpush1.msra.mxu0 0.0
    %3188 = vmatprep.mubr.f32.mxu0 0.0
    %3189 = vmatmul.mubr.f32.gmra.mrb[0].mxu0 %v2767
    %v3190 = vpop.f32.mrb[0].mxu0
    %v3191 = vadd.f32 0.0, %v3190
    %v3192 = vpop.f32.mrb[0].mxu0
    %v3193 = vadd.f32 0.0, %v3192
    %3194 = vdwg.mxu0
    %v3195 = vmul.f32 %v2836, %v2481
    %v3196 = vmul.f32 %v2838, %v2483
    %v3197 = vmul.f32 %v2907, %v2522
    %v3198 = vmul.f32 %v2909, %v2524
    %v3199 = vmul.f32 %v2978, %v2563
    %v3200 = vmul.f32 %v2980, %v2565
    %v3201 = vmul.f32 %v3049, %v2604
    %v3202 = vmul.f32 %v3051, %v2606
    %v3203 = vmul.f32 %v3120, %v2645
    %v3204 = vmul.f32 %v3122, %v2647
    %v3205 = vmul.f32 %v3191, %v2686
    %v3206 = vmul.f32 %v3193, %v2688
    %v3207 = vld [vmem:[#allocation5] sm:$0xff]
    %v3208 = vld [vmem:[#allocation5 + $0x8] sm:$0xff]
    %v3209 = vld [vmem:[#allocation5 + $0x10] sm:$0xff]
    %v3210 = vld [vmem:[#allocation5 + $0x18] sm:$0xff]
    %v3211 = vld [vmem:[#allocation5 + $0x20] sm:$0xff]
    %v3212 = vld [vmem:[#allocation5 + $0x28] sm:$0xff]
    %v3213 = vld [vmem:[#allocation5 + $0x30] sm:$0xff]
    %v3214 = vld [vmem:[#allocation5 + $0x38] sm:$0xff]
    %v3215 = vld [vmem:[#allocation5 + $0x40] sm:$0xff]
    %v3216 = vld [vmem:[#allocation5 + $0x48] sm:$0xff]
    %v3217 = vld [vmem:[#allocation5 + $0x50] sm:$0xff]
    %v3218 = vld [vmem:[#allocation5 + $0x58] sm:$0xff]
    %v3219 = vld [vmem:[#allocation5 + $0x60] sm:$0xff]
    %v3220 = vld [vmem:[#allocation5 + $0x68] sm:$0xff]
    %v3221 = vld [vmem:[#allocation5 + $0x70] sm:$0xff]
    %v3222 = vld [vmem:[#allocation5 + $0x78] sm:$0xff]
    %v3223 = vld [vmem:[#allocation5 + $0x80] sm:$0xff]
    %v3224 = vld [vmem:[#allocation5 + $0x88] sm:$0xff]
    %v3225 = vld [vmem:[#allocation5 + $0x90] sm:$0xff]
    %v3226 = vld [vmem:[#allocation5 + $0x98] sm:$0xff]
    %v3227 = vld [vmem:[#allocation5 + $0xa0] sm:$0xff]
    %v3228 = vld [vmem:[#allocation5 + $0xa8] sm:$0xff]
    %v3229 = vld [vmem:[#allocation5 + $0xb0] sm:$0xff]
    %v3230 = vld [vmem:[#allocation5 + $0xb8] sm:$0xff]
    %v3231 = vld [vmem:[#allocation5 + $0xc0] sm:$0xff]
    %v3232 = vld [vmem:[#allocation5 + $0xc8] sm:$0xff]
    %v3233 = vld [vmem:[#allocation5 + $0xd0] sm:$0xff]
    %v3234 = vld [vmem:[#allocation5 + $0xd8] sm:$0xff]
    %v3235 = vld [vmem:[#allocation5 + $0xe0] sm:$0xff]
    %v3236 = vld [vmem:[#allocation5 + $0xe8] sm:$0xff]
    %v3237 = vld [vmem:[#allocation5 + $0xf0] sm:$0xff]
    %v3238 = vld [vmem:[#allocation5 + $0xf8] sm:$0xff]
    %v3239 = vld [vmem:[#allocation5 + $0x100] sm:$0xff]
    %v3240 = vld [vmem:[#allocation5 + $0x108] sm:$0xff]
    %v3241 = vld [vmem:[#allocation5 + $0x110] sm:$0xff]
    %v3242 = vld [vmem:[#allocation5 + $0x118] sm:$0xff]
    %v3243 = vld [vmem:[#allocation5 + $0x120] sm:$0xff]
    %v3244 = vld [vmem:[#allocation5 + $0x128] sm:$0xff]
    %v3245 = vld [vmem:[#allocation5 + $0x130] sm:$0xff]
    %v3246 = vld [vmem:[#allocation5 + $0x138] sm:$0xff]
    %v3247 = vld [vmem:[#allocation5 + $0x140] sm:$0xff]
    %v3248 = vld [vmem:[#allocation5 + $0x148] sm:$0xff]
    %v3249 = vld [vmem:[#allocation5 + $0x150] sm:$0xff]
    %v3250 = vld [vmem:[#allocation5 + $0x158] sm:$0xff]
    %v3251 = vld [vmem:[#allocation5 + $0x160] sm:$0xff]
    %v3252 = vld [vmem:[#allocation5 + $0x168] sm:$0xff]
    %v3253 = vld [vmem:[#allocation5 + $0x170] sm:$0xff]
    %v3254 = vld [vmem:[#allocation5 + $0x178] sm:$0xff]
    %v3255 = vld [vmem:[#allocation5 + $0x180] sm:$0xff]
    %v3256 = vld [vmem:[#allocation5 + $0x188] sm:$0xff]
    %v3257 = vld [vmem:[#allocation5 + $0x190] sm:$0xff]
    %v3258 = vld [vmem:[#allocation5 + $0x198] sm:$0xff]
    %v3259 = vld [vmem:[#allocation5 + $0x1a0] sm:$0xff]
    %v3260 = vld [vmem:[#allocation5 + $0x1a8] sm:$0xff]
    %v3261 = vld [vmem:[#allocation5 + $0x1b0] sm:$0xff]
    %v3262 = vld [vmem:[#allocation5 + $0x1b8] sm:$0xff]
    %v3263 = vld [vmem:[#allocation5 + $0x1c0] sm:$0xff]
    %v3264 = vld [vmem:[#allocation5 + $0x1c8] sm:$0xff]
    %v3265 = vld [vmem:[#allocation5 + $0x1d0] sm:$0xff]
    %v3266 = vld [vmem:[#allocation5 + $0x1d8] sm:$0xff]
    %v3267 = vld [vmem:[#allocation5 + $0x1e0] sm:$0xff]
    %v3268 = vld [vmem:[#allocation5 + $0x1e8] sm:$0xff]
    %v3269 = vld [vmem:[#allocation5 + $0x1f0] sm:$0xff]
    %v3270 = vld [vmem:[#allocation5 + $0x1f8] sm:$0xff]
    %v3271 = vld [vmem:[#allocation5 + $0x200] sm:$0xff]
    %v3272 = vld [vmem:[#allocation5 + $0x208] sm:$0xff]
    %v3273 = vld [vmem:[#allocation5 + $0x210] sm:$0xff]
    %v3274 = vld [vmem:[#allocation5 + $0x218] sm:$0xff]
    %v3275 = vld [vmem:[#allocation5 + $0x220] sm:$0xff]
    %v3276 = vld [vmem:[#allocation5 + $0x228] sm:$0xff]
    %v3277 = vld [vmem:[#allocation5 + $0x230] sm:$0xff]
    %v3278 = vld [vmem:[#allocation5 + $0x238] sm:$0xff]
    %v3279 = vld [vmem:[#allocation5 + $0x240] sm:$0xff]
    %v3280 = vld [vmem:[#allocation5 + $0x248] sm:$0xff]
    %v3281 = vld [vmem:[#allocation5 + $0x250] sm:$0xff]
    %v3282 = vld [vmem:[#allocation5 + $0x258] sm:$0xff]
    %v3283 = vld [vmem:[#allocation5 + $0x260] sm:$0xff]
    %v3284 = vld [vmem:[#allocation5 + $0x268] sm:$0xff]
    %v3285 = vld [vmem:[#allocation5 + $0x270] sm:$0xff]
    %v3286 = vld [vmem:[#allocation5 + $0x278] sm:$0xff]
    %v3287 = vld [vmem:[#allocation5 + $0x280] sm:$0xff]
    %v3288 = vld [vmem:[#allocation5 + $0x288] sm:$0xff]
    %v3289 = vld [vmem:[#allocation5 + $0x290] sm:$0xff]
    %v3290 = vld [vmem:[#allocation5 + $0x298] sm:$0xff]
    %v3291 = vld [vmem:[#allocation5 + $0x2a0] sm:$0xff]
    %v3292 = vld [vmem:[#allocation5 + $0x2a8] sm:$0xff]
    %v3293 = vld [vmem:[#allocation5 + $0x2b0] sm:$0xff]
    %v3294 = vld [vmem:[#allocation5 + $0x2b8] sm:$0xff]
    %v3295 = vld [vmem:[#allocation5 + $0x2c0] sm:$0xff]
    %v3296 = vld [vmem:[#allocation5 + $0x2c8] sm:$0xff]
    %v3297 = vld [vmem:[#allocation5 + $0x2d0] sm:$0xff]
    %v3298 = vld [vmem:[#allocation5 + $0x2d8] sm:$0xff]
    %v3299 = vld [vmem:[#allocation5 + $0x2e0] sm:$0xff]
    %v3300 = vld [vmem:[#allocation5 + $0x2e8] sm:$0xff]
    %v3301 = vld [vmem:[#allocation5 + $0x2f0] sm:$0xff]
    %v3302 = vld [vmem:[#allocation5 + $0x2f8] sm:$0xff]
    %v3303 = vld [vmem:[#allocation5 + $0x300] sm:$0xff]
    %v3304 = vld [vmem:[#allocation5 + $0x308] sm:$0xff]
    %v3305 = vld [vmem:[#allocation5 + $0x310] sm:$0xff]
    %v3306 = vld [vmem:[#allocation5 + $0x318] sm:$0xff]
    %v3307 = vld [vmem:[#allocation5 + $0x320] sm:$0xff]
    %v3308 = vld [vmem:[#allocation5 + $0x328] sm:$0xff]
    %v3309 = vld [vmem:[#allocation5 + $0x330] sm:$0xff]
    %v3310 = vld [vmem:[#allocation5 + $0x338] sm:$0xff]
    %v3311 = vld [vmem:[#allocation5 + $0x340] sm:$0xff]
    %v3312 = vld [vmem:[#allocation5 + $0x348] sm:$0xff]
    %v3313 = vld [vmem:[#allocation5 + $0x350] sm:$0xff]
    %v3314 = vld [vmem:[#allocation5 + $0x358] sm:$0xff]
    %v3315 = vld [vmem:[#allocation5 + $0x360] sm:$0xff]
    %v3316 = vld [vmem:[#allocation5 + $0x368] sm:$0xff]
    %v3317 = vld [vmem:[#allocation5 + $0x370] sm:$0xff]
    %v3318 = vld [vmem:[#allocation5 + $0x378] sm:$0xff]
    %v3319 = vld [vmem:[#allocation5 + $0x380] sm:$0xff]
    %v3320 = vld [vmem:[#allocation5 + $0x388] sm:$0xff]
    %v3321 = vld [vmem:[#allocation5 + $0x390] sm:$0xff]
    %v3322 = vld [vmem:[#allocation5 + $0x398] sm:$0xff]
    %v3323 = vld [vmem:[#allocation5 + $0x3a0] sm:$0xff]
    %v3324 = vld [vmem:[#allocation5 + $0x3a8] sm:$0xff]
    %v3325 = vld [vmem:[#allocation5 + $0x3b0] sm:$0xff]
    %v3326 = vld [vmem:[#allocation5 + $0x3b8] sm:$0xff]
    %v3327 = vld [vmem:[#allocation5 + $0x3c0] sm:$0xff]
    %v3328 = vld [vmem:[#allocation5 + $0x3c8] sm:$0xff]
    %v3329 = vld [vmem:[#allocation5 + $0x3d0] sm:$0xff]
    %v3330 = vld [vmem:[#allocation5 + $0x3d8] sm:$0xff]
    %v3331 = vld [vmem:[#allocation5 + $0x3e0] sm:$0xff]
    %v3332 = vld [vmem:[#allocation5 + $0x3e8] sm:$0xff]
    %v3333 = vld [vmem:[#allocation5 + $0x3f0] sm:$0xff]
    %v3334 = vld [vmem:[#allocation5 + $0x3f8] sm:$0xff]
    %v3335 = vld [vmem:[#allocation5 + $0x400] sm:$0xff]
    %v3336 = vld [vmem:[#allocation5 + $0x408] sm:$0xff]
    %v3337 = vld [vmem:[#allocation5 + $0x410] sm:$0xff]
    %v3338 = vld [vmem:[#allocation5 + $0x418] sm:$0xff]
    %v3339 = vld [vmem:[#allocation5 + $0x420] sm:$0xff]
    %v3340 = vld [vmem:[#allocation5 + $0x428] sm:$0xff]
    %v3341 = vld [vmem:[#allocation5 + $0x430] sm:$0xff]
    %v3342 = vld [vmem:[#allocation5 + $0x438] sm:$0xff]
    %v3343 = vld [vmem:[#allocation5 + $0x440] sm:$0xff]
    %v3344 = vld [vmem:[#allocation5 + $0x448] sm:$0xff]
    %v3345 = vld [vmem:[#allocation5 + $0x450] sm:$0xff]
    %v3346 = vld [vmem:[#allocation5 + $0x458] sm:$0xff]
    %v3347 = vld [vmem:[#allocation5 + $0x460] sm:$0xff]
    %v3348 = vld [vmem:[#allocation5 + $0x468] sm:$0xff]
    %v3349 = vld [vmem:[#allocation5 + $0x470] sm:$0xff]
    %v3350 = vld [vmem:[#allocation5 + $0x478] sm:$0xff]
    %v3351 = vld [vmem:[#allocation5 + $0x480] sm:$0xff]
    %v3352 = vld [vmem:[#allocation5 + $0x488] sm:$0xff]
    %v3353 = vld [vmem:[#allocation5 + $0x490] sm:$0xff]
    %v3354 = vld [vmem:[#allocation5 + $0x498] sm:$0xff]
    %v3355 = vld [vmem:[#allocation5 + $0x4a0] sm:$0xff]
    %v3356 = vld [vmem:[#allocation5 + $0x4a8] sm:$0xff]
    %v3357 = vld [vmem:[#allocation5 + $0x4b0] sm:$0xff]
    %v3358 = vld [vmem:[#allocation5 + $0x4b8] sm:$0xff]
    %v3359 = vld [vmem:[#allocation5 + $0x4c0] sm:$0xff]
    %v3360 = vld [vmem:[#allocation5 + $0x4c8] sm:$0xff]
    %v3361 = vld [vmem:[#allocation5 + $0x4d0] sm:$0xff]
    %v3362 = vld [vmem:[#allocation5 + $0x4d8] sm:$0xff]
    %v3363 = vld [vmem:[#allocation5 + $0x4e0] sm:$0xff]
    %v3364 = vld [vmem:[#allocation5 + $0x4e8] sm:$0xff]
    %v3365 = vld [vmem:[#allocation5 + $0x4f0] sm:$0xff]
    %v3366 = vld [vmem:[#allocation5 + $0x4f8] sm:$0xff]
    %v3367 = vld [vmem:[#allocation5 + $0x500] sm:$0xff]
    %v3368 = vld [vmem:[#allocation5 + $0x508] sm:$0xff]
    %v3369 = vld [vmem:[#allocation5 + $0x510] sm:$0xff]
    %v3370 = vld [vmem:[#allocation5 + $0x518] sm:$0xff]
    %v3371 = vld [vmem:[#allocation5 + $0x520] sm:$0xff]
    %v3372 = vld [vmem:[#allocation5 + $0x528] sm:$0xff]
    %v3373 = vld [vmem:[#allocation5 + $0x530] sm:$0xff]
    %v3374 = vld [vmem:[#allocation5 + $0x538] sm:$0xff]
    %v3375 = vld [vmem:[#allocation5 + $0x540] sm:$0xff]
    %v3376 = vld [vmem:[#allocation5 + $0x548] sm:$0xff]
    %v3377 = vld [vmem:[#allocation5 + $0x550] sm:$0xff]
    %v3378 = vld [vmem:[#allocation5 + $0x558] sm:$0xff]
    %v3379 = vld [vmem:[#allocation5 + $0x560] sm:$0xff]
    %v3380 = vld [vmem:[#allocation5 + $0x568] sm:$0xff]
    %v3381 = vld [vmem:[#allocation5 + $0x570] sm:$0xff]
    %v3382 = vld [vmem:[#allocation5 + $0x578] sm:$0xff]
    %v3383 = vld [vmem:[#allocation5 + $0x580] sm:$0xff]
    %v3384 = vld [vmem:[#allocation5 + $0x588] sm:$0xff]
    %v3385 = vld [vmem:[#allocation5 + $0x590] sm:$0xff]
    %v3386 = vld [vmem:[#allocation5 + $0x598] sm:$0xff]
    %v3387 = vld [vmem:[#allocation5 + $0x5a0] sm:$0xff]
    %v3388 = vld [vmem:[#allocation5 + $0x5a8] sm:$0xff]
    %v3389 = vld [vmem:[#allocation5 + $0x5b0] sm:$0xff]
    %v3390 = vld [vmem:[#allocation5 + $0x5b8] sm:$0xff]
    %v3391 = vld [vmem:[#allocation5 + $0x5c0] sm:$0xff]
    %v3392 = vld [vmem:[#allocation5 + $0x5c8] sm:$0xff]
    %v3393 = vld [vmem:[#allocation5 + $0x5d0] sm:$0xff]
    %v3394 = vld [vmem:[#allocation5 + $0x5d8] sm:$0xff]
    %v3395 = vld [vmem:[#allocation5 + $0x5e0] sm:$0xff]
    %v3396 = vld [vmem:[#allocation5 + $0x5e8] sm:$0xff]
    %v3397 = vld [vmem:[#allocation5 + $0x5f0] sm:$0xff]
    %v3398 = vld [vmem:[#allocation5 + $0x5f8] sm:$0xff]
    %3399 = vmatprep.subr.mxu0 0.0
    %3400 = vmatpush1.msra.mxu0 %v3207
    %3401 = vmatprep.subr.mxu0 0.0
    %3402 = vmatpush1.msra.mxu0 %v3208
    %3403 = vmatprep.subr.mxu0 0.0
    %3404 = vmatpush1.msra.mxu0 %v3209
    %3405 = vmatprep.subr.mxu0 0.0
    %3406 = vmatpush1.msra.mxu0 %v3210
    %3407 = vmatprep.subr.mxu0 0.0
    %3408 = vmatpush1.msra.mxu0 %v3211
    %3409 = vmatprep.subr.mxu0 0.0
    %3410 = vmatpush1.msra.mxu0 %v3212
    %3411 = vmatprep.subr.mxu0 0.0
    %3412 = vmatpush1.msra.mxu0 %v3213
    %3413 = vmatprep.subr.mxu0 0.0
    %3414 = vmatpush1.msra.mxu0 %v3214
    %3415 = vmatprep.subr.mxu0 0.0
    %3416 = vmatpush1.msra.mxu0 %v3215
    %3417 = vmatprep.subr.mxu0 0.0
    %3418 = vmatpush1.msra.mxu0 %v3216
    %3419 = vmatprep.subr.mxu0 0.0
    %3420 = vmatpush1.msra.mxu0 %v3217
    %3421 = vmatprep.subr.mxu0 0.0
    %3422 = vmatpush1.msra.mxu0 %v3218
    %3423 = vmatprep.subr.mxu0 0.0
    %3424 = vmatpush1.msra.mxu0 %v3219
    %3425 = vmatprep.subr.mxu0 0.0
    %3426 = vmatpush1.msra.mxu0 %v3220
    %3427 = vmatprep.subr.mxu0 0.0
    %3428 = vmatpush1.msra.mxu0 %v3221
    %3429 = vmatprep.subr.mxu0 0.0
    %3430 = vmatpush1.msra.mxu0 %v3222
    %3431 = vmatprep.subr.mxu0 0.0
    %3432 = vmatpush1.msra.mxu0 %v3223
    %3433 = vmatprep.subr.mxu0 0.0
    %3434 = vmatpush1.msra.mxu0 %v3224
    %3435 = vmatprep.subr.mxu0 0.0
    %3436 = vmatpush1.msra.mxu0 %v3225
    %3437 = vmatprep.subr.mxu0 0.0
    %3438 = vmatpush1.msra.mxu0 %v3226
    %3439 = vmatprep.subr.mxu0 0.0
    %3440 = vmatpush1.msra.mxu0 %v3227
    %3441 = vmatprep.subr.mxu0 0.0
    %3442 = vmatpush1.msra.mxu0 %v3228
    %3443 = vmatprep.subr.mxu0 0.0
    %3444 = vmatpush1.msra.mxu0 %v3229
    %3445 = vmatprep.subr.mxu0 0.0
    %3446 = vmatpush1.msra.mxu0 %v3230
    %3447 = vmatprep.subr.mxu0 0.0
    %3448 = vmatpush1.msra.mxu0 %v3231
    %3449 = vmatprep.subr.mxu0 0.0
    %3450 = vmatpush1.msra.mxu0 %v3232
    %3451 = vmatprep.subr.mxu0 0.0
    %3452 = vmatpush1.msra.mxu0 %v3233
    %3453 = vmatprep.subr.mxu0 0.0
    %3454 = vmatpush1.msra.mxu0 %v3234
    %3455 = vmatprep.subr.mxu0 0.0
    %3456 = vmatpush1.msra.mxu0 %v3235
    %3457 = vmatprep.subr.mxu0 0.0
    %3458 = vmatpush1.msra.mxu0 %v3236
    %3459 = vmatprep.subr.mxu0 0.0
    %3460 = vmatpush1.msra.mxu0 %v3237
    %3461 = vmatprep.subr.mxu0 0.0
    %3462 = vmatpush1.msra.mxu0 %v3238
    %3463 = vmatprep.mubr.f32.mxu0 %v3196
    %3464 = vmatmul.mubr.f32.gmra.mrb[0].mxu0 %v3195
    %v3465 = vpop.f32.mrb[0].mxu0
    %v3466 = vadd.f32 0.0, %v3465
    %v3467 = vpop.f32.mrb[0].mxu0
    %3468 = vdwg.mxu0
    %3469 = vmatprep.subr.mxu0 0.0
    %3470 = vmatpush1.msra.mxu0 %v3239
    %3471 = vmatprep.subr.mxu0 0.0
    %3472 = vmatpush1.msra.mxu0 %v3240
    %3473 = vmatprep.subr.mxu0 0.0
    %3474 = vmatpush1.msra.mxu0 %v3241
    %3475 = vmatprep.subr.mxu0 0.0
    %3476 = vmatpush1.msra.mxu0 %v3242
    %3477 = vmatprep.subr.mxu0 0.0
    %3478 = vmatpush1.msra.mxu0 %v3243
    %3479 = vmatprep.subr.mxu0 0.0
    %3480 = vmatpush1.msra.mxu0 %v3244
    %3481 = vmatprep.subr.mxu0 0.0
    %3482 = vmatpush1.msra.mxu0 %v3245
    %3483 = vmatprep.subr.mxu0 0.0
    %3484 = vmatpush1.msra.mxu0 %v3246
    %3485 = vmatprep.subr.mxu0 0.0
    %3486 = vmatpush1.msra.mxu0 %v3247
    %3487 = vmatprep.subr.mxu0 0.0
    %3488 = vmatpush1.msra.mxu0 %v3248
    %3489 = vmatprep.subr.mxu0 0.0
    %3490 = vmatpush1.msra.mxu0 %v3249
    %3491 = vmatprep.subr.mxu0 0.0
    %3492 = vmatpush1.msra.mxu0 %v3250
    %3493 = vmatprep.subr.mxu0 0.0
    %3494 = vmatpush1.msra.mxu0 %v3251
    %3495 = vmatprep.subr.mxu0 0.0
    %3496 = vmatpush1.msra.mxu0 %v3252
    %3497 = vmatprep.subr.mxu0 0.0
    %3498 = vmatpush1.msra.mxu0 %v3253
    %3499 = vmatprep.subr.mxu0 0.0
    %3500 = vmatpush1.msra.mxu0 %v3254
    %3501 = vmatprep.subr.mxu0 0.0
    %3502 = vmatpush1.msra.mxu0 %v3255
    %3503 = vmatprep.subr.mxu0 0.0
    %3504 = vmatpush1.msra.mxu0 %v3256
    %3505 = vmatprep.subr.mxu0 0.0
    %3506 = vmatpush1.msra.mxu0 %v3257
    %3507 = vmatprep.subr.mxu0 0.0
    %3508 = vmatpush1.msra.mxu0 %v3258
    %3509 = vmatprep.subr.mxu0 0.0
    %3510 = vmatpush1.msra.mxu0 %v3259
    %3511 = vmatprep.subr.mxu0 0.0
    %3512 = vmatpush1.msra.mxu0 %v3260
    %3513 = vmatprep.subr.mxu0 0.0
    %3514 = vmatpush1.msra.mxu0 %v3261
    %3515 = vmatprep.subr.mxu0 0.0
    %3516 = vmatpush1.msra.mxu0 %v3262
    %3517 = vmatprep.subr.mxu0 0.0
    %3518 = vmatpush1.msra.mxu0 %v3263
    %3519 = vmatprep.subr.mxu0 0.0
    %3520 = vmatpush1.msra.mxu0 %v3264
    %3521 = vmatprep.subr.mxu0 0.0
    %3522 = vmatpush1.msra.mxu0 %v3265
    %3523 = vmatprep.subr.mxu0 0.0
    %3524 = vmatpush1.msra.mxu0 %v3266
    %3525 = vmatprep.subr.mxu0 0.0
    %3526 = vmatpush1.msra.mxu0 %v3267
    %3527 = vmatprep.subr.mxu0 0.0
    %3528 = vmatpush1.msra.mxu0 %v3268
    %3529 = vmatprep.subr.mxu0 0.0
    %3530 = vmatpush1.msra.mxu0 %v3269
    %3531 = vmatprep.subr.mxu0 0.0
    %3532 = vmatpush1.msra.mxu0 %v3270
    %3533 = vmatprep.mubr.f32.mxu0 %v3198
    %3534 = vmatmul.mubr.f32.gmra.mrb[0].mxu0 %v3197
    %v3535 = vpop.f32.mrb[0].mxu0
    %v3536 = vadd.f32 %v3466, %v3535
    %v3537 = vpop.f32.mrb[0].mxu0
    %3538 = vdwg.mxu0
    %3539 = vmatprep.subr.mxu0 0.0
    %3540 = vmatpush1.msra.mxu0 %v3271
    %3541 = vmatprep.subr.mxu0 0.0
    %3542 = vmatpush1.msra.mxu0 %v3272
    %3543 = vmatprep.subr.mxu0 0.0
    %3544 = vmatpush1.msra.mxu0 %v3273
    %3545 = vmatprep.subr.mxu0 0.0
    %3546 = vmatpush1.msra.mxu0 %v3274
    %3547 = vmatprep.subr.mxu0 0.0
    %3548 = vmatpush1.msra.mxu0 %v3275
    %3549 = vmatprep.subr.mxu0 0.0
    %3550 = vmatpush1.msra.mxu0 %v3276
    %3551 = vmatprep.subr.mxu0 0.0
    %3552 = vmatpush1.msra.mxu0 %v3277
    %3553 = vmatprep.subr.mxu0 0.0
    %3554 = vmatpush1.msra.mxu0 %v3278
    %3555 = vmatprep.subr.mxu0 0.0
    %3556 = vmatpush1.msra.mxu0 %v3279
    %3557 = vmatprep.subr.mxu0 0.0
    %3558 = vmatpush1.msra.mxu0 %v3280
    %3559 = vmatprep.subr.mxu0 0.0
    %3560 = vmatpush1.msra.mxu0 %v3281
    %3561 = vmatprep.subr.mxu0 0.0
    %3562 = vmatpush1.msra.mxu0 %v3282
    %3563 = vmatprep.subr.mxu0 0.0
    %3564 = vmatpush1.msra.mxu0 %v3283
    %3565 = vmatprep.subr.mxu0 0.0
    %3566 = vmatpush1.msra.mxu0 %v3284
    %3567 = vmatprep.subr.mxu0 0.0
    %3568 = vmatpush1.msra.mxu0 %v3285
    %3569 = vmatprep.subr.mxu0 0.0
    %3570 = vmatpush1.msra.mxu0 %v3286
    %3571 = vmatprep.subr.mxu0 0.0
    %3572 = vmatpush1.msra.mxu0 %v3287
    %3573 = vmatprep.subr.mxu0 0.0
    %3574 = vmatpush1.msra.mxu0 %v3288
    %3575 = vmatprep.subr.mxu0 0.0
    %3576 = vmatpush1.msra.mxu0 %v3289
    %3577 = vmatprep.subr.mxu0 0.0
    %3578 = vmatpush1.msra.mxu0 %v3290
    %3579 = vmatprep.subr.mxu0 0.0
    %3580 = vmatpush1.msra.mxu0 %v3291
    %3581 = vmatprep.subr.mxu0 0.0
    %3582 = vmatpush1.msra.mxu0 %v3292
    %3583 = vmatprep.subr.mxu0 0.0
    %3584 = vmatpush1.msra.mxu0 %v3293
    %3585 = vmatprep.subr.mxu0 0.0
    %3586 = vmatpush1.msra.mxu0 %v3294
    %3587 = vmatprep.subr.mxu0 0.0
    %3588 = vmatpush1.msra.mxu0 %v3295
    %3589 = vmatprep.subr.mxu0 0.0
    %3590 = vmatpush1.msra.mxu0 %v3296
    %3591 = vmatprep.subr.mxu0 0.0
    %3592 = vmatpush1.msra.mxu0 %v3297
    %3593 = vmatprep.subr.mxu0 0.0
    %3594 = vmatpush1.msra.mxu0 %v3298
    %3595 = vmatprep.subr.mxu0 0.0
    %3596 = vmatpush1.msra.mxu0 %v3299
    %3597 = vmatprep.subr.mxu0 0.0
    %3598 = vmatpush1.msra.mxu0 %v3300
    %3599 = vmatprep.subr.mxu0 0.0
    %3600 = vmatpush1.msra.mxu0 %v3301
    %3601 = vmatprep.subr.mxu0 0.0
    %3602 = vmatpush1.msra.mxu0 %v3302
    %3603 = vmatprep.mubr.f32.mxu0 %v3200
    %3604 = vmatmul.mubr.f32.gmra.mrb[0].mxu0 %v3199
    %v3605 = vpop.f32.mrb[0].mxu0
    %v3606 = vadd.f32 %v3536, %v3605
    %v3607 = vpop.f32.mrb[0].mxu0
    %3608 = vdwg.mxu0
    %3609 = vmatprep.subr.mxu0 0.0
    %3610 = vmatpush1.msra.mxu0 %v3303
    %3611 = vmatprep.subr.mxu0 0.0
    %3612 = vmatpush1.msra.mxu0 %v3304
    %3613 = vmatprep.subr.mxu0 0.0
    %3614 = vmatpush1.msra.mxu0 %v3305
    %3615 = vmatprep.subr.mxu0 0.0
    %3616 = vmatpush1.msra.mxu0 %v3306
    %3617 = vmatprep.subr.mxu0 0.0
    %3618 = vmatpush1.msra.mxu0 %v3307
    %3619 = vmatprep.subr.mxu0 0.0
    %3620 = vmatpush1.msra.mxu0 %v3308
    %3621 = vmatprep.subr.mxu0 0.0
    %3622 = vmatpush1.msra.mxu0 %v3309
    %3623 = vmatprep.subr.mxu0 0.0
    %3624 = vmatpush1.msra.mxu0 %v3310
    %3625 = vmatprep.subr.mxu0 0.0
    %3626 = vmatpush1.msra.mxu0 %v3311
    %3627 = vmatprep.subr.mxu0 0.0
    %3628 = vmatpush1.msra.mxu0 %v3312
    %3629 = vmatprep.subr.mxu0 0.0
    %3630 = vmatpush1.msra.mxu0 %v3313
    %3631 = vmatprep.subr.mxu0 0.0
    %3632 = vmatpush1.msra.mxu0 %v3314
    %3633 = vmatprep.subr.mxu0 0.0
    %3634 = vmatpush1.msra.mxu0 %v3315
    %3635 = vmatprep.subr.mxu0 0.0
    %3636 = vmatpush1.msra.mxu0 %v3316
    %3637 = vmatprep.subr.mxu0 0.0
    %3638 = vmatpush1.msra.mxu0 %v3317
    %3639 = vmatprep.subr.mxu0 0.0
    %3640 = vmatpush1.msra.mxu0 %v3318
    %3641 = vmatprep.subr.mxu0 0.0
    %3642 = vmatpush1.msra.mxu0 %v3319
    %3643 = vmatprep.subr.mxu0 0.0
    %3644 = vmatpush1.msra.mxu0 %v3320
    %3645 = vmatprep.subr.mxu0 0.0
    %3646 = vmatpush1.msra.mxu0 %v3321
    %3647 = vmatprep.subr.mxu0 0.0
    %3648 = vmatpush1.msra.mxu0 %v3322
    %3649 = vmatprep.subr.mxu0 0.0
    %3650 = vmatpush1.msra.mxu0 %v3323
    %3651 = vmatprep.subr.mxu0 0.0
    %3652 = vmatpush1.msra.mxu0 %v3324
    %3653 = vmatprep.subr.mxu0 0.0
    %3654 = vmatpush1.msra.mxu0 %v3325
    %3655 = vmatprep.subr.mxu0 0.0
    %3656 = vmatpush1.msra.mxu0 %v3326
    %3657 = vmatprep.subr.mxu0 0.0
    %3658 = vmatpush1.msra.mxu0 %v3327
    %3659 = vmatprep.subr.mxu0 0.0
    %3660 = vmatpush1.msra.mxu0 %v3328
    %3661 = vmatprep.subr.mxu0 0.0
    %3662 = vmatpush1.msra.mxu0 %v3329
    %3663 = vmatprep.subr.mxu0 0.0
    %3664 = vmatpush1.msra.mxu0 %v3330
    %3665 = vmatprep.subr.mxu0 0.0
    %3666 = vmatpush1.msra.mxu0 %v3331
    %3667 = vmatprep.subr.mxu0 0.0
    %3668 = vmatpush1.msra.mxu0 %v3332
    %3669 = vmatprep.subr.mxu0 0.0
    %3670 = vmatpush1.msra.mxu0 %v3333
    %3671 = vmatprep.subr.mxu0 0.0
    %3672 = vmatpush1.msra.mxu0 %v3334
    %3673 = vmatprep.mubr.f32.mxu0 %v3202
    %3674 = vmatmul.mubr.f32.gmra.mrb[0].mxu0 %v3201
    %v3675 = vpop.f32.mrb[0].mxu0
    %v3676 = vadd.f32 %v3606, %v3675
    %v3677 = vpop.f32.mrb[0].mxu0
    %3678 = vdwg.mxu0
    %3679 = vmatprep.subr.mxu0 0.0
    %3680 = vmatpush1.msra.mxu0 %v3335
    %3681 = vmatprep.subr.mxu0 0.0
    %3682 = vmatpush1.msra.mxu0 %v3336
    %3683 = vmatprep.subr.mxu0 0.0
    %3684 = vmatpush1.msra.mxu0 %v3337
    %3685 = vmatprep.subr.mxu0 0.0
    %3686 = vmatpush1.msra.mxu0 %v3338
    %3687 = vmatprep.subr.mxu0 0.0
    %3688 = vmatpush1.msra.mxu0 %v3339
    %3689 = vmatprep.subr.mxu0 0.0
    %3690 = vmatpush1.msra.mxu0 %v3340
    %3691 = vmatprep.subr.mxu0 0.0
    %3692 = vmatpush1.msra.mxu0 %v3341
    %3693 = vmatprep.subr.mxu0 0.0
    %3694 = vmatpush1.msra.mxu0 %v3342
    %3695 = vmatprep.subr.mxu0 0.0
    %3696 = vmatpush1.msra.mxu0 %v3343
    %3697 = vmatprep.subr.mxu0 0.0
    %3698 = vmatpush1.msra.mxu0 %v3344
    %3699 = vmatprep.subr.mxu0 0.0
    %3700 = vmatpush1.msra.mxu0 %v3345
    %3701 = vmatprep.subr.mxu0 0.0
    %3702 = vmatpush1.msra.mxu0 %v3346
    %3703 = vmatprep.subr.mxu0 0.0
    %3704 = vmatpush1.msra.mxu0 %v3347
    %3705 = vmatprep.subr.mxu0 0.0
    %3706 = vmatpush1.msra.mxu0 %v3348
    %3707 = vmatprep.subr.mxu0 0.0
    %3708 = vmatpush1.msra.mxu0 %v3349
    %3709 = vmatprep.subr.mxu0 0.0
    %3710 = vmatpush1.msra.mxu0 %v3350
    %3711 = vmatprep.subr.mxu0 0.0
    %3712 = vmatpush1.msra.mxu0 %v3351
    %3713 = vmatprep.subr.mxu0 0.0
    %3714 = vmatpush1.msra.mxu0 %v3352
    %3715 = vmatprep.subr.mxu0 0.0
    %3716 = vmatpush1.msra.mxu0 %v3353
    %3717 = vmatprep.subr.mxu0 0.0
    %3718 = vmatpush1.msra.mxu0 %v3354
    %3719 = vmatprep.subr.mxu0 0.0
    %3720 = vmatpush1.msra.mxu0 %v3355
    %3721 = vmatprep.subr.mxu0 0.0
    %3722 = vmatpush1.msra.mxu0 %v3356
    %3723 = vmatprep.subr.mxu0 0.0
    %3724 = vmatpush1.msra.mxu0 %v3357
    %3725 = vmatprep.subr.mxu0 0.0
    %3726 = vmatpush1.msra.mxu0 %v3358
    %3727 = vmatprep.subr.mxu0 0.0
    %3728 = vmatpush1.msra.mxu0 %v3359
    %3729 = vmatprep.subr.mxu0 0.0
    %3730 = vmatpush1.msra.mxu0 %v3360
    %3731 = vmatprep.subr.mxu0 0.0
    %3732 = vmatpush1.msra.mxu0 %v3361
    %3733 = vmatprep.subr.mxu0 0.0
    %3734 = vmatpush1.msra.mxu0 %v3362
    %3735 = vmatprep.subr.mxu0 0.0
    %3736 = vmatpush1.msra.mxu0 %v3363
    %3737 = vmatprep.subr.mxu0 0.0
    %3738 = vmatpush1.msra.mxu0 %v3364
    %3739 = vmatprep.subr.mxu0 0.0
    %3740 = vmatpush1.msra.mxu0 %v3365
    %3741 = vmatprep.subr.mxu0 0.0
    %3742 = vmatpush1.msra.mxu0 %v3366
    %3743 = vmatprep.mubr.f32.mxu0 %v3204
    %3744 = vmatmul.mubr.f32.gmra.mrb[0].mxu0 %v3203
    %v3745 = vpop.f32.mrb[0].mxu0
    %v3746 = vadd.f32 %v3676, %v3745
    %v3747 = vpop.f32.mrb[0].mxu0
    %3748 = vdwg.mxu0
    %3749 = vmatprep.subr.mxu0 0.0
    %3750 = vmatpush1.msra.mxu0 %v3367
    %3751 = vmatprep.subr.mxu0 0.0
    %3752 = vmatpush1.msra.mxu0 %v3368
    %3753 = vmatprep.subr.mxu0 0.0
    %3754 = vmatpush1.msra.mxu0 %v3369
    %3755 = vmatprep.subr.mxu0 0.0
    %3756 = vmatpush1.msra.mxu0 %v3370
    %3757 = vmatprep.subr.mxu0 0.0
    %3758 = vmatpush1.msra.mxu0 %v3371
    %3759 = vmatprep.subr.mxu0 0.0
    %3760 = vmatpush1.msra.mxu0 %v3372
    %3761 = vmatprep.subr.mxu0 0.0
    %3762 = vmatpush1.msra.mxu0 %v3373
    %3763 = vmatprep.subr.mxu0 0.0
    %3764 = vmatpush1.msra.mxu0 %v3374
    %3765 = vmatprep.subr.mxu0 0.0
    %3766 = vmatpush1.msra.mxu0 %v3375
    %3767 = vmatprep.subr.mxu0 0.0
    %3768 = vmatpush1.msra.mxu0 %v3376
    %3769 = vmatprep.subr.mxu0 0.0
    %3770 = vmatpush1.msra.mxu0 %v3377
    %3771 = vmatprep.subr.mxu0 0.0
    %3772 = vmatpush1.msra.mxu0 %v3378
    %3773 = vmatprep.subr.mxu0 0.0
    %3774 = vmatpush1.msra.mxu0 %v3379
    %3775 = vmatprep.subr.mxu0 0.0
    %3776 = vmatpush1.msra.mxu0 %v3380
    %3777 = vmatprep.subr.mxu0 0.0
    %3778 = vmatpush1.msra.mxu0 %v3381
    %3779 = vmatprep.subr.mxu0 0.0
    %3780 = vmatpush1.msra.mxu0 %v3382
    %3781 = vmatprep.subr.mxu0 0.0
    %3782 = vmatpush1.msra.mxu0 %v3383
    %3783 = vmatprep.subr.mxu0 0.0
    %3784 = vmatpush1.msra.mxu0 %v3384
    %3785 = vmatprep.subr.mxu0 0.0
    %3786 = vmatpush1.msra.mxu0 %v3385
    %3787 = vmatprep.subr.mxu0 0.0
    %3788 = vmatpush1.msra.mxu0 %v3386
    %3789 = vmatprep.subr.mxu0 0.0
    %3790 = vmatpush1.msra.mxu0 %v3387
    %3791 = vmatprep.subr.mxu0 0.0
    %3792 = vmatpush1.msra.mxu0 %v3388
    %3793 = vmatprep.subr.mxu0 0.0
    %3794 = vmatpush1.msra.mxu0 %v3389
    %3795 = vmatprep.subr.mxu0 0.0
    %3796 = vmatpush1.msra.mxu0 %v3390
    %3797 = vmatprep.subr.mxu0 0.0
    %3798 = vmatpush1.msra.mxu0 %v3391
    %3799 = vmatprep.subr.mxu0 0.0
    %3800 = vmatpush1.msra.mxu0 %v3392
    %3801 = vmatprep.subr.mxu0 0.0
    %3802 = vmatpush1.msra.mxu0 %v3393
    %3803 = vmatprep.subr.mxu0 0.0
    %3804 = vmatpush1.msra.mxu0 %v3394
    %3805 = vmatprep.subr.mxu0 0.0
    %3806 = vmatpush1.msra.mxu0 %v3395
    %3807 = vmatprep.subr.mxu0 0.0
    %3808 = vmatpush1.msra.mxu0 %v3396
    %3809 = vmatprep.subr.mxu0 0.0
    %3810 = vmatpush1.msra.mxu0 %v3397
    %3811 = vmatprep.subr.mxu0 0.0
    %3812 = vmatpush1.msra.mxu0 %v3398
    %3813 = vmatprep.mubr.f32.mxu0 %v3206
    %3814 = vmatmul.mubr.f32.gmra.mrb[0].mxu0 %v3205
    %v3815 = vpop.f32.mrb[0].mxu0
    %v3816 = vadd.f32 %v3746, %v3815
    %v3817 = vpop.f32.mrb[0].mxu0
    %3818 = vdwg.mxu0
    %3819 = vst [vmem:[#allocation14] sm:$0xff] %v3816
    // Predicated region
    $region94: #{tpu_custom_call.1} parent=1 // pred_check
      _
    $region95: #{tpu_custom_call.1} parent=1 // pred_check_branch
      %3821 = sbr.rel (0) target = $region97
    $region96: #{tpu_custom_call.1} parent=1 // pred_region
      %s3823 = ssub.s32 128, 128
      %3824 = vsyncadd [#allocation4], %s3823
      %s3826 = sshll.u32 [#allocation14], 4
      %s3827 = int_to_ptr.vmem [resolvable:$true] %s3826
      %3829 = dma.vmem_to_hbm [thread:$0]  %s3827, 128, %s16, [#allocation4]
    $region97: #{tpu_custom_call.1} parent=1 // pred_fallthru
      _
    // Predicated region
    $region98: #{tpu_custom_call.1} parent=1 // pred_check
      _
    $region99: #{tpu_custom_call.1} parent=1 // pred_check_branch
      %3831 = sbr.rel (0) target = $region101
    $region100: #{tpu_custom_call.1} parent=1 // pred_region
      %3832 = dma.done [#allocation4], 128
    $region101: #{tpu_custom_call.1} parent=1 // pred_fallthru
      _
    %3833 = vsyncpa [#allocation3], 1
    %3834 = vsyncpa [#allocation6], 1
    %3835 = vsyncpa [#allocation9], 1
    %3836 = vsyncpa [#allocation12], 1
    %3837 = vsyncpa [#allocation4], 1

</llo_original>
